<compile_context>
chip_gen: v7x
topology: tpu7x:2x2x1
jax: 0.10.0
libtpu: 0.0.40
codegen_flags: <defaults>
</compile_context>

<pallas_src>
import functools

import jax
import jax.numpy as jnp
from jax.experimental import pallas as pl
from jax.experimental.pallas import tpu as pltpu


def _round_up(x, m):
    return (x + m - 1) // m * m


_VMEM_LIMIT = 64 * 1024 * 1024


def _pick_tile_n(n_padded, budget, tm):
    cap = max(128, budget // tm)
    for tn in (512, 384, 256, 128):
        if tn <= cap and n_padded % tn == 0:
            return tn
    return 128


# --------------------------------------------------------------------------
# Pallas matmul with fused bias/activation epilogue (1x1 convs, projections)
# --------------------------------------------------------------------------
def _mm_kernel(x_ref, w_ref, b_ref, o_ref, *, act):
    a = x_ref[...].astype(jnp.bfloat16)           # bf16 MXU inputs
    acc = jnp.dot(a, w_ref[...], preferred_element_type=jnp.float32)
    acc = acc + b_ref[...]
    if act == "relu":
        acc = jnp.maximum(acc, 0.0)
    o_ref[...] = acc


def matmul_bias_act(x, w, bias=None, act=None):
    # x: (M, K) f32, w: (K, N) f32 -> (M, N) f32.  Weights stored bf16.
    M, K = x.shape
    N = w.shape[1]
    Np = _round_up(N, 128)
    tm = min(256, _round_up(M, 8))
    Mp = _round_up(M, tm)
    tn = _pick_tile_n(Np, 65536, tm)

    xp = jnp.pad(x.astype(jnp.float32), ((0, Mp - M), (0, 0)))
    wp = jnp.pad(w.astype(jnp.float32), ((0, 0), (0, Np - N))).astype(jnp.bfloat16)
    if bias is None:
        bp = jnp.zeros((1, Np), jnp.float32)
    else:
        bp = jnp.pad(bias.astype(jnp.float32), (0, Np - N)).reshape(1, Np)

    out = pl.pallas_call(
        functools.partial(_mm_kernel, act=act),
        out_shape=jax.ShapeDtypeStruct((Mp, Np), jnp.float32),
        grid=(Mp // tm, Np // tn),
        in_specs=[pl.BlockSpec((tm, K), lambda i, j: (i, 0)),
                  pl.BlockSpec((K, tn), lambda i, j: (0, j)),
                  pl.BlockSpec((1, tn), lambda i, j: (0, j))],
        out_specs=pl.BlockSpec((tm, tn), lambda i, j: (i, j)),
        compiler_params=pltpu.CompilerParams(
            dimension_semantics=("parallel", "parallel"),
            vmem_limit_bytes=_VMEM_LIMIT),
    )(xp, wp, bp)
    return out[:M, :N]


def conv1x1(x, w, bias=None, act=None):
    B, H, W, Cin = x.shape
    Cout = w.shape[0]
    wm = w.reshape(Cout, Cin).T
    out = matmul_bias_act(x.reshape(B * H * W, Cin), wm, bias, act)
    return out.reshape(B, H, W, Cout)


# --------------------------------------------------------------------------
# Pallas 3x3 conv: 9-tap K-reduction inside the kernel (no HBM im2col)
# --------------------------------------------------------------------------
def _conv3x3_kernel(x_ref, w_ref, b_ref, o_ref, *, tm, offs, act):
    base = pl.program_id(0) * tm
    acc = jnp.zeros(o_ref.shape, jnp.float32)
    for t in range(9):
        xs = x_ref[pl.ds(base + offs[t], tm), :].astype(jnp.bfloat16)
        acc = acc + jnp.dot(xs, w_ref[t], preferred_element_type=jnp.float32)
    acc = acc + b_ref[...]
    if act == "relu":
        acc = jnp.maximum(acc, 0.0)
    o_ref[...] = acc


def conv3x3(x, w, bias=None, act=None):
    # x: (B, H, W, Cin) f32, w: torch layout (Cout, Cin, 3, 3), padding=1.
    # The padded image is flattened to (pixels, Cin); output pixel p uses rows
    # p + kh*(W+2) + kw, so the 9 taps become shifted row-slices in VMEM.
    B, H, W, Cin = x.shape
    Cout = w.shape[0]
    Cin_p = _round_up(Cin, 8)
    Np = _round_up(Cout, 128)
    Wp2 = W + 2
    P = B * (H + 2) * Wp2
    tm = min(256, _round_up(P, 8))
    Pm = _round_up(P, tm)
    tn = _pick_tile_n(Np, 32768, tm)
    offs = tuple(kh * Wp2 + kw for kh in range(3) for kw in range(3))
    Mx = _round_up(Pm + offs[-1] + 1, 8)

    xpad = jnp.pad(x.astype(jnp.float32),
                   ((0, 0), (1, 1), (1, 1), (0, Cin_p - Cin)))
    xflat = jnp.pad(xpad.reshape(P, Cin_p), ((0, Mx - P), (0, 0)))
    wt = jnp.transpose(w, (2, 3, 1, 0)).reshape(9, Cin, Cout)
    wt = jnp.pad(wt, ((0, 0), (0, Cin_p - Cin), (0, Np - Cout))).astype(jnp.bfloat16)
    if bias is None:
        bp = jnp.zeros((1, Np), jnp.float32)
    else:
        bp = jnp.pad(bias.astype(jnp.float32), (0, Np - Cout)).reshape(1, Np)

    out = pl.pallas_call(
        functools.partial(_conv3x3_kernel, tm=tm, offs=offs, act=act),
        out_shape=jax.ShapeDtypeStruct((Pm, Np), jnp.float32),
        grid=(Pm // tm, Np // tn),
        in_specs=[pl.BlockSpec((Mx, Cin_p), lambda i, j: (0, 0)),
                  pl.BlockSpec((9, Cin_p, tn), lambda i, j: (0, 0, j)),
                  pl.BlockSpec((1, tn), lambda i, j: (0, j))],
        out_specs=pl.BlockSpec((tm, tn), lambda i, j: (i, j)),
        compiler_params=pltpu.CompilerParams(
            dimension_semantics=("parallel", "parallel"),
            vmem_limit_bytes=_VMEM_LIMIT),
    )(xflat, wt, bp)

    out = out[:P, :Cout].reshape(B, H + 2, Wp2, Cout)[:, :H, :W, :]
    return out


# --------------------------------------------------------------------------
# Pallas LayerNorm (WithBias, over channel per pixel), tiled over rows
# --------------------------------------------------------------------------
def _layernorm_kernel(x_ref, w_ref, b_ref, o_ref):
    x = x_ref[...]
    mu = jnp.mean(x, axis=-1, keepdims=True)
    var = jnp.mean((x - mu) ** 2, axis=-1, keepdims=True)
    o_ref[...] = (x - mu) * jax.lax.rsqrt(var + 1e-5) * w_ref[...] + b_ref[...]


def layernorm_nhwc(x, w, b):
    B, H, W, C = x.shape
    M = B * H * W
    tm = min(256, _round_up(M, 8))
    Mp = _round_up(M, tm)
    xf = jnp.pad(x.reshape(M, C), ((0, Mp - M), (0, 0)))
    out = pl.pallas_call(
        _layernorm_kernel,
        out_shape=jax.ShapeDtypeStruct((Mp, C), jnp.float32),
        grid=(Mp // tm,),
        in_specs=[pl.BlockSpec((tm, C), lambda i: (i, 0)),
                  pl.BlockSpec((1, C), lambda i: (0, 0)),
                  pl.BlockSpec((1, C), lambda i: (0, 0))],
        out_specs=pl.BlockSpec((tm, C), lambda i: (i, 0)),
        compiler_params=pltpu.CompilerParams(
            dimension_semantics=("parallel",),
            vmem_limit_bytes=_VMEM_LIMIT),
    )(xf, w.reshape(1, C), b.reshape(1, C))
    return out[:M].reshape(B, H, W, C)


# --------------------------------------------------------------------------
# Pallas depthwise 3x3 conv (groups == channels, padding=1)
# --------------------------------------------------------------------------
def _dwconv_kernel(x_ref, w_ref, o_ref, *, H, W):
    C = o_ref.shape[-1]
    acc = jnp.zeros(o_ref.shape, jnp.float32)
    for kh in range(3):
        for kw in range(3):
            k = kh * 3 + kw
            wk = w_ref[k:k + 1, :].reshape(1, 1, 1, C)
            acc = acc + x_ref[:, kh:kh + H, kw:kw + W, :] * wk
    o_ref[...] = acc


def dwconv3x3(x, w):
    # w: torch layout (C, 1, 3, 3)
    # TODO(synk): for large resolutions, tile over H (halo via manual DMA) so the
    # per-batch block stays under v7x's 64 MiB VMEM.
    B, H, W, C = x.shape
    xp = jnp.pad(x, ((0, 0), (1, 1), (1, 1), (0, 0)))
    w9c = jnp.transpose(w[:, 0], (1, 2, 0)).reshape(9, C)
    return pl.pallas_call(
        functools.partial(_dwconv_kernel, H=H, W=W),
        out_shape=jax.ShapeDtypeStruct((B, H, W, C), jnp.float32),
        grid=(B,),
        in_specs=[pl.BlockSpec((1, H + 2, W + 2, C), lambda b: (b, 0, 0, 0)),
                  pl.BlockSpec((9, C), lambda b: (0, 0))],
        out_specs=pl.BlockSpec((1, H, W, C), lambda b: (b, 0, 0, 0)),
        compiler_params=pltpu.CompilerParams(
            dimension_semantics=("parallel",),
            vmem_limit_bytes=_VMEM_LIMIT),
    )(xp, w9c)


# --------------------------------------------------------------------------
# Pallas channel attention (Restormer style), 2 heads per grid step
# --------------------------------------------------------------------------
def _attention_kernel(temp_ref, q_ref, k_ref, v_ref, o_ref, *, hb):
    i = pl.program_id(0)
    for h in range(hb):
        q = q_ref[h]
        k = k_ref[h]
        v = v_ref[h]
        qn = q * jax.lax.rsqrt(jnp.maximum(jnp.sum(q * q, -1, keepdims=True), 1e-24))
        kn = k * jax.lax.rsqrt(jnp.maximum(jnp.sum(k * k, -1, keepdims=True), 1e-24))
        attn = jax.lax.dot_general(
            qn.astype(jnp.bfloat16), kn.astype(jnp.bfloat16),
            (((1,), (1,)), ((), ())),
            preferred_element_type=jnp.float32) * temp_ref[i * hb + h]
        attn = attn - jnp.max(attn, axis=-1, keepdims=True)
        attn = jnp.exp(attn)
        attn = attn * pl.reciprocal(jnp.sum(attn, axis=-1, keepdims=True), approx=True)
        o_ref[h] = jnp.dot(attn.astype(jnp.bfloat16), v.astype(jnp.bfloat16),
                           preferred_element_type=jnp.float32)


def channel_attention(q, k, v, temps):
    # q, k, v: (B*heads, c_head, HW), temps: (B*heads,)
    BH, C, L = q.shape
    hb = 2 if BH % 2 == 0 else 1
    return pl.pallas_call(
        functools.partial(_attention_kernel, hb=hb),
        out_shape=jax.ShapeDtypeStruct((BH, C, L), jnp.float32),
        grid_spec=pltpu.PrefetchScalarGridSpec(
            num_scalar_prefetch=1,
            grid=(BH // hb,),
            in_specs=[pl.BlockSpec((hb, C, L), lambda i, t: (i, 0, 0))] * 3,
            out_specs=pl.BlockSpec((hb, C, L), lambda i, t: (i, 0, 0))),
        compiler_params=pltpu.CompilerParams(
            dimension_semantics=("parallel",),
            vmem_limit_bytes=_VMEM_LIMIT),
    )(temps, q, k, v)


# --------------------------------------------------------------------------
# Pallas LSTM gate math on lane-dense (rows, 128) views (fp32 on the VPU)
# --------------------------------------------------------------------------
def _lstm_kernel(i_ref, f_ref, g_ref, o_ref, c_ref, c_out_ref, h_out_ref):
    i = jax.nn.sigmoid(i_ref[...])
    f = jax.nn.sigmoid(f_ref[...])
    g = jnp.tanh(g_ref[...])
    o = jax.nn.sigmoid(o_ref[...])
    c_new = f * c_ref[...] + i * g
    c_out_ref[...] = c_new
    h_out_ref[...] = o * jnp.tanh(c_new)


def lstm_gates(gates, c):
    # gates: (B, H, W, 128) = [i | f | g | o] from the fused gate conv; c: (B,H,W,32)
    B, H, W, _ = gates.shape
    C = 32
    shape = (B, H, W, C)
    n = B * H * W * C
    rows = _round_up(n, 1024) // 128
    tm = min(512, rows)
    rows_p = _round_up(rows, tm)
    total = rows_p * 128

    def to_rows(t):
        flat = t.reshape(-1)
        return jnp.pad(flat, (0, total - n)).reshape(rows_p, 128)

    parts = [to_rows(gates[..., k * C:(k + 1) * C]) for k in range(4)]
    c_rows = to_rows(c)

    c_new, h_new = pl.pallas_call(
        _lstm_kernel,
        out_shape=(jax.ShapeDtypeStruct((rows_p, 128), jnp.float32),
                   jax.ShapeDtypeStruct((rows_p, 128), jnp.float32)),
        grid=(rows_p // tm,),
        in_specs=[pl.BlockSpec((tm, 128), lambda i: (i, 0))] * 5,
        out_specs=(pl.BlockSpec((tm, 128), lambda i: (i, 0)),
                   pl.BlockSpec((tm, 128), lambda i: (i, 0))),
        compiler_params=pltpu.CompilerParams(
            dimension_semantics=("parallel",),
            vmem_limit_bytes=_VMEM_LIMIT),
    )(parts[0], parts[1], parts[2], parts[3], c_rows)

    def from_rows(t):
        return t.reshape(-1)[:n].reshape(shape)

    return from_rows(c_new), from_rows(h_new)


# --------------------------------------------------------------------------
# JAX glue: pixel (un)shuffle, bilinear resize
# --------------------------------------------------------------------------
def pixel_shuffle(x, r=2):
    B, H, W, C = x.shape
    Co = C // (r * r)
    x = x.reshape(B, H, W, Co, r, r)
    x = jnp.transpose(x, (0, 1, 4, 2, 5, 3))
    return x.reshape(B, H * r, W * r, Co)


def pixel_unshuffle(x, r=2):
    B, H, W, C = x.shape
    Ho, Wo = H // r, W // r
    x = x.reshape(B, Ho, r, Wo, r, C)
    x = jnp.transpose(x, (0, 1, 3, 5, 2, 4))
    return x.reshape(B, Ho, Wo, C * r * r)


def _resize_axis(x, axis, out_size):
    # PyTorch bilinear, align_corners=False, antialias=False
    in_size = x.shape[axis]
    scale = in_size / out_size
    dst = jnp.arange(out_size, dtype=jnp.float32)
    src = jnp.maximum((dst + 0.5) * scale - 0.5, 0.0)
    i0 = jnp.minimum(jnp.floor(src).astype(jnp.int32), in_size - 1)
    i1 = jnp.minimum(i0 + 1, in_size - 1)
    w1 = src - i0.astype(jnp.float32)
    w0 = 1.0 - w1
    x0 = jnp.take(x, i0, axis=axis)
    x1 = jnp.take(x, i1, axis=axis)
    shp = [1] * x.ndim
    shp[axis] = out_size
    return x0 * w0.reshape(shp) + x1 * w1.reshape(shp)


def bilinear_resize(x, out_h, out_w):
    return _resize_axis(_resize_axis(x, 1, out_h), 2, out_w)


# --------------------------------------------------------------------------
# Model pieces
# --------------------------------------------------------------------------
def patch_embed(x, p):
    B, H, W, _ = x.shape
    x_real = conv3x3(x, p['t2_w'])
    x_conv = conv3x3(x, p['t1_w'], act='relu')
    x_down_1 = bilinear_resize(x_conv, H // 2, W // 2)
    x_down_2 = bilinear_resize(x_down_1, H // 4, W // 4)
    x_up = bilinear_resize(x_down_2, H // 2, W // 2)
    x_final = x_down_1 - x_up
    x_final = conv3x3(bilinear_resize(x_final, H, W), p['t2_w'])
    return x_real - x_final


def attention(x, p, heads):
    B, H, W, d = x.shape
    qkv = conv1x1(x, p['qkv_w'])
    qkv = dwconv3x3(qkv, p['qkv_dw_w'])
    q, k, v = qkv[..., :d], qkv[..., d:2 * d], qkv[..., 2 * d:]
    c_head = d // heads
    L = H * W

    def to_heads(t):
        t = t.reshape(B, L, heads, c_head)
        return jnp.transpose(t, (0, 2, 3, 1)).reshape(B * heads, c_head, L)

    temps = jnp.tile(p['temperature'].reshape(1, heads), (B, 1)).reshape(B * heads)
    out = channel_attention(to_heads(q), to_heads(k), to_heads(v), temps)
    out = out.reshape(B, heads, c_head, L)
    out = jnp.transpose(out, (0, 3, 1, 2)).reshape(B, H, W, d)
    return conv1x1(out, p['proj_w'])


def feed_forward(x, p):
    hdim = p['hidden']
    y = conv1x1(x, p['in_w'])
    y = dwconv3x3(y, p['dw_w'])
    # TODO(synk): exact-erf GELU gating kept in plain JAX (erf lowering in Mosaic not guaranteed)
    y = jax.nn.gelu(y[..., :hdim], approximate=False) * y[..., hdim:]
    return conv1x1(y, p['out_w'])


def transformer_block(x, p, heads):
    x = x + attention(layernorm_nhwc(x, p['norm1_w'], p['norm1_b']), p['attn'], heads)
    x = x + feed_forward(layernorm_nhwc(x, p['norm2_w'], p['norm2_b']), p['ffn'])
    return x


def run_blocks(x, block_params, heads):
    for bp in block_params:
        x = transformer_block(x, bp, heads)
    return x


def downsample(x, w):
    return pixel_unshuffle(conv3x3(x, w), 2)


def upsample(x, w):
    return pixel_shuffle(conv3x3(x, w), 2)


# --------------------------------------------------------------------------
# Deterministic parameter construction (synthetic init, no checkpoint)
# --------------------------------------------------------------------------
class ParamGen:
    def __init__(self, seed=0, scale=0.02):
        self.key = jax.random.PRNGKey(seed)
        self.scale = scale

    def conv(self, cout, cin, k):
        self.key, sub = jax.random.split(self.key)
        return self.scale * jax.random.normal(sub, (cout, cin, k, k), jnp.float32)

    def bias(self, cout):
        self.key, sub = jax.random.split(self.key)
        return self.scale * jax.random.normal(sub, (cout,), jnp.float32)


def make_block_params(pg, dim, heads):
    hidden = int(dim * 2.66)
    return {
        'norm1_w': jnp.ones((dim,), jnp.float32),
        'norm1_b': jnp.zeros((dim,), jnp.float32),
        'norm2_w': jnp.ones((dim,), jnp.float32),
        'norm2_b': jnp.zeros((dim,), jnp.float32),
        'attn': {
            'temperature': jnp.ones((heads,), jnp.float32),
            'qkv_w': pg.conv(dim * 3, dim, 1),
            'qkv_dw_w': pg.conv(dim * 3, 1, 3),
            'proj_w': pg.conv(dim, dim, 1),
        },
        'ffn': {
            'hidden': hidden,
            'in_w': pg.conv(hidden * 2, dim, 1),
            'dw_w': pg.conv(hidden * 2, 1, 3),
            'out_w': pg.conv(dim, hidden, 1),
        },
    }


def make_params(seed=0):
    pg = ParamGen(seed)
    dim = 64
    p = {}
    p['patch_embed'] = {'t1_w': pg.conv(3, 3, 3), 't2_w': pg.conv(dim, 3, 3)}
    p['down1_2'] = pg.conv(dim // 2, dim, 3)
    p['down2_3'] = pg.conv(dim, dim * 2, 3)
    p['down3_4'] = pg.conv(dim * 2, dim * 4, 3)
    p['up4_3'] = pg.conv(dim * 16, dim * 8, 3)
    p['up3_2'] = pg.conv(dim * 8, dim * 4, 3)
    p['up2_1'] = pg.conv(dim * 4, dim * 2, 3)
    p['reduce3'] = pg.conv(dim * 4, dim * 8, 1)
    p['reduce2'] = pg.conv(dim * 2, dim * 4, 1)
    p['reduce1'] = pg.conv(dim, dim * 2, 1)
    specs = {
        'conv1_2': (4, dim, 1), 'conv2_3': (6, dim * 2, 2),
        'conv3_4': (6, dim * 4, 4), 'conv4_L': (8, dim * 8, 8),
        'conv4_3_HSI': (6, dim * 4, 4), 'conv3_2_HSI': (6, dim * 2, 2),
        'conv2_1_HSI': (6, dim, 1), 'outc': (4, dim, 1),
    }
    p['blocks'] = {name: {'heads': h,
                          'blocks': [make_block_params(pg, d, h) for _ in range(n)]}
                   for name, (n, d, h) in specs.items()}
    p['conv_final'] = pg.conv(3, dim, 3)
    p['conv0'] = (pg.conv(32, 6, 3), pg.bias(32))
    for i in range(1, 6):
        p[f'res_conv{i}'] = ((pg.conv(32, 32, 3), pg.bias(32)),
                             (pg.conv(32, 32, 3), pg.bias(32)))
    for g in ['i', 'f', 'g', 'o']:
        p[f'conv_{g}'] = (pg.conv(32, 64, 3), pg.bias(32))
    p['conv_out'] = (pg.conv(3, 32, 3), pg.bias(3))
    return p


# --------------------------------------------------------------------------
# DTPnet forward
# --------------------------------------------------------------------------
def dtpnet_forward(x_nchw, p, iterations=3):
    x_in = jnp.transpose(x_nchw, (0, 2, 3, 1)).astype(jnp.float32)  # -> NHWC
    B, H, W, _ = x_in.shape

    def blocks(name, t):
        bp = p['blocks'][name]
        return run_blocks(t, bp['blocks'], bp['heads'])

    input_level1 = patch_embed(x_in, p['patch_embed'])
    conv1_2 = blocks('conv1_2', input_level1)
    input_level2 = downsample(conv1_2, p['down1_2'])
    conv2_3 = blocks('conv2_3', input_level2)
    input_level3 = downsample(conv2_3, p['down2_3'])
    conv3_4 = blocks('conv3_4', input_level3)
    input_level4 = downsample(conv3_4, p['down3_4'])
    conv4_L = blocks('conv4_L', input_level4)

    inp_dec_level3 = upsample(conv4_L, p['up4_3'])
    inp_dec_level3 = jnp.concatenate([inp_dec_level3, conv3_4], axis=-1)
    inp_dec_level3 = conv1x1(inp_dec_level3, p['reduce3'])
    conv4_3 = blocks('conv4_3_HSI', inp_dec_level3)
    conv4_3 = conv4_3 + upsample(input_level4, p['up4_3'])

    inp_dec_level2 = upsample(conv4_3, p['up3_2'])
    inp_dec_level2 = jnp.concatenate([inp_dec_level2, conv2_3], axis=-1)
    inp_dec_level2 = conv1x1(inp_dec_level2, p['reduce2'])
    conv3_2 = blocks('conv3_2_HSI', inp_dec_level2)
    conv3_2 = conv3_2 + upsample(input_level3, p['up3_2'])

    inp_dec_level1 = upsample(conv3_2, p['up2_1'])
    inp_dec_level1 = jnp.concatenate([inp_dec_level1, conv1_2], axis=-1)
    inp_dec_level1 = conv1x1(inp_dec_level1, p['reduce1'])
    conv2_1 = blocks('conv2_1_HSI', inp_dec_level1)
    conv2_1 = conv2_1 + upsample(input_level2, p['up2_1'])

    core1 = blocks('outc', conv2_1)
    pred1 = conv3x3(core1, p['conv_final'])

    # Fused LSTM gate conv: concat i/f/g/o weights -> one (128, 64, 3, 3) conv.
    w_gate = jnp.concatenate([p['conv_i'][0], p['conv_f'][0],
                              p['conv_g'][0], p['conv_o'][0]], axis=0)
    b_gate = jnp.concatenate([p['conv_i'][1], p['conv_f'][1],
                              p['conv_g'][1], p['conv_o'][1]], axis=0)

    # recurrent convLSTM + residual refinement
    x = pred1
    h = jnp.zeros((B, H, W, 32), jnp.float32)
    c = jnp.zeros((B, H, W, 32), jnp.float32)
    for _ in range(iterations):
        x = jnp.concatenate([x_in, x], axis=-1)
        w0, b0 = p['conv0']
        x = conv3x3(x, w0, b0, act='relu')
        xh = jnp.concatenate([x, h], axis=-1)
        gates = conv3x3(xh, w_gate, b_gate)
        c, h = lstm_gates(gates, c)
        x = h
        for i in range(1, 6):
            (wa, ba), (wb, bb) = p[f'res_conv{i}']
            resx = x
            t = conv3x3(x, wa, ba, act='relu')
            t = conv3x3(t, wb, bb, act='relu')
            x = jnp.maximum(t + resx, 0.0)
        wc, bc = p['conv_out']
        x = conv3x3(x, wc, bc)
        x = x + x_in

    return (jnp.transpose(x, (0, 3, 1, 2)),
            jnp.transpose(pred1, (0, 3, 1, 2)))


if __name__ == "__main__":
    key = jax.random.PRNGKey(0)
    B, H, W = 1, 16, 16
    x = jax.random.normal(key, (B, 3, H, W), jnp.float32)
    params = make_params(seed=0)
    out, pred1 = dtpnet_forward(x, params, iterations=3)
    jax.block_until_ready((out, pred1))
    assert out.shape == (B, 3, H, W) and pred1.shape == (B, 3, H, W)
    assert bool(jnp.all(jnp.isfinite(out))) and bool(jnp.all(jnp.isfinite(pred1)))
    print("KERNEL_OK")
</pallas_src>

<mosaic_0001>
module attributes {stable_mosaic.version = 11 : i64} {
  func.func @_conv3x3_kernel(%arg0: i32, %arg1: i32, %arg2: memref<552x8xf32, #tpu.memory_space<vmem>>, %arg3: memref<9x8x128xbf16, #tpu.memory_space<vmem>>, %arg4: memref<1x128xf32, #tpu.memory_space<vmem>>, %arg5: memref<256x128xf32, #tpu.memory_space<vmem>>) attributes {dimension_semantics = [#tpu.dimension_semantics<parallel>, #tpu.dimension_semantics<parallel>], iteration_bounds = array<i64: 2, 1>, scalar_prefetch = 0 : i64, scratch_operands = 0 : i64, tpu.core_type = #tpu.core_type<tc>, window_params = [{pipeline_mode = #tpu.pipeline_mode<synchronous>, transform_indices = @transform_0, window_bounds = array<i64: 552, 8>}, {transform_indices = @transform_1, window_bounds = array<i64: 9, 8, 128>}, {transform_indices = @transform_2, window_bounds = array<i64: 1, 128>}, {transform_indices = @transform_3, window_bounds = array<i64: 256, 128>}]} {
    %c256_i32 = arith.constant 256 : i32
    %0 = arith.muli %arg0, %c256_i32 : i32
    %cst = arith.constant 0.000000e+00 : f32
    %1 = vector.broadcast %cst : f32 to vector<256x128xf32>
    %c0_i32 = arith.constant 0 : i32
    %2 = arith.addi %0, %c0_i32 : i32
    %3 = arith.index_cast %2 : i32 to index
    %c0 = arith.constant 0 : index
    %4 = vector.load %arg2[%3, %c0] : memref<552x8xf32, #tpu.memory_space<vmem>>, vector<256x8xf32>
    %5 = arith.truncf %4 : vector<256x8xf32> to vector<256x8xbf16>
    %c0_0 = arith.constant 0 : index
    %c0_1 = arith.constant 0 : index
    %c0_2 = arith.constant 0 : index
    %6 = vector.load %arg3[%c0_0, %c0_1, %c0_2] : memref<9x8x128xbf16, #tpu.memory_space<vmem>>, vector<1x8x128xbf16>
    %7 = vector.shape_cast %6 : vector<1x8x128xbf16> to vector<8x128xbf16>
    %cst_3 = arith.constant dense<0.000000e+00> : vector<256x128xf32>
    %8 = tpu.matmul %5, %7, %cst_3 {dimension_numbers = #tpu.dot_dimension_numbers<[1], [0], [0], [1], [0, 0, 1, 1], [], []>} : vector<256x8xbf16>, vector<8x128xbf16>, vector<256x128xf32> -> vector<256x128xf32>
    %9 = arith.addf %1, %8 : vector<256x128xf32>
    %c1_i32 = arith.constant 1 : i32
    %10 = arith.addi %0, %c1_i32 : i32
    %11 = arith.index_cast %10 : i32 to index
    %c0_4 = arith.constant 0 : index
    %12 = vector.load %arg2[%11, %c0_4] : memref<552x8xf32, #tpu.memory_space<vmem>>, vector<256x8xf32>
    %13 = arith.truncf %12 : vector<256x8xf32> to vector<256x8xbf16>
    %c1 = arith.constant 1 : index
    %c0_5 = arith.constant 0 : index
    %c0_6 = arith.constant 0 : index
    %14 = vector.load %arg3[%c1, %c0_5, %c0_6] : memref<9x8x128xbf16, #tpu.memory_space<vmem>>, vector<1x8x128xbf16>
    %15 = vector.shape_cast %14 : vector<1x8x128xbf16> to vector<8x128xbf16>
    %cst_7 = arith.constant dense<0.000000e+00> : vector<256x128xf32>
    %16 = tpu.matmul %13, %15, %cst_7 {dimension_numbers = #tpu.dot_dimension_numbers<[1], [0], [0], [1], [0, 0, 1, 1], [], []>} : vector<256x8xbf16>, vector<8x128xbf16>, vector<256x128xf32> -> vector<256x128xf32>
    %17 = arith.addf %9, %16 : vector<256x128xf32>
    %c2_i32 = arith.constant 2 : i32
    %18 = arith.addi %0, %c2_i32 : i32
    %19 = arith.index_cast %18 : i32 to index
    %c0_8 = arith.constant 0 : index
    %20 = vector.load %arg2[%19, %c0_8] : memref<552x8xf32, #tpu.memory_space<vmem>>, vector<256x8xf32>
    %21 = arith.truncf %20 : vector<256x8xf32> to vector<256x8xbf16>
    %c2 = arith.constant 2 : index
    %c0_9 = arith.constant 0 : index
    %c0_10 = arith.constant 0 : index
    %22 = vector.load %arg3[%c2, %c0_9, %c0_10] : memref<9x8x128xbf16, #tpu.memory_space<vmem>>, vector<1x8x128xbf16>
    %23 = vector.shape_cast %22 : vector<1x8x128xbf16> to vector<8x128xbf16>
    %cst_11 = arith.constant dense<0.000000e+00> : vector<256x128xf32>
    %24 = tpu.matmul %21, %23, %cst_11 {dimension_numbers = #tpu.dot_dimension_numbers<[1], [0], [0], [1], [0, 0, 1, 1], [], []>} : vector<256x8xbf16>, vector<8x128xbf16>, vector<256x128xf32> -> vector<256x128xf32>
    %25 = arith.addf %17, %24 : vector<256x128xf32>
    %c18_i32 = arith.constant 18 : i32
    %26 = arith.addi %0, %c18_i32 : i32
    %27 = arith.index_cast %26 : i32 to index
    %c0_12 = arith.constant 0 : index
    %28 = vector.load %arg2[%27, %c0_12] : memref<552x8xf32, #tpu.memory_space<vmem>>, vector<256x8xf32>
    %29 = arith.truncf %28 : vector<256x8xf32> to vector<256x8xbf16>
    %c3 = arith.constant 3 : index
    %c0_13 = arith.constant 0 : index
    %c0_14 = arith.constant 0 : index
    %30 = vector.load %arg3[%c3, %c0_13, %c0_14] : memref<9x8x128xbf16, #tpu.memory_space<vmem>>, vector<1x8x128xbf16>
    %31 = vector.shape_cast %30 : vector<1x8x128xbf16> to vector<8x128xbf16>
    %cst_15 = arith.constant dense<0.000000e+00> : vector<256x128xf32>
    %32 = tpu.matmul %29, %31, %cst_15 {dimension_numbers = #tpu.dot_dimension_numbers<[1], [0], [0], [1], [0, 0, 1, 1], [], []>} : vector<256x8xbf16>, vector<8x128xbf16>, vector<256x128xf32> -> vector<256x128xf32>
    %33 = arith.addf %25, %32 : vector<256x128xf32>
    %c19_i32 = arith.constant 19 : i32
    %34 = arith.addi %0, %c19_i32 : i32
    %35 = arith.index_cast %34 : i32 to index
    %c0_16 = arith.constant 0 : index
    %36 = vector.load %arg2[%35, %c0_16] : memref<552x8xf32, #tpu.memory_space<vmem>>, vector<256x8xf32>
    %37 = arith.truncf %36 : vector<256x8xf32> to vector<256x8xbf16>
    %c4 = arith.constant 4 : index
    %c0_17 = arith.constant 0 : index
    %c0_18 = arith.constant 0 : index
    %38 = vector.load %arg3[%c4, %c0_17, %c0_18] : memref<9x8x128xbf16, #tpu.memory_space<vmem>>, vector<1x8x128xbf16>
    %39 = vector.shape_cast %38 : vector<1x8x128xbf16> to vector<8x128xbf16>
    %cst_19 = arith.constant dense<0.000000e+00> : vector<256x128xf32>
    %40 = tpu.matmul %37, %39, %cst_19 {dimension_numbers = #tpu.dot_dimension_numbers<[1], [0], [0], [1], [0, 0, 1, 1], [], []>} : vector<256x8xbf16>, vector<8x128xbf16>, vector<256x128xf32> -> vector<256x128xf32>
    %41 = arith.addf %33, %40 : vector<256x128xf32>
    %c20_i32 = arith.constant 20 : i32
    %42 = arith.addi %0, %c20_i32 : i32
    %43 = arith.index_cast %42 : i32 to index
    %c0_20 = arith.constant 0 : index
    %44 = vector.load %arg2[%43, %c0_20] : memref<552x8xf32, #tpu.memory_space<vmem>>, vector<256x8xf32>
    %45 = arith.truncf %44 : vector<256x8xf32> to vector<256x8xbf16>
    %c5 = arith.constant 5 : index
    %c0_21 = arith.constant 0 : index
    %c0_22 = arith.constant 0 : index
    %46 = vector.load %arg3[%c5, %c0_21, %c0_22] : memref<9x8x128xbf16, #tpu.memory_space<vmem>>, vector<1x8x128xbf16>
    %47 = vector.shape_cast %46 : vector<1x8x128xbf16> to vector<8x128xbf16>
    %cst_23 = arith.constant dense<0.000000e+00> : vector<256x128xf32>
    %48 = tpu.matmul %45, %47, %cst_23 {dimension_numbers = #tpu.dot_dimension_numbers<[1], [0], [0], [1], [0, 0, 1, 1], [], []>} : vector<256x8xbf16>, vector<8x128xbf16>, vector<256x128xf32> -> vector<256x128xf32>
    %49 = arith.addf %41, %48 : vector<256x128xf32>
    %c36_i32 = arith.constant 36 : i32
    %50 = arith.addi %0, %c36_i32 : i32
    %51 = arith.index_cast %50 : i32 to index
    %c0_24 = arith.constant 0 : index
    %52 = vector.load %arg2[%51, %c0_24] : memref<552x8xf32, #tpu.memory_space<vmem>>, vector<256x8xf32>
    %53 = arith.truncf %52 : vector<256x8xf32> to vector<256x8xbf16>
    %c6 = arith.constant 6 : index
    %c0_25 = arith.constant 0 : index
    %c0_26 = arith.constant 0 : index
    %54 = vector.load %arg3[%c6, %c0_25, %c0_26] : memref<9x8x128xbf16, #tpu.memory_space<vmem>>, vector<1x8x128xbf16>
    %55 = vector.shape_cast %54 : vector<1x8x128xbf16> to vector<8x128xbf16>
    %cst_27 = arith.constant dense<0.000000e+00> : vector<256x128xf32>
    %56 = tpu.matmul %53, %55, %cst_27 {dimension_numbers = #tpu.dot_dimension_numbers<[1], [0], [0], [1], [0, 0, 1, 1], [], []>} : vector<256x8xbf16>, vector<8x128xbf16>, vector<256x128xf32> -> vector<256x128xf32>
    %57 = arith.addf %49, %56 : vector<256x128xf32>
    %c37_i32 = arith.constant 37 : i32
    %58 = arith.addi %0, %c37_i32 : i32
    %59 = arith.index_cast %58 : i32 to index
    %c0_28 = arith.constant 0 : index
    %60 = vector.load %arg2[%59, %c0_28] : memref<552x8xf32, #tpu.memory_space<vmem>>, vector<256x8xf32>
    %61 = arith.truncf %60 : vector<256x8xf32> to vector<256x8xbf16>
    %c7 = arith.constant 7 : index
    %c0_29 = arith.constant 0 : index
    %c0_30 = arith.constant 0 : index
    %62 = vector.load %arg3[%c7, %c0_29, %c0_30] : memref<9x8x128xbf16, #tpu.memory_space<vmem>>, vector<1x8x128xbf16>
    %63 = vector.shape_cast %62 : vector<1x8x128xbf16> to vector<8x128xbf16>
    %cst_31 = arith.constant dense<0.000000e+00> : vector<256x128xf32>
    %64 = tpu.matmul %61, %63, %cst_31 {dimension_numbers = #tpu.dot_dimension_numbers<[1], [0], [0], [1], [0, 0, 1, 1], [], []>} : vector<256x8xbf16>, vector<8x128xbf16>, vector<256x128xf32> -> vector<256x128xf32>
    %65 = arith.addf %57, %64 : vector<256x128xf32>
    %c38_i32 = arith.constant 38 : i32
    %66 = arith.addi %0, %c38_i32 : i32
    %67 = arith.index_cast %66 : i32 to index
    %c0_32 = arith.constant 0 : index
    %68 = vector.load %arg2[%67, %c0_32] : memref<552x8xf32, #tpu.memory_space<vmem>>, vector<256x8xf32>
    %69 = arith.truncf %68 : vector<256x8xf32> to vector<256x8xbf16>
    %c8 = arith.constant 8 : index
    %c0_33 = arith.constant 0 : index
    %c0_34 = arith.constant 0 : index
    %70 = vector.load %arg3[%c8, %c0_33, %c0_34] : memref<9x8x128xbf16, #tpu.memory_space<vmem>>, vector<1x8x128xbf16>
    %71 = vector.shape_cast %70 : vector<1x8x128xbf16> to vector<8x128xbf16>
    %cst_35 = arith.constant dense<0.000000e+00> : vector<256x128xf32>
    %72 = tpu.matmul %69, %71, %cst_35 {dimension_numbers = #tpu.dot_dimension_numbers<[1], [0], [0], [1], [0, 0, 1, 1], [], []>} : vector<256x8xbf16>, vector<8x128xbf16>, vector<256x128xf32> -> vector<256x128xf32>
    %73 = arith.addf %65, %72 : vector<256x128xf32>
    %c0_36 = arith.constant 0 : index
    %c0_37 = arith.constant 0 : index
    %74 = vector.load %arg4[%c0_36, %c0_37] : memref<1x128xf32, #tpu.memory_space<vmem>>, vector<1x128xf32>
    %75 = vector.broadcast %74 : vector<1x128xf32> to vector<256x128xf32>
    %76 = arith.addf %73, %75 : vector<256x128xf32>
    %c0_38 = arith.constant 0 : index
    %c0_39 = arith.constant 0 : index
    %77 = vector.load %arg5[%c0_38, %c0_39] : memref<256x128xf32, #tpu.memory_space<vmem>>, vector<256x128xf32>
    tpu.vector_store %arg5[%c0_38, %c0_39], %76 {strides = array<i32>} : memref<256x128xf32, #tpu.memory_space<vmem>>, vector<256x128xf32>,
    return
  }
  func.func @transform_0(%arg0: i32, %arg1: i32) -> (i32, i32) {
    %c0_i32 = arith.constant 0 : i32
    %c0_i32_0 = arith.constant 0 : i32
    %c0_i32_1 = arith.constant 0 : i32
    return %c0_i32, %c0_i32_0 : i32, i32
  }
  func.func @transform_1(%arg0: i32, %arg1: i32) -> (i32, i32, i32) {
    %c0_i32 = arith.constant 0 : i32
    %c0_i32_0 = arith.constant 0 : i32
    %c0_i32_1 = arith.constant 0 : i32
    return %c0_i32, %c0_i32_0, %arg1 : i32, i32, i32
  }
  func.func @transform_2(%arg0: i32, %arg1: i32) -> (i32, i32) {
    %c0_i32 = arith.constant 0 : i32
    %c0_i32_0 = arith.constant 0 : i32
    return %c0_i32, %arg1 : i32, i32
  }
  func.func @transform_3(%arg0: i32, %arg1: i32) -> (i32, i32) {
    %c0_i32 = arith.constant 0 : i32
    return %arg0, %arg1 : i32, i32
  }
}

</mosaic_0001>

<llo_original>
// kernel: tpu_custom_call.1
$region0: #{tpu_custom_call.1}
  #allocation0 [shape = 'u32[]', space=smem, size = 0x4, offset = 0x4, fixed_abs, tag = 'smem constant byte address 0x4 - core index']
  #allocation1 [shape = 'u32[144,128]{1,0:T(1,128)}', space=vmem, size = 0x12000, scoped, tag = 'internal scratch']
  %s0 = inlined_call_operand.hbm [shape: f32[552,8], index: 0, kind: input, shape index: {}]
  %s1 = inlined_call_operand.hbm [shape: bf16[9,8,128], index: 1, kind: input, shape index: {}]
  %s2 = inlined_call_operand.hbm [shape: f32[1,128], index: 2, kind: input, shape index: {}]
  %s3 = inlined_call_operand.hbm [shape: f32[512,128], index: 3, kind: output, shape index: {}]
  %s4 = sld [smem:[#allocation0]]
  $region57: #{tpu_custom_call.1} parent=0
    _
  %s6 = ssub.s32 1, %s4
  %s7 = scalar_select 0, %s6, %s4
  $region1: #{tpu_custom_call.1} parent=0
    #allocation2 [shape = 'u8[282624]{0}', space=vmem, size = 0x45000, scoped, tag = 'input window, operand 0, single buffered']
    #allocation3 [shape = 's32[2]{0}', space=sflag, size = 0x8, scoped, tag = 'scoped memory for tpu_custom_call.1']
    #allocation4 [shape = 's32[2]{0}', space=sflag, size = 0x8, scoped, tag = 'scoped memory for tpu_custom_call.1']
    #allocation5 [shape = 'u8[18432]{0}', space=vmem, size = 0x4800, scoped, tag = 'input window, operand 1, single buffered']
    #allocation6 [shape = 's32[1]{0}', space=sflag, size = 0x4, scoped, tag = 'scoped memory for tpu_custom_call.1']
    #allocation7 [shape = 'u8[512]{0}', space=vmem, size = 0x400, scoped, tag = 'input window, operand 2, single buffered']
    #allocation8 [shape = 'u8[262144]{0}', space=vmem, size = 0x40000, scoped, tag = 'output window, operand 0']
    %8 = vsyncpa [#allocation3], 0
    %9 = vsyncpa [#allocation6], 0
    %10 = vsyncpa [#allocation4], 0
    %s11 = scalar_lea.sflag [#allocation4], 1
    %12 = vsyncpa %s11, 0
    loop: start=0, step=1, limit=4
    $region2: #{tpu_custom_call.1} parent=1 // loop_pre_header
      _
    $region3: #{tpu_custom_call.1} parent=1 // loop_header
      %s14 = sphi 0, %s18
      %p15 = scmp.ge.s32.totalorder %s14, 4
      %s21 = sphi 0, %s33
      %s22 = sphi 0, %s29
      %s23 = sphi 0, %s21
      %s24 = sphi 0, %s22
      %s25 = sphi 0, %s23
      %s26 = sphi 0, %s24
      %s34 = sphi 0, %s34
      %s36 = sphi 0, %s34
      %s37 = sphi 0, %s36
      %s51 = sphi 0, %s37
      %s57 = sphi 0, %s59
      %s60 = sphi 0, %s57
      %s61 = sphi 0, %s60
      %s77 = sphi 0, %s61
      %s83 = sphi 0, %s85
      %s86 = sphi 0, %s83
      %s87 = sphi 0, %s86
      %s103 = sphi 0, %s87
      %s111 = sphi 0, %s113
      %s114 = sphi 0, %s111
      %s115 = sphi 0, %s114
      %s131 = sphi 0, %s115
    $region4: #{tpu_custom_call.1} parent=1 // loop_header_branch
      %17 = sbr.rel (%p15) target = $region8
    $region5: #{tpu_custom_call.1} parent=1 // loop_body
      %s19 = ssub.s32 %s14, 1
      %s20 = ssub.s32 %s14, 2
      %s27 = sadd.s32 1, %s22
      %p28 = scmp.ge.s32.totalorder %s27, 1
      %s29 = scalar_select %p28, 0, %s27
      %s30 = sadd.s32 1, %s21
      %s31 = scalar_select %p28, %s30, %s21
      %p32 = scmp.ge.s32.totalorder %s31, 2
      %s33 = scalar_select %p32, 0, %s31
      %s35 = sadd.s32 %s34, 1
      %p38 = scmp.eq.s32.totalorder %s14, 1
      %p39 = scmp.ne.s32.totalorder %s34, %s36
      %p40 = scmp.eq.s32.totalorder %s14, 0
      %p41 = por %p39, %p40
      %p42 = scmp.ne.s32.totalorder %s34, %s36
      %p43 = scmp.eq.s32.totalorder %s19, 1
      %p44 = por %p42, %p43
      %p45 = scmp.ne.s32.totalorder %s36, %s37
      %p46 = scmp.eq.s32.totalorder %s19, 0
      %p47 = por %p45, %p46
      %p48 = scmp.ne.s32.totalorder %s36, %s37
      %p49 = scmp.eq.s32.totalorder %s20, 1
      %p50 = por %p48, %p49
      %p52 = scmp.ne.s32.totalorder %s37, %s51
      %p53 = scmp.eq.s32.totalorder %s20, 0
      %p54 = por %p52, %p53
      %s55 = ssub.s32 %s22, %s29
      %p56 = scmp.eq.s32.totalorder %s55, 0
      %s58 = sadd.s32 %s57, 1
      %s59 = scalar_select %p56, %s57, %s58
      %p62 = pneg %p56
      %p63 = scmp.eq.s32.totalorder %s14, 1
      %p64 = por %p62, %p63
      %p65 = scmp.ne.s32.totalorder %s57, %s60
      %p66 = scmp.eq.s32.totalorder %s14, 0
      %p67 = por %p65, %p66
      %p68 = scmp.ne.s32.totalorder %s57, %s60
      %p69 = scmp.eq.s32.totalorder %s19, 1
      %p70 = por %p68, %p69
      %p71 = scmp.ne.s32.totalorder %s60, %s61
      %p72 = scmp.eq.s32.totalorder %s19, 0
      %p73 = por %p71, %p72
      %p74 = scmp.ne.s32.totalorder %s60, %s61
      %p75 = scmp.eq.s32.totalorder %s20, 1
      %p76 = por %p74, %p75
      %p78 = scmp.ne.s32.totalorder %s61, %s77
      %p79 = scmp.eq.s32.totalorder %s20, 0
      %p80 = por %p78, %p79
      %s81 = ssub.s32 %s22, %s29
      %p82 = scmp.eq.s32.totalorder %s81, 0
      %s84 = sadd.s32 %s83, 1
      %s85 = scalar_select %p82, %s83, %s84
      %p88 = pneg %p82
      %p89 = scmp.eq.s32.totalorder %s14, 1
      %p90 = por %p88, %p89
      %p91 = scmp.ne.s32.totalorder %s83, %s86
      %p92 = scmp.eq.s32.totalorder %s14, 0
      %p93 = por %p91, %p92
      %p94 = scmp.ne.s32.totalorder %s83, %s86
      %p95 = scmp.eq.s32.totalorder %s19, 1
      %p96 = por %p94, %p95
      %p97 = scmp.ne.s32.totalorder %s86, %s87
      %p98 = scmp.eq.s32.totalorder %s19, 0
      %p99 = por %p97, %p98
      %p100 = scmp.ne.s32.totalorder %s86, %s87
      %p101 = scmp.eq.s32.totalorder %s20, 1
      %p102 = por %p100, %p101
      %p104 = scmp.ne.s32.totalorder %s87, %s103
      %p105 = scmp.eq.s32.totalorder %s20, 0
      %p106 = por %p104, %p105
      %s107 = ssub.s32 %s21, %s33
      %s108 = ssub.s32 %s22, %s29
      %s109 = sor.u32 %s107, %s108
      %p110 = scmp.eq.s32.totalorder %s109, 0
      %s112 = sadd.s32 %s111, 1
      %s113 = scalar_select %p110, %s111, %s112
      %p116 = pneg %p110
      %p117 = scmp.eq.s32.totalorder %s14, 1
      %p118 = por %p116, %p117
      %p119 = scmp.ne.s32.totalorder %s111, %s114
      %p120 = scmp.eq.s32.totalorder %s14, 0
      %p121 = por %p119, %p120
      %p122 = scmp.ne.s32.totalorder %s111, %s114
      %p123 = scmp.eq.s32.totalorder %s19, 1
      %p124 = por %p122, %p123
      %p125 = scmp.ne.s32.totalorder %s114, %s115
      %p126 = scmp.eq.s32.totalorder %s19, 0
      %p127 = por %p125, %p126
      %p128 = scmp.ne.s32.totalorder %s114, %s115
      %p129 = scmp.eq.s32.totalorder %s20, 1
      %p130 = por %p128, %p129
      %p132 = scmp.ne.s32.totalorder %s115, %s131
      %p133 = scmp.eq.s32.totalorder %s20, 0
      %p134 = por %p132, %p133
      %p135 = scmp.le.s32.totalorder 1, %s14
      %p136 = scmp.lt.s32.totalorder %s14, 3
      %p137 = pnand %p135, %p136
      %p138 = pneg %p137
      // Predicated region
      $region9: #{tpu_custom_call.1} parent=5 // pred_check
        _
      $region10: #{tpu_custom_call.1} parent=5 // pred_check_branch
        %140 = sbr.rel (%p137) target = $region12
      $region11: #{tpu_custom_call.1} parent=5 // pred_region
        %s141 = ssub.s32 %s14, 1
        // Predicated region
        $region13: #{tpu_custom_call.1} parent=11 // pred_check
          %p142 = pneg %p47
        $region14: #{tpu_custom_call.1} parent=11 // pred_check_branch
          %144 = sbr.rel (%p142) target = $region16
        $region15: #{tpu_custom_call.1} parent=11 // pred_region
          %s146 = ssub.s32 8832, 8832
          %147 = vsyncadd [#allocation3], %s146
          %s148 = sshll.u32 [#allocation2], 4
          %s149 = int_to_ptr.vmem [resolvable:$true] %s148
          %154 = dma.hbm_to_vmem [thread:$0]  %s0, 8832, %s149, [#allocation3], 128, 128, 8
        $region16: #{tpu_custom_call.1} parent=11 // pred_fallthru
          _
        // Predicated region
        $region17: #{tpu_custom_call.1} parent=11 // pred_check
          %p155 = pneg %p73
        $region18: #{tpu_custom_call.1} parent=11 // pred_check_branch
          %157 = sbr.rel (%p155) target = $region20
        $region19: #{tpu_custom_call.1} parent=11 // pred_region
          %s159 = ssub.s32 576, 576
          %160 = vsyncadd [#allocation6], %s159
          %s161 = smul.addr %s24, 64
          %s162 = scalar_lea.hbm %s1, %s161
          %s163 = sshll.u32 [#allocation5], 4
          %s164 = int_to_ptr.vmem [resolvable:$true] %s163
          %169 = dma.hbm_to_vmem [thread:$0]  %s162, 576, %s164, [#allocation6], 64, 64, 4
        $region20: #{tpu_custom_call.1} parent=11 // pred_fallthru
          _
        // Predicated region
        $region21: #{tpu_custom_call.1} parent=11 // pred_check
          %p170 = pneg %p99
        $region22: #{tpu_custom_call.1} parent=11 // pred_check_branch
          %172 = sbr.rel (%p170) target = $region24
        $region23: #{tpu_custom_call.1} parent=11 // pred_region
          %s174 = ssub.s32 16, 16
          %175 = vsyncadd [#allocation6], %s174
          %s176 = smul.addr %s24, 16
          %s177 = scalar_lea.hbm %s2, %s176
          %s179 = sshll.u32 [#allocation7], 4
          %s180 = int_to_ptr.vmem [resolvable:$true] %s179
          %182 = dma.hbm_to_vmem [thread:$0]  %s177, 16, %s180, [#allocation6]
        $region24: #{tpu_custom_call.1} parent=11 // pred_fallthru
          _
      $region12: #{tpu_custom_call.1} parent=5 // pred_fallthru
        _
      %p183 = scmp.lt.s32.totalorder %s14, 2
      // Predicated region
      $region25: #{tpu_custom_call.1} parent=5 // pred_check
        %p184 = pneg %p183
      $region26: #{tpu_custom_call.1} parent=5 // pred_check_branch
        %186 = sbr.rel (%p184) target = $region28
      $region27: #{tpu_custom_call.1} parent=5 // pred_region
        _
      $region28: #{tpu_custom_call.1} parent=5 // pred_fallthru
        _
      %p187 = scmp.le.s32.totalorder 1, %s14
      %p188 = scmp.lt.s32.totalorder %s14, 3
      %p189 = pnand %p187, %p188
      %p190 = pneg %p189
      // Predicated region
      $region29: #{tpu_custom_call.1} parent=5 // pred_check
        _
      $region30: #{tpu_custom_call.1} parent=5 // pred_check_branch
        %192 = sbr.rel (%p189) target = $region32
      $region31: #{tpu_custom_call.1} parent=5 // pred_region
        %s193 = ssub.s32 %s14, 1
        // Predicated region
        $region33: #{tpu_custom_call.1} parent=31 // pred_check
          %p194 = pneg %p47
        $region34: #{tpu_custom_call.1} parent=31 // pred_check_branch
          %196 = sbr.rel (%p194) target = $region36
        $region35: #{tpu_custom_call.1} parent=31 // pred_region
          %197 = dma.done [#allocation3], 8832
        $region36: #{tpu_custom_call.1} parent=31 // pred_fallthru
          _
        // Predicated region
        $region37: #{tpu_custom_call.1} parent=31 // pred_check
          %p198 = pneg %p73
        $region38: #{tpu_custom_call.1} parent=31 // pred_check_branch
          %200 = sbr.rel (%p198) target = $region40
        $region39: #{tpu_custom_call.1} parent=31 // pred_region
          %201 = dma.done [#allocation6], 576
        $region40: #{tpu_custom_call.1} parent=31 // pred_fallthru
          _
        // Predicated region
        $region41: #{tpu_custom_call.1} parent=31 // pred_check
          %p202 = pneg %p99
        $region42: #{tpu_custom_call.1} parent=31 // pred_check_branch
          %204 = sbr.rel (%p202) target = $region44
        $region43: #{tpu_custom_call.1} parent=31 // pred_region
          %205 = dma.done [#allocation6], 16
        $region44: #{tpu_custom_call.1} parent=31 // pred_fallthru
          _
        %p206 = pneg %p47
        %p207 = pneg %p44
        %p208 = pneg %p73
        %p209 = pneg %p70
        %p210 = pneg %p99
        %p211 = pneg %p96
        %p212 = pneg %p127
        %p213 = pneg %p124
        %s214 = sand.u32 %s114, 1
        %s215 = scalar_lea.sflag [#allocation4], %s214
        %s216 = sand.u32 %s114, 1
        %s217 = smul.addr %s216, 256
        %s218 = scalar_lea.vmem [#allocation8], %s217
        %s219 = smul.u32 32, %s23
        %s221 = smul.u32 %s23, 256
        %s222 = scalar_lea.vmem [#allocation2], %s221
        %v223 = vld [vmem:[%s222] sm:$0xff]
        %v224 = vld [vmem:[%s222 + $0x8] sm:$0xff]
        %v225 = vld [vmem:[%s222 + $0x10] sm:$0xff]
        %v226 = vld [vmem:[%s222 + $0x18] sm:$0xff]
        %v227 = vld [vmem:[%s222 + $0x20] sm:$0xff]
        %v228 = vld [vmem:[%s222 + $0x28] sm:$0xff]
        %v229 = vld [vmem:[%s222 + $0x30] sm:$0xff]
        %v230 = vld [vmem:[%s222 + $0x38] sm:$0xff]
        %v231 = vld [vmem:[%s222 + $0x40] sm:$0xff]
        %v232 = vld [vmem:[%s222 + $0x48] sm:$0xff]
        %v233 = vld [vmem:[%s222 + $0x50] sm:$0xff]
        %v234 = vld [vmem:[%s222 + $0x58] sm:$0xff]
        %v235 = vld [vmem:[%s222 + $0x60] sm:$0xff]
        %v236 = vld [vmem:[%s222 + $0x68] sm:$0xff]
        %v237 = vld [vmem:[%s222 + $0x70] sm:$0xff]
        %v238 = vld [vmem:[%s222 + $0x78] sm:$0xff]
        %v239 = vld [vmem:[%s222 + $0x80] sm:$0xff]
        %v240 = vld [vmem:[%s222 + $0x88] sm:$0xff]
        %v241 = vld [vmem:[%s222 + $0x90] sm:$0xff]
        %v242 = vld [vmem:[%s222 + $0x98] sm:$0xff]
        %v243 = vld [vmem:[%s222 + $0xa0] sm:$0xff]
        %v244 = vld [vmem:[%s222 + $0xa8] sm:$0xff]
        %v245 = vld [vmem:[%s222 + $0xb0] sm:$0xff]
        %v246 = vld [vmem:[%s222 + $0xb8] sm:$0xff]
        %v247 = vld [vmem:[%s222 + $0xc0] sm:$0xff]
        %v248 = vld [vmem:[%s222 + $0xc8] sm:$0xff]
        %v249 = vld [vmem:[%s222 + $0xd0] sm:$0xff]
        %v250 = vld [vmem:[%s222 + $0xd8] sm:$0xff]
        %v251 = vld [vmem:[%s222 + $0xe0] sm:$0xff]
        %v252 = vld [vmem:[%s222 + $0xe8] sm:$0xff]
        %v253 = vld [vmem:[%s222 + $0xf0] sm:$0xff]
        %v254 = vld [vmem:[%s222 + $0xf8] sm:$0xff]
        %v255 = vpack.c.bf16 %v224, %v223
        %v256 = vpack.c.bf16 %v226, %v225
        %v257 = vpack.c.bf16 %v228, %v227
        %v258 = vpack.c.bf16 %v230, %v229
        %v259 = vpack.c.bf16 %v232, %v231
        %v260 = vpack.c.bf16 %v234, %v233
        %v261 = vpack.c.bf16 %v236, %v235
        %v262 = vpack.c.bf16 %v238, %v237
        %v263 = vpack.c.bf16 %v240, %v239
        %v264 = vpack.c.bf16 %v242, %v241
        %v265 = vpack.c.bf16 %v244, %v243
        %v266 = vpack.c.bf16 %v246, %v245
        %v267 = vpack.c.bf16 %v248, %v247
        %v268 = vpack.c.bf16 %v250, %v249
        %v269 = vpack.c.bf16 %v252, %v251
        %v270 = vpack.c.bf16 %v254, %v253
        %v271 = vld [vmem:[#allocation5] sm:$0xf]
        %s272 = sadd.s32 %s221, 1
        %s273 = scalar_lea.vmem [#allocation2], %s272
        %v274 = vld [vmem:[%s273] sm:$0xff]
        %v275 = vld [vmem:[%s273 + $0x8] sm:$0xff]
        %v276 = vld [vmem:[%s273 + $0x10] sm:$0xff]
        %v277 = vld [vmem:[%s273 + $0x18] sm:$0xff]
        %v278 = vld [vmem:[%s273 + $0x20] sm:$0xff]
        %v279 = vld [vmem:[%s273 + $0x28] sm:$0xff]
        %v280 = vld [vmem:[%s273 + $0x30] sm:$0xff]
        %v281 = vld [vmem:[%s273 + $0x38] sm:$0xff]
        %v282 = vld [vmem:[%s273 + $0x40] sm:$0xff]
        %v283 = vld [vmem:[%s273 + $0x48] sm:$0xff]
        %v284 = vld [vmem:[%s273 + $0x50] sm:$0xff]
        %v285 = vld [vmem:[%s273 + $0x58] sm:$0xff]
        %v286 = vld [vmem:[%s273 + $0x60] sm:$0xff]
        %v287 = vld [vmem:[%s273 + $0x68] sm:$0xff]
        %v288 = vld [vmem:[%s273 + $0x70] sm:$0xff]
        %v289 = vld [vmem:[%s273 + $0x78] sm:$0xff]
        %v290 = vld [vmem:[%s273 + $0x80] sm:$0xff]
        %v291 = vld [vmem:[%s273 + $0x88] sm:$0xff]
        %v292 = vld [vmem:[%s273 + $0x90] sm:$0xff]
        %v293 = vld [vmem:[%s273 + $0x98] sm:$0xff]
        %v294 = vld [vmem:[%s273 + $0xa0] sm:$0xff]
        %v295 = vld [vmem:[%s273 + $0xa8] sm:$0xff]
        %v296 = vld [vmem:[%s273 + $0xb0] sm:$0xff]
        %v297 = vld [vmem:[%s273 + $0xb8] sm:$0xff]
        %v298 = vld [vmem:[%s273 + $0xc0] sm:$0xff]
        %v299 = vld [vmem:[%s273 + $0xc8] sm:$0xff]
        %v300 = vld [vmem:[%s273 + $0xd0] sm:$0xff]
        %v301 = vld [vmem:[%s273 + $0xd8] sm:$0xff]
        %v302 = vld [vmem:[%s273 + $0xe0] sm:$0xff]
        %v303 = vld [vmem:[%s273 + $0xe8] sm:$0xff]
        %v304 = vld [vmem:[%s273 + $0xf0] sm:$0xff]
        %v305 = vld [vmem:[%s273 + $0xf8] sm:$0xff]
        %v306 = vpack.c.bf16 %v275, %v274
        %v307 = vpack.c.bf16 %v277, %v276
        %v308 = vpack.c.bf16 %v279, %v278
        %v309 = vpack.c.bf16 %v281, %v280
        %v310 = vpack.c.bf16 %v283, %v282
        %v311 = vpack.c.bf16 %v285, %v284
        %v312 = vpack.c.bf16 %v287, %v286
        %v313 = vpack.c.bf16 %v289, %v288
        %v314 = vpack.c.bf16 %v291, %v290
        %v315 = vpack.c.bf16 %v293, %v292
        %v316 = vpack.c.bf16 %v295, %v294
        %v317 = vpack.c.bf16 %v297, %v296
        %v318 = vpack.c.bf16 %v299, %v298
        %v319 = vpack.c.bf16 %v301, %v300
        %v320 = vpack.c.bf16 %v303, %v302
        %v321 = vpack.c.bf16 %v305, %v304
        %s322 = scalar_lea.vmem [#allocation5], 4
        %v323 = vld [vmem:[%s322] sm:$0xf]
        %vm324 = vcmask 64512
        %v326 = vsel %vm324, %v306, 0
        %v329 = vsel %vm324, %v307, 0
        %v332 = vsel %vm324, %v308, 0
        %v335 = vsel %vm324, %v309, 0
        %v338 = vsel %vm324, %v310, 0
        %v341 = vsel %vm324, %v311, 0
        %v344 = vsel %vm324, %v312, 0
        %v347 = vsel %vm324, %v313, 0
        %v350 = vsel %vm324, %v314, 0
        %v353 = vsel %vm324, %v315, 0
        %v356 = vsel %vm324, %v316, 0
        %v359 = vsel %vm324, %v317, 0
        %v362 = vsel %vm324, %v318, 0
        %v365 = vsel %vm324, %v319, 0
        %v368 = vsel %vm324, %v320, 0
        %v371 = vsel %vm324, %v321, 0
        %vm373 = vcmask 1043456
        %v375 = vsel %vm373, %v323, 0
        %377 = vmatprep.subr.bf16.mxu0 0
        %378 = vmatpush1.bf16.msra.mxu0 %v375
        %379 = vmatprep.subr.bf16.mxu0 0
        %380 = vmatpush1.bf16.msra.mxu0 0
        %381 = vmatprep.subr.bf16.mxu0 0
        %382 = vmatpush1.bf16.msra.mxu0 0
        %383 = vmatprep.subr.bf16.mxu0 0
        %384 = vmatpush1.bf16.msra.mxu0 0
        %385 = vmatprep.subr.bf16.mxu0 0
        %386 = vmatpush1.bf16.msra.mxu0 0
        %387 = vmatprep.subr.bf16.mxu0 0
        %388 = vmatpush1.bf16.msra.mxu0 0
        %389 = vmatprep.subr.bf16.mxu0 0
        %390 = vmatpush1.bf16.msra.mxu0 0
        %391 = vmatprep.subr.bf16.mxu0 0
        %392 = vmatpush1.bf16.msra.mxu0 0
        %393 = vmatprep.subr.bf16.mxu0 0
        %394 = vmatpush1.bf16.msra.mxu0 0
        %395 = vmatprep.subr.bf16.mxu0 0
        %396 = vmatpush1.bf16.msra.mxu0 0
        %397 = vmatprep.subr.bf16.mxu0 0
        %398 = vmatpush1.bf16.msra.mxu0 0
        %399 = vmatprep.subr.bf16.mxu0 0
        %400 = vmatpush1.bf16.msra.mxu0 0
        %401 = vmatprep.subr.bf16.mxu0 0
        %402 = vmatpush1.bf16.msra.mxu0 0
        %403 = vmatprep.subr.bf16.mxu0 0
        %404 = vmatpush1.bf16.msra.mxu0 0
        %405 = vmatprep.subr.bf16.mxu0 0
        %406 = vmatpush1.bf16.msra.mxu0 0
        %407 = vmatprep.subr.bf16.mxu0 0
        %408 = vmatpush1.bf16.msra.mxu0 0
        %409 = vmatprep.mubr.bf16.mxu0 0
        %410 = vmatmul.mubr.bf16.gmra.mrb[0].mxu0 %v326
        %v411 = vpop.f32.mrb[0].mxu0
        %v412 = vadd.f32 0.0, %v411
        %v413 = vpop.f32.mrb[0].mxu0
        %v414 = vpop.f32.mrb[0].mxu0
        %v415 = vadd.f32 0.0, %v414
        %v416 = vpop.f32.mrb[0].mxu0
        %417 = vmatprep.mubr.bf16.mxu0 0
        %418 = vmatmul.mubr.bf16.gmra.mrb[0].mxu0 %v329
        %v419 = vpop.f32.mrb[0].mxu0
        %v420 = vadd.f32 0.0, %v419
        %v421 = vpop.f32.mrb[0].mxu0
        %v422 = vpop.f32.mrb[0].mxu0
        %v423 = vadd.f32 0.0, %v422
        %v424 = vpop.f32.mrb[0].mxu0
        %425 = vmatprep.mubr.bf16.mxu0 0
        %426 = vmatmul.mubr.bf16.gmra.mrb[0].mxu0 %v332
        %v427 = vpop.f32.mrb[0].mxu0
        %v428 = vadd.f32 0.0, %v427
        %v429 = vpop.f32.mrb[0].mxu0
        %v430 = vpop.f32.mrb[0].mxu0
        %v431 = vadd.f32 0.0, %v430
        %v432 = vpop.f32.mrb[0].mxu0
        %433 = vmatprep.mubr.bf16.mxu0 0
        %434 = vmatmul.mubr.bf16.gmra.mrb[0].mxu0 %v335
        %v435 = vpop.f32.mrb[0].mxu0
        %v436 = vadd.f32 0.0, %v435
        %v437 = vpop.f32.mrb[0].mxu0
        %v438 = vpop.f32.mrb[0].mxu0
        %v439 = vadd.f32 0.0, %v438
        %v440 = vpop.f32.mrb[0].mxu0
        %441 = vmatprep.mubr.bf16.mxu0 0
        %442 = vmatmul.mubr.bf16.gmra.mrb[0].mxu0 %v338
        %v443 = vpop.f32.mrb[0].mxu0
        %v444 = vadd.f32 0.0, %v443
        %v445 = vpop.f32.mrb[0].mxu0
        %v446 = vpop.f32.mrb[0].mxu0
        %v447 = vadd.f32 0.0, %v446
        %v448 = vpop.f32.mrb[0].mxu0
        %449 = vmatprep.mubr.bf16.mxu0 0
        %450 = vmatmul.mubr.bf16.gmra.mrb[0].mxu0 %v341
        %v451 = vpop.f32.mrb[0].mxu0
        %v452 = vadd.f32 0.0, %v451
        %v453 = vpop.f32.mrb[0].mxu0
        %v454 = vpop.f32.mrb[0].mxu0
        %v455 = vadd.f32 0.0, %v454
        %v456 = vpop.f32.mrb[0].mxu0
        %457 = vmatprep.mubr.bf16.mxu0 0
        %458 = vmatmul.mubr.bf16.gmra.mrb[0].mxu0 %v344
        %v459 = vpop.f32.mrb[0].mxu0
        %v460 = vadd.f32 0.0, %v459
        %v461 = vpop.f32.mrb[0].mxu0
        %v462 = vpop.f32.mrb[0].mxu0
        %v463 = vadd.f32 0.0, %v462
        %v464 = vpop.f32.mrb[0].mxu0
        %465 = vmatprep.mubr.bf16.mxu0 0
        %466 = vmatmul.mubr.bf16.gmra.mrb[0].mxu0 %v347
        %v467 = vpop.f32.mrb[0].mxu0
        %v468 = vadd.f32 0.0, %v467
        %v469 = vpop.f32.mrb[0].mxu0
        %v470 = vpop.f32.mrb[0].mxu0
        %v471 = vadd.f32 0.0, %v470
        %v472 = vpop.f32.mrb[0].mxu0
        %473 = vmatprep.mubr.bf16.mxu0 0
        %474 = vmatmul.mubr.bf16.gmra.mrb[0].mxu0 %v350
        %v475 = vpop.f32.mrb[0].mxu0
        %v476 = vadd.f32 0.0, %v475
        %v477 = vpop.f32.mrb[0].mxu0
        %v478 = vpop.f32.mrb[0].mxu0
        %v479 = vadd.f32 0.0, %v478
        %v480 = vpop.f32.mrb[0].mxu0
        %481 = vmatprep.mubr.bf16.mxu0 0
        %482 = vmatmul.mubr.bf16.gmra.mrb[0].mxu0 %v353
        %v483 = vpop.f32.mrb[0].mxu0
        %v484 = vadd.f32 0.0, %v483
        %v485 = vpop.f32.mrb[0].mxu0
        %v486 = vpop.f32.mrb[0].mxu0
        %v487 = vadd.f32 0.0, %v486
        %v488 = vpop.f32.mrb[0].mxu0
        %489 = vmatprep.mubr.bf16.mxu0 0
        %490 = vmatmul.mubr.bf16.gmra.mrb[0].mxu0 %v356
        %v491 = vpop.f32.mrb[0].mxu0
        %v492 = vadd.f32 0.0, %v491
        %v493 = vpop.f32.mrb[0].mxu0
        %v494 = vpop.f32.mrb[0].mxu0
        %v495 = vadd.f32 0.0, %v494
        %v496 = vpop.f32.mrb[0].mxu0
        %497 = vmatprep.mubr.bf16.mxu0 0
        %498 = vmatmul.mubr.bf16.gmra.mrb[0].mxu0 %v359
        %v499 = vpop.f32.mrb[0].mxu0
        %v500 = vadd.f32 0.0, %v499
        %v501 = vpop.f32.mrb[0].mxu0
        %v502 = vpop.f32.mrb[0].mxu0
        %v503 = vadd.f32 0.0, %v502
        %v504 = vpop.f32.mrb[0].mxu0
        %505 = vmatprep.mubr.bf16.mxu0 0
        %506 = vmatmul.mubr.bf16.gmra.mrb[0].mxu0 %v362
        %v507 = vpop.f32.mrb[0].mxu0
        %v508 = vadd.f32 0.0, %v507
        %v509 = vpop.f32.mrb[0].mxu0
        %v510 = vpop.f32.mrb[0].mxu0
        %v511 = vadd.f32 0.0, %v510
        %v512 = vpop.f32.mrb[0].mxu0
        %513 = vmatprep.mubr.bf16.mxu0 0
        %514 = vmatmul.mubr.bf16.gmra.mrb[0].mxu0 %v365
        %v515 = vpop.f32.mrb[0].mxu0
        %v516 = vadd.f32 0.0, %v515
        %v517 = vpop.f32.mrb[0].mxu0
        %v518 = vpop.f32.mrb[0].mxu0
        %v519 = vadd.f32 0.0, %v518
        %v520 = vpop.f32.mrb[0].mxu0
        %521 = vmatprep.mubr.bf16.mxu0 0
        %522 = vmatmul.mubr.bf16.gmra.mrb[0].mxu0 %v368
        %v523 = vpop.f32.mrb[0].mxu0
        %v524 = vadd.f32 0.0, %v523
        %v525 = vpop.f32.mrb[0].mxu0
        %v526 = vpop.f32.mrb[0].mxu0
        %v527 = vadd.f32 0.0, %v526
        %v528 = vpop.f32.mrb[0].mxu0
        %529 = vmatprep.mubr.bf16.mxu0 0
        %530 = vmatmul.mubr.bf16.gmra.mrb[0].mxu0 %v371
        %v531 = vpop.f32.mrb[0].mxu0
        %v532 = vadd.f32 0.0, %v531
        %v533 = vpop.f32.mrb[0].mxu0
        %v534 = vpop.f32.mrb[0].mxu0
        %v535 = vadd.f32 0.0, %v534
        %v536 = vpop.f32.mrb[0].mxu0
        %537 = vdwg.mxu0
        %v539 = vsel %vm324, %v255, 0
        %v542 = vsel %vm324, %v256, 0
        %v545 = vsel %vm324, %v257, 0
        %v548 = vsel %vm324, %v258, 0
        %v551 = vsel %vm324, %v259, 0
        %v554 = vsel %vm324, %v260, 0
        %v557 = vsel %vm324, %v261, 0
        %v560 = vsel %vm324, %v262, 0
        %v563 = vsel %vm324, %v263, 0
        %v566 = vsel %vm324, %v264, 0
        %v569 = vsel %vm324, %v265, 0
        %v572 = vsel %vm324, %v266, 0
        %v575 = vsel %vm324, %v267, 0
        %v578 = vsel %vm324, %v268, 0
        %v581 = vsel %vm324, %v269, 0
        %v584 = vsel %vm324, %v270, 0
        %v587 = vsel %vm373, %v271, 0
        %589 = vmatprep.subr.bf16.mxu0 0
        %590 = vmatpush1.bf16.msra.mxu0 %v587
        %591 = vmatprep.subr.bf16.mxu0 0
        %592 = vmatpush1.bf16.msra.mxu0 0
        %593 = vmatprep.subr.bf16.mxu0 0
        %594 = vmatpush1.bf16.msra.mxu0 0
        %595 = vmatprep.subr.bf16.mxu0 0
        %596 = vmatpush1.bf16.msra.mxu0 0
        %597 = vmatprep.subr.bf16.mxu0 0
        %598 = vmatpush1.bf16.msra.mxu0 0
        %599 = vmatprep.subr.bf16.mxu0 0
        %600 = vmatpush1.bf16.msra.mxu0 0
        %601 = vmatprep.subr.bf16.mxu0 0
        %602 = vmatpush1.bf16.msra.mxu0 0
        %603 = vmatprep.subr.bf16.mxu0 0
        %604 = vmatpush1.bf16.msra.mxu0 0
        %605 = vmatprep.subr.bf16.mxu0 0
        %606 = vmatpush1.bf16.msra.mxu0 0
        %607 = vmatprep.subr.bf16.mxu0 0
        %608 = vmatpush1.bf16.msra.mxu0 0
        %609 = vmatprep.subr.bf16.mxu0 0
        %610 = vmatpush1.bf16.msra.mxu0 0
        %611 = vmatprep.subr.bf16.mxu0 0
        %612 = vmatpush1.bf16.msra.mxu0 0
        %613 = vmatprep.subr.bf16.mxu0 0
        %614 = vmatpush1.bf16.msra.mxu0 0
        %615 = vmatprep.subr.bf16.mxu0 0
        %616 = vmatpush1.bf16.msra.mxu0 0
        %617 = vmatprep.subr.bf16.mxu0 0
        %618 = vmatpush1.bf16.msra.mxu0 0
        %619 = vmatprep.subr.bf16.mxu0 0
        %620 = vmatpush1.bf16.msra.mxu0 0
        %621 = vmatprep.mubr.bf16.mxu0 0
        %622 = vmatmul.mubr.bf16.gmra.mrb[0].mxu0 %v539
        %v623 = vpop.f32.mrb[0].mxu0
        %v624 = vadd.f32 %v412, %v623
        %v625 = vpop.f32.mrb[0].mxu0
        %v626 = vpop.f32.mrb[0].mxu0
        %v627 = vadd.f32 %v415, %v626
        %v628 = vpop.f32.mrb[0].mxu0
        %629 = vmatprep.mubr.bf16.mxu0 0
        %630 = vmatmul.mubr.bf16.gmra.mrb[0].mxu0 %v542
        %v631 = vpop.f32.mrb[0].mxu0
        %v632 = vadd.f32 %v420, %v631
        %v633 = vpop.f32.mrb[0].mxu0
        %v634 = vpop.f32.mrb[0].mxu0
        %v635 = vadd.f32 %v423, %v634
        %v636 = vpop.f32.mrb[0].mxu0
        %637 = vmatprep.mubr.bf16.mxu0 0
        %638 = vmatmul.mubr.bf16.gmra.mrb[0].mxu0 %v545
        %v639 = vpop.f32.mrb[0].mxu0
        %v640 = vadd.f32 %v428, %v639
        %v641 = vpop.f32.mrb[0].mxu0
        %v642 = vpop.f32.mrb[0].mxu0
        %v643 = vadd.f32 %v431, %v642
        %v644 = vpop.f32.mrb[0].mxu0
        %645 = vmatprep.mubr.bf16.mxu0 0
        %646 = vmatmul.mubr.bf16.gmra.mrb[0].mxu0 %v548
        %v647 = vpop.f32.mrb[0].mxu0
        %v648 = vadd.f32 %v436, %v647
        %v649 = vpop.f32.mrb[0].mxu0
        %v650 = vpop.f32.mrb[0].mxu0
        %v651 = vadd.f32 %v439, %v650
        %v652 = vpop.f32.mrb[0].mxu0
        %653 = vmatprep.mubr.bf16.mxu0 0
        %654 = vmatmul.mubr.bf16.gmra.mrb[0].mxu0 %v551
        %v655 = vpop.f32.mrb[0].mxu0
        %v656 = vadd.f32 %v444, %v655
        %v657 = vpop.f32.mrb[0].mxu0
        %v658 = vpop.f32.mrb[0].mxu0
        %v659 = vadd.f32 %v447, %v658
        %v660 = vpop.f32.mrb[0].mxu0
        %661 = vmatprep.mubr.bf16.mxu0 0
        %662 = vmatmul.mubr.bf16.gmra.mrb[0].mxu0 %v554
        %v663 = vpop.f32.mrb[0].mxu0
        %v664 = vadd.f32 %v452, %v663
        %v665 = vpop.f32.mrb[0].mxu0
        %v666 = vpop.f32.mrb[0].mxu0
        %v667 = vadd.f32 %v455, %v666
        %v668 = vpop.f32.mrb[0].mxu0
        %669 = vmatprep.mubr.bf16.mxu0 0
        %670 = vmatmul.mubr.bf16.gmra.mrb[0].mxu0 %v557
        %v671 = vpop.f32.mrb[0].mxu0
        %v672 = vadd.f32 %v460, %v671
        %v673 = vpop.f32.mrb[0].mxu0
        %v674 = vpop.f32.mrb[0].mxu0
        %v675 = vadd.f32 %v463, %v674
        %v676 = vpop.f32.mrb[0].mxu0
        %677 = vmatprep.mubr.bf16.mxu0 0
        %678 = vmatmul.mubr.bf16.gmra.mrb[0].mxu0 %v560
        %v679 = vpop.f32.mrb[0].mxu0
        %v680 = vadd.f32 %v468, %v679
        %v681 = vpop.f32.mrb[0].mxu0
        %v682 = vpop.f32.mrb[0].mxu0
        %v683 = vadd.f32 %v471, %v682
        %v684 = vpop.f32.mrb[0].mxu0
        %685 = vmatprep.mubr.bf16.mxu0 0
        %686 = vmatmul.mubr.bf16.gmra.mrb[0].mxu0 %v563
        %v687 = vpop.f32.mrb[0].mxu0
        %v688 = vadd.f32 %v476, %v687
        %v689 = vpop.f32.mrb[0].mxu0
        %v690 = vpop.f32.mrb[0].mxu0
        %v691 = vadd.f32 %v479, %v690
        %v692 = vpop.f32.mrb[0].mxu0
        %693 = vmatprep.mubr.bf16.mxu0 0
        %694 = vmatmul.mubr.bf16.gmra.mrb[0].mxu0 %v566
        %v695 = vpop.f32.mrb[0].mxu0
        %v696 = vadd.f32 %v484, %v695
        %v697 = vpop.f32.mrb[0].mxu0
        %v698 = vpop.f32.mrb[0].mxu0
        %v699 = vadd.f32 %v487, %v698
        %v700 = vpop.f32.mrb[0].mxu0
        %701 = vmatprep.mubr.bf16.mxu0 0
        %702 = vmatmul.mubr.bf16.gmra.mrb[0].mxu0 %v569
        %v703 = vpop.f32.mrb[0].mxu0
        %v704 = vadd.f32 %v492, %v703
        %v705 = vpop.f32.mrb[0].mxu0
        %v706 = vpop.f32.mrb[0].mxu0
        %v707 = vadd.f32 %v495, %v706
        %v708 = vpop.f32.mrb[0].mxu0
        %709 = vmatprep.mubr.bf16.mxu0 0
        %710 = vmatmul.mubr.bf16.gmra.mrb[0].mxu0 %v572
        %v711 = vpop.f32.mrb[0].mxu0
        %v712 = vadd.f32 %v500, %v711
        %v713 = vpop.f32.mrb[0].mxu0
        %v714 = vpop.f32.mrb[0].mxu0
        %v715 = vadd.f32 %v503, %v714
        %v716 = vpop.f32.mrb[0].mxu0
        %717 = vmatprep.mubr.bf16.mxu0 0
        %718 = vmatmul.mubr.bf16.gmra.mrb[0].mxu0 %v575
        %v719 = vpop.f32.mrb[0].mxu0
        %v720 = vadd.f32 %v508, %v719
        %v721 = vpop.f32.mrb[0].mxu0
        %v722 = vpop.f32.mrb[0].mxu0
        %v723 = vadd.f32 %v511, %v722
        %v724 = vpop.f32.mrb[0].mxu0
        %725 = vmatprep.mubr.bf16.mxu0 0
        %726 = vmatmul.mubr.bf16.gmra.mrb[0].mxu0 %v578
        %v727 = vpop.f32.mrb[0].mxu0
        %v728 = vadd.f32 %v516, %v727
        %v729 = vpop.f32.mrb[0].mxu0
        %v730 = vpop.f32.mrb[0].mxu0
        %v731 = vadd.f32 %v519, %v730
        %v732 = vpop.f32.mrb[0].mxu0
        %733 = vmatprep.mubr.bf16.mxu0 0
        %734 = vmatmul.mubr.bf16.gmra.mrb[0].mxu0 %v581
        %v735 = vpop.f32.mrb[0].mxu0
        %v736 = vadd.f32 %v524, %v735
        %v737 = vpop.f32.mrb[0].mxu0
        %v738 = vpop.f32.mrb[0].mxu0
        %v739 = vadd.f32 %v527, %v738
        %v740 = vpop.f32.mrb[0].mxu0
        %741 = vmatprep.mubr.bf16.mxu0 0
        %742 = vmatmul.mubr.bf16.gmra.mrb[0].mxu0 %v584
        %v743 = vpop.f32.mrb[0].mxu0
        %v744 = vadd.f32 %v532, %v743
        %v745 = vpop.f32.mrb[0].mxu0
        %v746 = vpop.f32.mrb[0].mxu0
        %v747 = vadd.f32 %v535, %v746
        %v748 = vpop.f32.mrb[0].mxu0
        %749 = vdwg.mxu0
        %s750 = sadd.s32 %s221, 2
        %s751 = scalar_lea.vmem [#allocation2], %s750
        %v752 = vld [vmem:[%s751] sm:$0xff]
        %v753 = vld [vmem:[%s751 + $0x8] sm:$0xff]
        %v754 = vld [vmem:[%s751 + $0x10] sm:$0xff]
        %v755 = vld [vmem:[%s751 + $0x18] sm:$0xff]
        %v756 = vld [vmem:[%s751 + $0x20] sm:$0xff]
        %v757 = vld [vmem:[%s751 + $0x28] sm:$0xff]
        %v758 = vld [vmem:[%s751 + $0x30] sm:$0xff]
        %v759 = vld [vmem:[%s751 + $0x38] sm:$0xff]
        %v760 = vld [vmem:[%s751 + $0x40] sm:$0xff]
        %v761 = vld [vmem:[%s751 + $0x48] sm:$0xff]
        %v762 = vld [vmem:[%s751 + $0x50] sm:$0xff]
        %v763 = vld [vmem:[%s751 + $0x58] sm:$0xff]
        %v764 = vld [vmem:[%s751 + $0x60] sm:$0xff]
        %v765 = vld [vmem:[%s751 + $0x68] sm:$0xff]
        %v766 = vld [vmem:[%s751 + $0x70] sm:$0xff]
        %v767 = vld [vmem:[%s751 + $0x78] sm:$0xff]
        %v768 = vld [vmem:[%s751 + $0x80] sm:$0xff]
        %v769 = vld [vmem:[%s751 + $0x88] sm:$0xff]
        %v770 = vld [vmem:[%s751 + $0x90] sm:$0xff]
        %v771 = vld [vmem:[%s751 + $0x98] sm:$0xff]
        %v772 = vld [vmem:[%s751 + $0xa0] sm:$0xff]
        %v773 = vld [vmem:[%s751 + $0xa8] sm:$0xff]
        %v774 = vld [vmem:[%s751 + $0xb0] sm:$0xff]
        %v775 = vld [vmem:[%s751 + $0xb8] sm:$0xff]
        %v776 = vld [vmem:[%s751 + $0xc0] sm:$0xff]
        %v777 = vld [vmem:[%s751 + $0xc8] sm:$0xff]
        %v778 = vld [vmem:[%s751 + $0xd0] sm:$0xff]
        %v779 = vld [vmem:[%s751 + $0xd8] sm:$0xff]
        %v780 = vld [vmem:[%s751 + $0xe0] sm:$0xff]
        %v781 = vld [vmem:[%s751 + $0xe8] sm:$0xff]
        %v782 = vld [vmem:[%s751 + $0xf0] sm:$0xff]
        %v783 = vld [vmem:[%s751 + $0xf8] sm:$0xff]
        %v784 = vpack.c.bf16 %v753, %v752
        %v785 = vpack.c.bf16 %v755, %v754
        %v786 = vpack.c.bf16 %v757, %v756
        %v787 = vpack.c.bf16 %v759, %v758
        %v788 = vpack.c.bf16 %v761, %v760
        %v789 = vpack.c.bf16 %v763, %v762
        %v790 = vpack.c.bf16 %v765, %v764
        %v791 = vpack.c.bf16 %v767, %v766
        %v792 = vpack.c.bf16 %v769, %v768
        %v793 = vpack.c.bf16 %v771, %v770
        %v794 = vpack.c.bf16 %v773, %v772
        %v795 = vpack.c.bf16 %v775, %v774
        %v796 = vpack.c.bf16 %v777, %v776
        %v797 = vpack.c.bf16 %v779, %v778
        %v798 = vpack.c.bf16 %v781, %v780
        %v799 = vpack.c.bf16 %v783, %v782
        %s800 = scalar_lea.vmem [#allocation5], 8
        %v801 = vld [vmem:[%s800] sm:$0xf]
        %v803 = vsel %vm324, %v784, 0
        %v806 = vsel %vm324, %v785, 0
        %v809 = vsel %vm324, %v786, 0
        %v812 = vsel %vm324, %v787, 0
        %v815 = vsel %vm324, %v788, 0
        %v818 = vsel %vm324, %v789, 0
        %v821 = vsel %vm324, %v790, 0
        %v824 = vsel %vm324, %v791, 0
        %v827 = vsel %vm324, %v792, 0
        %v830 = vsel %vm324, %v793, 0
        %v833 = vsel %vm324, %v794, 0
        %v836 = vsel %vm324, %v795, 0
        %v839 = vsel %vm324, %v796, 0
        %v842 = vsel %vm324, %v797, 0
        %v845 = vsel %vm324, %v798, 0
        %v848 = vsel %vm324, %v799, 0
        %v851 = vsel %vm373, %v801, 0
        %853 = vmatprep.subr.bf16.mxu0 0
        %854 = vmatpush1.bf16.msra.mxu0 %v851
        %855 = vmatprep.subr.bf16.mxu0 0
        %856 = vmatpush1.bf16.msra.mxu0 0
        %857 = vmatprep.subr.bf16.mxu0 0
        %858 = vmatpush1.bf16.msra.mxu0 0
        %859 = vmatprep.subr.bf16.mxu0 0
        %860 = vmatpush1.bf16.msra.mxu0 0
        %861 = vmatprep.subr.bf16.mxu0 0
        %862 = vmatpush1.bf16.msra.mxu0 0
        %863 = vmatprep.subr.bf16.mxu0 0
        %864 = vmatpush1.bf16.msra.mxu0 0
        %865 = vmatprep.subr.bf16.mxu0 0
        %866 = vmatpush1.bf16.msra.mxu0 0
        %867 = vmatprep.subr.bf16.mxu0 0
        %868 = vmatpush1.bf16.msra.mxu0 0
        %869 = vmatprep.subr.bf16.mxu0 0
        %870 = vmatpush1.bf16.msra.mxu0 0
        %871 = vmatprep.subr.bf16.mxu0 0
        %872 = vmatpush1.bf16.msra.mxu0 0
        %873 = vmatprep.subr.bf16.mxu0 0
        %874 = vmatpush1.bf16.msra.mxu0 0
        %875 = vmatprep.subr.bf16.mxu0 0
        %876 = vmatpush1.bf16.msra.mxu0 0
        %877 = vmatprep.subr.bf16.mxu0 0
        %878 = vmatpush1.bf16.msra.mxu0 0
        %879 = vmatprep.subr.bf16.mxu0 0
        %880 = vmatpush1.bf16.msra.mxu0 0
        %881 = vmatprep.subr.bf16.mxu0 0
        %882 = vmatpush1.bf16.msra.mxu0 0
        %883 = vmatprep.subr.bf16.mxu0 0
        %884 = vmatpush1.bf16.msra.mxu0 0
        %885 = vmatprep.mubr.bf16.mxu0 0
        %886 = vmatmul.mubr.bf16.gmra.mrb[0].mxu0 %v803
        %v887 = vpop.f32.mrb[0].mxu0
        %v888 = vadd.f32 0.0, %v887
        %v889 = vpop.f32.mrb[0].mxu0
        %v890 = vpop.f32.mrb[0].mxu0
        %v891 = vadd.f32 0.0, %v890
        %v892 = vpop.f32.mrb[0].mxu0
        %893 = vmatprep.mubr.bf16.mxu0 0
        %894 = vmatmul.mubr.bf16.gmra.mrb[0].mxu0 %v806
        %v895 = vpop.f32.mrb[0].mxu0
        %v896 = vadd.f32 0.0, %v895
        %v897 = vpop.f32.mrb[0].mxu0
        %v898 = vpop.f32.mrb[0].mxu0
        %v899 = vadd.f32 0.0, %v898
        %v900 = vpop.f32.mrb[0].mxu0
        %901 = vmatprep.mubr.bf16.mxu0 0
        %902 = vmatmul.mubr.bf16.gmra.mrb[0].mxu0 %v809
        %v903 = vpop.f32.mrb[0].mxu0
        %v904 = vadd.f32 0.0, %v903
        %v905 = vpop.f32.mrb[0].mxu0
        %v906 = vpop.f32.mrb[0].mxu0
        %v907 = vadd.f32 0.0, %v906
        %v908 = vpop.f32.mrb[0].mxu0
        %909 = vmatprep.mubr.bf16.mxu0 0
        %910 = vmatmul.mubr.bf16.gmra.mrb[0].mxu0 %v812
        %v911 = vpop.f32.mrb[0].mxu0
        %v912 = vadd.f32 0.0, %v911
        %v913 = vpop.f32.mrb[0].mxu0
        %v914 = vpop.f32.mrb[0].mxu0
        %v915 = vadd.f32 0.0, %v914
        %v916 = vpop.f32.mrb[0].mxu0
        %917 = vmatprep.mubr.bf16.mxu0 0
        %918 = vmatmul.mubr.bf16.gmra.mrb[0].mxu0 %v815
        %v919 = vpop.f32.mrb[0].mxu0
        %v920 = vadd.f32 0.0, %v919
        %v921 = vpop.f32.mrb[0].mxu0
        %v922 = vpop.f32.mrb[0].mxu0
        %v923 = vadd.f32 0.0, %v922
        %v924 = vpop.f32.mrb[0].mxu0
        %925 = vmatprep.mubr.bf16.mxu0 0
        %926 = vmatmul.mubr.bf16.gmra.mrb[0].mxu0 %v818
        %v927 = vpop.f32.mrb[0].mxu0
        %v928 = vadd.f32 0.0, %v927
        %v929 = vpop.f32.mrb[0].mxu0
        %v930 = vpop.f32.mrb[0].mxu0
        %v931 = vadd.f32 0.0, %v930
        %v932 = vpop.f32.mrb[0].mxu0
        %933 = vmatprep.mubr.bf16.mxu0 0
        %934 = vmatmul.mubr.bf16.gmra.mrb[0].mxu0 %v821
        %v935 = vpop.f32.mrb[0].mxu0
        %v936 = vadd.f32 0.0, %v935
        %v937 = vpop.f32.mrb[0].mxu0
        %v938 = vpop.f32.mrb[0].mxu0
        %v939 = vadd.f32 0.0, %v938
        %v940 = vpop.f32.mrb[0].mxu0
        %941 = vmatprep.mubr.bf16.mxu0 0
        %942 = vmatmul.mubr.bf16.gmra.mrb[0].mxu0 %v824
        %v943 = vpop.f32.mrb[0].mxu0
        %v944 = vadd.f32 0.0, %v943
        %v945 = vpop.f32.mrb[0].mxu0
        %v946 = vpop.f32.mrb[0].mxu0
        %v947 = vadd.f32 0.0, %v946
        %v948 = vpop.f32.mrb[0].mxu0
        %949 = vmatprep.mubr.bf16.mxu0 0
        %950 = vmatmul.mubr.bf16.gmra.mrb[0].mxu0 %v827
        %v951 = vpop.f32.mrb[0].mxu0
        %v952 = vadd.f32 0.0, %v951
        %v953 = vpop.f32.mrb[0].mxu0
        %v954 = vpop.f32.mrb[0].mxu0
        %v955 = vadd.f32 0.0, %v954
        %v956 = vpop.f32.mrb[0].mxu0
        %957 = vmatprep.mubr.bf16.mxu0 0
        %958 = vmatmul.mubr.bf16.gmra.mrb[0].mxu0 %v830
        %v959 = vpop.f32.mrb[0].mxu0
        %v960 = vadd.f32 0.0, %v959
        %v961 = vpop.f32.mrb[0].mxu0
        %v962 = vpop.f32.mrb[0].mxu0
        %v963 = vadd.f32 0.0, %v962
        %v964 = vpop.f32.mrb[0].mxu0
        %965 = vmatprep.mubr.bf16.mxu0 0
        %966 = vmatmul.mubr.bf16.gmra.mrb[0].mxu0 %v833
        %v967 = vpop.f32.mrb[0].mxu0
        %v968 = vadd.f32 0.0, %v967
        %v969 = vpop.f32.mrb[0].mxu0
        %v970 = vpop.f32.mrb[0].mxu0
        %v971 = vadd.f32 0.0, %v970
        %v972 = vpop.f32.mrb[0].mxu0
        %973 = vmatprep.mubr.bf16.mxu0 0
        %974 = vmatmul.mubr.bf16.gmra.mrb[0].mxu0 %v836
        %v975 = vpop.f32.mrb[0].mxu0
        %v976 = vadd.f32 0.0, %v975
        %v977 = vpop.f32.mrb[0].mxu0
        %v978 = vpop.f32.mrb[0].mxu0
        %v979 = vadd.f32 0.0, %v978
        %v980 = vpop.f32.mrb[0].mxu0
        %981 = vmatprep.mubr.bf16.mxu0 0
        %982 = vmatmul.mubr.bf16.gmra.mrb[0].mxu0 %v839
        %v983 = vpop.f32.mrb[0].mxu0
        %v984 = vadd.f32 0.0, %v983
        %v985 = vpop.f32.mrb[0].mxu0
        %v986 = vpop.f32.mrb[0].mxu0
        %v987 = vadd.f32 0.0, %v986
        %v988 = vpop.f32.mrb[0].mxu0
        %989 = vmatprep.mubr.bf16.mxu0 0
        %990 = vmatmul.mubr.bf16.gmra.mrb[0].mxu0 %v842
        %v991 = vpop.f32.mrb[0].mxu0
        %v992 = vadd.f32 0.0, %v991
        %v993 = vpop.f32.mrb[0].mxu0
        %v994 = vpop.f32.mrb[0].mxu0
        %v995 = vadd.f32 0.0, %v994
        %v996 = vpop.f32.mrb[0].mxu0
        %997 = vmatprep.mubr.bf16.mxu0 0
        %998 = vmatmul.mubr.bf16.gmra.mrb[0].mxu0 %v845
        %v999 = vpop.f32.mrb[0].mxu0
        %v1000 = vadd.f32 0.0, %v999
        %v1001 = vpop.f32.mrb[0].mxu0
        %v1002 = vpop.f32.mrb[0].mxu0
        %v1003 = vadd.f32 0.0, %v1002
        %v1004 = vpop.f32.mrb[0].mxu0
        %1005 = vmatprep.mubr.bf16.mxu0 0
        %1006 = vmatmul.mubr.bf16.gmra.mrb[0].mxu0 %v848
        %v1007 = vpop.f32.mrb[0].mxu0
        %v1008 = vadd.f32 0.0, %v1007
        %v1009 = vpop.f32.mrb[0].mxu0
        %v1010 = vpop.f32.mrb[0].mxu0
        %v1011 = vadd.f32 0.0, %v1010
        %v1012 = vpop.f32.mrb[0].mxu0
        %1013 = vdwg.mxu0
        %v1014 = vadd.f32 %v624, %v888
        %v1015 = vadd.f32 %v627, %v891
        %v1016 = vadd.f32 %v632, %v896
        %v1017 = vadd.f32 %v635, %v899
        %v1018 = vadd.f32 %v640, %v904
        %v1019 = vadd.f32 %v643, %v907
        %v1020 = vadd.f32 %v648, %v912
        %v1021 = vadd.f32 %v651, %v915
        %v1022 = vadd.f32 %v656, %v920
        %v1023 = vadd.f32 %v659, %v923
        %v1024 = vadd.f32 %v664, %v928
        %v1025 = vadd.f32 %v667, %v931
        %v1026 = vadd.f32 %v672, %v936
        %v1027 = vadd.f32 %v675, %v939
        %v1028 = vadd.f32 %v680, %v944
        %v1029 = vadd.f32 %v683, %v947
        %v1030 = vadd.f32 %v688, %v952
        %v1031 = vadd.f32 %v691, %v955
        %v1032 = vadd.f32 %v696, %v960
        %v1033 = vadd.f32 %v699, %v963
        %v1034 = vadd.f32 %v704, %v968
        %v1035 = vadd.f32 %v707, %v971
        %v1036 = vadd.f32 %v712, %v976
        %v1037 = vadd.f32 %v715, %v979
        %v1038 = vadd.f32 %v720, %v984
        %v1039 = vadd.f32 %v723, %v987
        %v1040 = vadd.f32 %v728, %v992
        %v1041 = vadd.f32 %v731, %v995
        %v1042 = vadd.f32 %v736, %v1000
        %v1043 = vadd.f32 %v739, %v1003
        %v1044 = vadd.f32 %v744, %v1008
        %v1045 = vadd.f32 %v747, %v1011
        %s1046 = sadd.s32 %s221, 18
        %s1047 = scalar_lea.vmem [#allocation2], %s1046
        %v1048 = vld [vmem:[%s1047] sm:$0xff]
        %v1049 = vld [vmem:[%s1047 + $0x8] sm:$0xff]
        %v1050 = vld [vmem:[%s1047 + $0x10] sm:$0xff]
        %v1051 = vld [vmem:[%s1047 + $0x18] sm:$0xff]
        %v1052 = vld [vmem:[%s1047 + $0x20] sm:$0xff]
        %v1053 = vld [vmem:[%s1047 + $0x28] sm:$0xff]
        %v1054 = vld [vmem:[%s1047 + $0x30] sm:$0xff]
        %v1055 = vld [vmem:[%s1047 + $0x38] sm:$0xff]
        %v1056 = vld [vmem:[%s1047 + $0x40] sm:$0xff]
        %v1057 = vld [vmem:[%s1047 + $0x48] sm:$0xff]
        %v1058 = vld [vmem:[%s1047 + $0x50] sm:$0xff]
        %v1059 = vld [vmem:[%s1047 + $0x58] sm:$0xff]
        %v1060 = vld [vmem:[%s1047 + $0x60] sm:$0xff]
        %v1061 = vld [vmem:[%s1047 + $0x68] sm:$0xff]
        %v1062 = vld [vmem:[%s1047 + $0x70] sm:$0xff]
        %v1063 = vld [vmem:[%s1047 + $0x78] sm:$0xff]
        %v1064 = vld [vmem:[%s1047 + $0x80] sm:$0xff]
        %v1065 = vld [vmem:[%s1047 + $0x88] sm:$0xff]
        %v1066 = vld [vmem:[%s1047 + $0x90] sm:$0xff]
        %v1067 = vld [vmem:[%s1047 + $0x98] sm:$0xff]
        %v1068 = vld [vmem:[%s1047 + $0xa0] sm:$0xff]
        %v1069 = vld [vmem:[%s1047 + $0xa8] sm:$0xff]
        %v1070 = vld [vmem:[%s1047 + $0xb0] sm:$0xff]
        %v1071 = vld [vmem:[%s1047 + $0xb8] sm:$0xff]
        %v1072 = vld [vmem:[%s1047 + $0xc0] sm:$0xff]
        %v1073 = vld [vmem:[%s1047 + $0xc8] sm:$0xff]
        %v1074 = vld [vmem:[%s1047 + $0xd0] sm:$0xff]
        %v1075 = vld [vmem:[%s1047 + $0xd8] sm:$0xff]
        %v1076 = vld [vmem:[%s1047 + $0xe0] sm:$0xff]
        %v1077 = vld [vmem:[%s1047 + $0xe8] sm:$0xff]
        %v1078 = vld [vmem:[%s1047 + $0xf0] sm:$0xff]
        %v1079 = vld [vmem:[%s1047 + $0xf8] sm:$0xff]
        %v1080 = vpack.c.bf16 %v1049, %v1048
        %v1081 = vpack.c.bf16 %v1051, %v1050
        %v1082 = vpack.c.bf16 %v1053, %v1052
        %v1083 = vpack.c.bf16 %v1055, %v1054
        %v1084 = vpack.c.bf16 %v1057, %v1056
        %v1085 = vpack.c.bf16 %v1059, %v1058
        %v1086 = vpack.c.bf16 %v1061, %v1060
        %v1087 = vpack.c.bf16 %v1063, %v1062
        %v1088 = vpack.c.bf16 %v1065, %v1064
        %v1089 = vpack.c.bf16 %v1067, %v1066
        %v1090 = vpack.c.bf16 %v1069, %v1068
        %v1091 = vpack.c.bf16 %v1071, %v1070
        %v1092 = vpack.c.bf16 %v1073, %v1072
        %v1093 = vpack.c.bf16 %v1075, %v1074
        %v1094 = vpack.c.bf16 %v1077, %v1076
        %v1095 = vpack.c.bf16 %v1079, %v1078
        %s1096 = scalar_lea.vmem [#allocation5], 12
        %v1097 = vld [vmem:[%s1096] sm:$0xf]
        %v1099 = vsel %vm324, %v1080, 0
        %v1102 = vsel %vm324, %v1081, 0
        %v1105 = vsel %vm324, %v1082, 0
        %v1108 = vsel %vm324, %v1083, 0
        %v1111 = vsel %vm324, %v1084, 0
        %v1114 = vsel %vm324, %v1085, 0
        %v1117 = vsel %vm324, %v1086, 0
        %v1120 = vsel %vm324, %v1087, 0
        %v1123 = vsel %vm324, %v1088, 0
        %v1126 = vsel %vm324, %v1089, 0
        %v1129 = vsel %vm324, %v1090, 0
        %v1132 = vsel %vm324, %v1091, 0
        %v1135 = vsel %vm324, %v1092, 0
        %v1138 = vsel %vm324, %v1093, 0
        %v1141 = vsel %vm324, %v1094, 0
        %v1144 = vsel %vm324, %v1095, 0
        %v1147 = vsel %vm373, %v1097, 0
        %1149 = vmatprep.subr.bf16.mxu0 0
        %1150 = vmatpush1.bf16.msra.mxu0 %v1147
        %1151 = vmatprep.subr.bf16.mxu0 0
        %1152 = vmatpush1.bf16.msra.mxu0 0
        %1153 = vmatprep.subr.bf16.mxu0 0
        %1154 = vmatpush1.bf16.msra.mxu0 0
        %1155 = vmatprep.subr.bf16.mxu0 0
        %1156 = vmatpush1.bf16.msra.mxu0 0
        %1157 = vmatprep.subr.bf16.mxu0 0
        %1158 = vmatpush1.bf16.msra.mxu0 0
        %1159 = vmatprep.subr.bf16.mxu0 0
        %1160 = vmatpush1.bf16.msra.mxu0 0
        %1161 = vmatprep.subr.bf16.mxu0 0
        %1162 = vmatpush1.bf16.msra.mxu0 0
        %1163 = vmatprep.subr.bf16.mxu0 0
        %1164 = vmatpush1.bf16.msra.mxu0 0
        %1165 = vmatprep.subr.bf16.mxu0 0
        %1166 = vmatpush1.bf16.msra.mxu0 0
        %1167 = vmatprep.subr.bf16.mxu0 0
        %1168 = vmatpush1.bf16.msra.mxu0 0
        %1169 = vmatprep.subr.bf16.mxu0 0
        %1170 = vmatpush1.bf16.msra.mxu0 0
        %1171 = vmatprep.subr.bf16.mxu0 0
        %1172 = vmatpush1.bf16.msra.mxu0 0
        %1173 = vmatprep.subr.bf16.mxu0 0
        %1174 = vmatpush1.bf16.msra.mxu0 0
        %1175 = vmatprep.subr.bf16.mxu0 0
        %1176 = vmatpush1.bf16.msra.mxu0 0
        %1177 = vmatprep.subr.bf16.mxu0 0
        %1178 = vmatpush1.bf16.msra.mxu0 0
        %1179 = vmatprep.subr.bf16.mxu0 0
        %1180 = vmatpush1.bf16.msra.mxu0 0
        %1181 = vmatprep.mubr.bf16.mxu0 0
        %1182 = vmatmul.mubr.bf16.gmra.mrb[0].mxu0 %v1099
        %v1183 = vpop.f32.mrb[0].mxu0
        %v1184 = vadd.f32 0.0, %v1183
        %v1185 = vpop.f32.mrb[0].mxu0
        %v1186 = vpop.f32.mrb[0].mxu0
        %v1187 = vadd.f32 0.0, %v1186
        %v1188 = vpop.f32.mrb[0].mxu0
        %1189 = vmatprep.mubr.bf16.mxu0 0
        %1190 = vmatmul.mubr.bf16.gmra.mrb[0].mxu0 %v1102
        %v1191 = vpop.f32.mrb[0].mxu0
        %v1192 = vadd.f32 0.0, %v1191
        %v1193 = vpop.f32.mrb[0].mxu0
        %v1194 = vpop.f32.mrb[0].mxu0
        %v1195 = vadd.f32 0.0, %v1194
        %v1196 = vpop.f32.mrb[0].mxu0
        %1197 = vmatprep.mubr.bf16.mxu0 0
        %1198 = vmatmul.mubr.bf16.gmra.mrb[0].mxu0 %v1105
        %v1199 = vpop.f32.mrb[0].mxu0
        %v1200 = vadd.f32 0.0, %v1199
        %v1201 = vpop.f32.mrb[0].mxu0
        %v1202 = vpop.f32.mrb[0].mxu0
        %v1203 = vadd.f32 0.0, %v1202
        %v1204 = vpop.f32.mrb[0].mxu0
        %1205 = vmatprep.mubr.bf16.mxu0 0
        %1206 = vmatmul.mubr.bf16.gmra.mrb[0].mxu0 %v1108
        %v1207 = vpop.f32.mrb[0].mxu0
        %v1208 = vadd.f32 0.0, %v1207
        %v1209 = vpop.f32.mrb[0].mxu0
        %v1210 = vpop.f32.mrb[0].mxu0
        %v1211 = vadd.f32 0.0, %v1210
        %v1212 = vpop.f32.mrb[0].mxu0
        %1213 = vmatprep.mubr.bf16.mxu0 0
        %1214 = vmatmul.mubr.bf16.gmra.mrb[0].mxu0 %v1111
        %v1215 = vpop.f32.mrb[0].mxu0
        %v1216 = vadd.f32 0.0, %v1215
        %v1217 = vpop.f32.mrb[0].mxu0
        %v1218 = vpop.f32.mrb[0].mxu0
        %v1219 = vadd.f32 0.0, %v1218
        %v1220 = vpop.f32.mrb[0].mxu0
        %1221 = vmatprep.mubr.bf16.mxu0 0
        %1222 = vmatmul.mubr.bf16.gmra.mrb[0].mxu0 %v1114
        %v1223 = vpop.f32.mrb[0].mxu0
        %v1224 = vadd.f32 0.0, %v1223
        %v1225 = vpop.f32.mrb[0].mxu0
        %v1226 = vpop.f32.mrb[0].mxu0
        %v1227 = vadd.f32 0.0, %v1226
        %v1228 = vpop.f32.mrb[0].mxu0
        %1229 = vmatprep.mubr.bf16.mxu0 0
        %1230 = vmatmul.mubr.bf16.gmra.mrb[0].mxu0 %v1117
        %v1231 = vpop.f32.mrb[0].mxu0
        %v1232 = vadd.f32 0.0, %v1231
        %v1233 = vpop.f32.mrb[0].mxu0
        %v1234 = vpop.f32.mrb[0].mxu0
        %v1235 = vadd.f32 0.0, %v1234
        %v1236 = vpop.f32.mrb[0].mxu0
        %1237 = vmatprep.mubr.bf16.mxu0 0
        %1238 = vmatmul.mubr.bf16.gmra.mrb[0].mxu0 %v1120
        %v1239 = vpop.f32.mrb[0].mxu0
        %v1240 = vadd.f32 0.0, %v1239
        %v1241 = vpop.f32.mrb[0].mxu0
        %v1242 = vpop.f32.mrb[0].mxu0
        %v1243 = vadd.f32 0.0, %v1242
        %v1244 = vpop.f32.mrb[0].mxu0
        %1245 = vmatprep.mubr.bf16.mxu0 0
        %1246 = vmatmul.mubr.bf16.gmra.mrb[0].mxu0 %v1123
        %v1247 = vpop.f32.mrb[0].mxu0
        %v1248 = vadd.f32 0.0, %v1247
        %v1249 = vpop.f32.mrb[0].mxu0
        %v1250 = vpop.f32.mrb[0].mxu0
        %v1251 = vadd.f32 0.0, %v1250
        %v1252 = vpop.f32.mrb[0].mxu0
        %1253 = vmatprep.mubr.bf16.mxu0 0
        %1254 = vmatmul.mubr.bf16.gmra.mrb[0].mxu0 %v1126
        %v1255 = vpop.f32.mrb[0].mxu0
        %v1256 = vadd.f32 0.0, %v1255
        %v1257 = vpop.f32.mrb[0].mxu0
        %v1258 = vpop.f32.mrb[0].mxu0
        %v1259 = vadd.f32 0.0, %v1258
        %v1260 = vpop.f32.mrb[0].mxu0
        %1261 = vmatprep.mubr.bf16.mxu0 0
        %1262 = vmatmul.mubr.bf16.gmra.mrb[0].mxu0 %v1129
        %v1263 = vpop.f32.mrb[0].mxu0
        %v1264 = vadd.f32 0.0, %v1263
        %v1265 = vpop.f32.mrb[0].mxu0
        %v1266 = vpop.f32.mrb[0].mxu0
        %v1267 = vadd.f32 0.0, %v1266
        %v1268 = vpop.f32.mrb[0].mxu0
        %1269 = vmatprep.mubr.bf16.mxu0 0
        %1270 = vmatmul.mubr.bf16.gmra.mrb[0].mxu0 %v1132
        %v1271 = vpop.f32.mrb[0].mxu0
        %v1272 = vadd.f32 0.0, %v1271
        %v1273 = vpop.f32.mrb[0].mxu0
        %v1274 = vpop.f32.mrb[0].mxu0
        %v1275 = vadd.f32 0.0, %v1274
        %v1276 = vpop.f32.mrb[0].mxu0
        %1277 = vmatprep.mubr.bf16.mxu0 0
        %1278 = vmatmul.mubr.bf16.gmra.mrb[0].mxu0 %v1135
        %v1279 = vpop.f32.mrb[0].mxu0
        %v1280 = vadd.f32 0.0, %v1279
        %v1281 = vpop.f32.mrb[0].mxu0
        %v1282 = vpop.f32.mrb[0].mxu0
        %v1283 = vadd.f32 0.0, %v1282
        %v1284 = vpop.f32.mrb[0].mxu0
        %1285 = vmatprep.mubr.bf16.mxu0 0
        %1286 = vmatmul.mubr.bf16.gmra.mrb[0].mxu0 %v1138
        %v1287 = vpop.f32.mrb[0].mxu0
        %v1288 = vadd.f32 0.0, %v1287
        %v1289 = vpop.f32.mrb[0].mxu0
        %v1290 = vpop.f32.mrb[0].mxu0
        %v1291 = vadd.f32 0.0, %v1290
        %v1292 = vpop.f32.mrb[0].mxu0
        %1293 = vmatprep.mubr.bf16.mxu0 0
        %1294 = vmatmul.mubr.bf16.gmra.mrb[0].mxu0 %v1141
        %v1295 = vpop.f32.mrb[0].mxu0
        %v1296 = vadd.f32 0.0, %v1295
        %v1297 = vpop.f32.mrb[0].mxu0
        %v1298 = vpop.f32.mrb[0].mxu0
        %v1299 = vadd.f32 0.0, %v1298
        %v1300 = vpop.f32.mrb[0].mxu0
        %1301 = vmatprep.mubr.bf16.mxu0 0
        %1302 = vmatmul.mubr.bf16.gmra.mrb[0].mxu0 %v1144
        %v1303 = vpop.f32.mrb[0].mxu0
        %v1304 = vadd.f32 0.0, %v1303
        %v1305 = vpop.f32.mrb[0].mxu0
        %v1306 = vpop.f32.mrb[0].mxu0
        %v1307 = vadd.f32 0.0, %v1306
        %v1308 = vpop.f32.mrb[0].mxu0
        %1309 = vdwg.mxu0
        %v1310 = vadd.f32 %v1014, %v1184
        %v1311 = vadd.f32 %v1015, %v1187
        %v1312 = vadd.f32 %v1016, %v1192
        %v1313 = vadd.f32 %v1017, %v1195
        %v1314 = vadd.f32 %v1018, %v1200
        %v1315 = vadd.f32 %v1019, %v1203
        %v1316 = vadd.f32 %v1020, %v1208
        %v1317 = vadd.f32 %v1021, %v1211
        %v1318 = vadd.f32 %v1022, %v1216
        %v1319 = vadd.f32 %v1023, %v1219
        %v1320 = vadd.f32 %v1024, %v1224
        %v1321 = vadd.f32 %v1025, %v1227
        %v1322 = vadd.f32 %v1026, %v1232
        %v1323 = vadd.f32 %v1027, %v1235
        %v1324 = vadd.f32 %v1028, %v1240
        %v1325 = vadd.f32 %v1029, %v1243
        %v1326 = vadd.f32 %v1030, %v1248
        %v1327 = vadd.f32 %v1031, %v1251
        %v1328 = vadd.f32 %v1032, %v1256
        %v1329 = vadd.f32 %v1033, %v1259
        %v1330 = vadd.f32 %v1034, %v1264
        %v1331 = vadd.f32 %v1035, %v1267
        %v1332 = vadd.f32 %v1036, %v1272
        %v1333 = vadd.f32 %v1037, %v1275
        %v1334 = vadd.f32 %v1038, %v1280
        %v1335 = vadd.f32 %v1039, %v1283
        %v1336 = vadd.f32 %v1040, %v1288
        %v1337 = vadd.f32 %v1041, %v1291
        %v1338 = vadd.f32 %v1042, %v1296
        %v1339 = vadd.f32 %v1043, %v1299
        %v1340 = vadd.f32 %v1044, %v1304
        %v1341 = vadd.f32 %v1045, %v1307
        %s1342 = sadd.s32 %s221, 19
        %s1343 = scalar_lea.vmem [#allocation2], %s1342
        %v1344 = vld [vmem:[%s1343] sm:$0xff]
        %v1345 = vld [vmem:[%s1343 + $0x8] sm:$0xff]
        %v1346 = vld [vmem:[%s1343 + $0x10] sm:$0xff]
        %v1347 = vld [vmem:[%s1343 + $0x18] sm:$0xff]
        %v1348 = vld [vmem:[%s1343 + $0x20] sm:$0xff]
        %v1349 = vld [vmem:[%s1343 + $0x28] sm:$0xff]
        %v1350 = vld [vmem:[%s1343 + $0x30] sm:$0xff]
        %v1351 = vld [vmem:[%s1343 + $0x38] sm:$0xff]
        %v1352 = vld [vmem:[%s1343 + $0x40] sm:$0xff]
        %v1353 = vld [vmem:[%s1343 + $0x48] sm:$0xff]
        %v1354 = vld [vmem:[%s1343 + $0x50] sm:$0xff]
        %v1355 = vld [vmem:[%s1343 + $0x58] sm:$0xff]
        %v1356 = vld [vmem:[%s1343 + $0x60] sm:$0xff]
        %v1357 = vld [vmem:[%s1343 + $0x68] sm:$0xff]
        %v1358 = vld [vmem:[%s1343 + $0x70] sm:$0xff]
        %v1359 = vld [vmem:[%s1343 + $0x78] sm:$0xff]
        %v1360 = vld [vmem:[%s1343 + $0x80] sm:$0xff]
        %v1361 = vld [vmem:[%s1343 + $0x88] sm:$0xff]
        %v1362 = vld [vmem:[%s1343 + $0x90] sm:$0xff]
        %v1363 = vld [vmem:[%s1343 + $0x98] sm:$0xff]
        %v1364 = vld [vmem:[%s1343 + $0xa0] sm:$0xff]
        %v1365 = vld [vmem:[%s1343 + $0xa8] sm:$0xff]
        %v1366 = vld [vmem:[%s1343 + $0xb0] sm:$0xff]
        %v1367 = vld [vmem:[%s1343 + $0xb8] sm:$0xff]
        %v1368 = vld [vmem:[%s1343 + $0xc0] sm:$0xff]
        %v1369 = vld [vmem:[%s1343 + $0xc8] sm:$0xff]
        %v1370 = vld [vmem:[%s1343 + $0xd0] sm:$0xff]
        %v1371 = vld [vmem:[%s1343 + $0xd8] sm:$0xff]
        %v1372 = vld [vmem:[%s1343 + $0xe0] sm:$0xff]
        %v1373 = vld [vmem:[%s1343 + $0xe8] sm:$0xff]
        %v1374 = vld [vmem:[%s1343 + $0xf0] sm:$0xff]
        %v1375 = vld [vmem:[%s1343 + $0xf8] sm:$0xff]
        %v1376 = vpack.c.bf16 %v1345, %v1344
        %v1377 = vpack.c.bf16 %v1347, %v1346
        %v1378 = vpack.c.bf16 %v1349, %v1348
        %v1379 = vpack.c.bf16 %v1351, %v1350
        %v1380 = vpack.c.bf16 %v1353, %v1352
        %v1381 = vpack.c.bf16 %v1355, %v1354
        %v1382 = vpack.c.bf16 %v1357, %v1356
        %v1383 = vpack.c.bf16 %v1359, %v1358
        %v1384 = vpack.c.bf16 %v1361, %v1360
        %v1385 = vpack.c.bf16 %v1363, %v1362
        %v1386 = vpack.c.bf16 %v1365, %v1364
        %v1387 = vpack.c.bf16 %v1367, %v1366
        %v1388 = vpack.c.bf16 %v1369, %v1368
        %v1389 = vpack.c.bf16 %v1371, %v1370
        %v1390 = vpack.c.bf16 %v1373, %v1372
        %v1391 = vpack.c.bf16 %v1375, %v1374
        %s1392 = scalar_lea.vmem [#allocation5], 16
        %v1393 = vld [vmem:[%s1392] sm:$0xf]
        %v1395 = vsel %vm324, %v1376, 0
        %v1398 = vsel %vm324, %v1377, 0
        %v1401 = vsel %vm324, %v1378, 0
        %v1404 = vsel %vm324, %v1379, 0
        %v1407 = vsel %vm324, %v1380, 0
        %v1410 = vsel %vm324, %v1381, 0
        %v1413 = vsel %vm324, %v1382, 0
        %v1416 = vsel %vm324, %v1383, 0
        %v1419 = vsel %vm324, %v1384, 0
        %v1422 = vsel %vm324, %v1385, 0
        %v1425 = vsel %vm324, %v1386, 0
        %v1428 = vsel %vm324, %v1387, 0
        %v1431 = vsel %vm324, %v1388, 0
        %v1434 = vsel %vm324, %v1389, 0
        %v1437 = vsel %vm324, %v1390, 0
        %v1440 = vsel %vm324, %v1391, 0
        %v1443 = vsel %vm373, %v1393, 0
        %1445 = vmatprep.subr.bf16.mxu0 0
        %1446 = vmatpush1.bf16.msra.mxu0 %v1443
        %1447 = vmatprep.subr.bf16.mxu0 0
        %1448 = vmatpush1.bf16.msra.mxu0 0
        %1449 = vmatprep.subr.bf16.mxu0 0
        %1450 = vmatpush1.bf16.msra.mxu0 0
        %1451 = vmatprep.subr.bf16.mxu0 0
        %1452 = vmatpush1.bf16.msra.mxu0 0
        %1453 = vmatprep.subr.bf16.mxu0 0
        %1454 = vmatpush1.bf16.msra.mxu0 0
        %1455 = vmatprep.subr.bf16.mxu0 0
        %1456 = vmatpush1.bf16.msra.mxu0 0
        %1457 = vmatprep.subr.bf16.mxu0 0
        %1458 = vmatpush1.bf16.msra.mxu0 0
        %1459 = vmatprep.subr.bf16.mxu0 0
        %1460 = vmatpush1.bf16.msra.mxu0 0
        %1461 = vmatprep.subr.bf16.mxu0 0
        %1462 = vmatpush1.bf16.msra.mxu0 0
        %1463 = vmatprep.subr.bf16.mxu0 0
        %1464 = vmatpush1.bf16.msra.mxu0 0
        %1465 = vmatprep.subr.bf16.mxu0 0
        %1466 = vmatpush1.bf16.msra.mxu0 0
        %1467 = vmatprep.subr.bf16.mxu0 0
        %1468 = vmatpush1.bf16.msra.mxu0 0
        %1469 = vmatprep.subr.bf16.mxu0 0
        %1470 = vmatpush1.bf16.msra.mxu0 0
        %1471 = vmatprep.subr.bf16.mxu0 0
        %1472 = vmatpush1.bf16.msra.mxu0 0
        %1473 = vmatprep.subr.bf16.mxu0 0
        %1474 = vmatpush1.bf16.msra.mxu0 0
        %1475 = vmatprep.subr.bf16.mxu0 0
        %1476 = vmatpush1.bf16.msra.mxu0 0
        %1477 = vmatprep.mubr.bf16.mxu0 0
        %1478 = vmatmul.mubr.bf16.gmra.mrb[0].mxu0 %v1395
        %v1479 = vpop.f32.mrb[0].mxu0
        %v1480 = vadd.f32 0.0, %v1479
        %v1481 = vpop.f32.mrb[0].mxu0
        %v1482 = vpop.f32.mrb[0].mxu0
        %v1483 = vadd.f32 0.0, %v1482
        %v1484 = vpop.f32.mrb[0].mxu0
        %1485 = vmatprep.mubr.bf16.mxu0 0
        %1486 = vmatmul.mubr.bf16.gmra.mrb[0].mxu0 %v1398
        %v1487 = vpop.f32.mrb[0].mxu0
        %v1488 = vadd.f32 0.0, %v1487
        %v1489 = vpop.f32.mrb[0].mxu0
        %v1490 = vpop.f32.mrb[0].mxu0
        %v1491 = vadd.f32 0.0, %v1490
        %v1492 = vpop.f32.mrb[0].mxu0
        %1493 = vmatprep.mubr.bf16.mxu0 0
        %1494 = vmatmul.mubr.bf16.gmra.mrb[0].mxu0 %v1401
        %v1495 = vpop.f32.mrb[0].mxu0
        %v1496 = vadd.f32 0.0, %v1495
        %v1497 = vpop.f32.mrb[0].mxu0
        %v1498 = vpop.f32.mrb[0].mxu0
        %v1499 = vadd.f32 0.0, %v1498
        %v1500 = vpop.f32.mrb[0].mxu0
        %1501 = vmatprep.mubr.bf16.mxu0 0
        %1502 = vmatmul.mubr.bf16.gmra.mrb[0].mxu0 %v1404
        %v1503 = vpop.f32.mrb[0].mxu0
        %v1504 = vadd.f32 0.0, %v1503
        %v1505 = vpop.f32.mrb[0].mxu0
        %v1506 = vpop.f32.mrb[0].mxu0
        %v1507 = vadd.f32 0.0, %v1506
        %v1508 = vpop.f32.mrb[0].mxu0
        %1509 = vmatprep.mubr.bf16.mxu0 0
        %1510 = vmatmul.mubr.bf16.gmra.mrb[0].mxu0 %v1407
        %v1511 = vpop.f32.mrb[0].mxu0
        %v1512 = vadd.f32 0.0, %v1511
        %v1513 = vpop.f32.mrb[0].mxu0
        %v1514 = vpop.f32.mrb[0].mxu0
        %v1515 = vadd.f32 0.0, %v1514
        %v1516 = vpop.f32.mrb[0].mxu0
        %1517 = vmatprep.mubr.bf16.mxu0 0
        %1518 = vmatmul.mubr.bf16.gmra.mrb[0].mxu0 %v1410
        %v1519 = vpop.f32.mrb[0].mxu0
        %v1520 = vadd.f32 0.0, %v1519
        %v1521 = vpop.f32.mrb[0].mxu0
        %v1522 = vpop.f32.mrb[0].mxu0
        %v1523 = vadd.f32 0.0, %v1522
        %v1524 = vpop.f32.mrb[0].mxu0
        %1525 = vmatprep.mubr.bf16.mxu0 0
        %1526 = vmatmul.mubr.bf16.gmra.mrb[0].mxu0 %v1413
        %v1527 = vpop.f32.mrb[0].mxu0
        %v1528 = vadd.f32 0.0, %v1527
        %v1529 = vpop.f32.mrb[0].mxu0
        %v1530 = vpop.f32.mrb[0].mxu0
        %v1531 = vadd.f32 0.0, %v1530
        %v1532 = vpop.f32.mrb[0].mxu0
        %1533 = vmatprep.mubr.bf16.mxu0 0
        %1534 = vmatmul.mubr.bf16.gmra.mrb[0].mxu0 %v1416
        %v1535 = vpop.f32.mrb[0].mxu0
        %v1536 = vadd.f32 0.0, %v1535
        %v1537 = vpop.f32.mrb[0].mxu0
        %v1538 = vpop.f32.mrb[0].mxu0
        %v1539 = vadd.f32 0.0, %v1538
        %v1540 = vpop.f32.mrb[0].mxu0
        %1541 = vmatprep.mubr.bf16.mxu0 0
        %1542 = vmatmul.mubr.bf16.gmra.mrb[0].mxu0 %v1419
        %v1543 = vpop.f32.mrb[0].mxu0
        %v1544 = vadd.f32 0.0, %v1543
        %v1545 = vpop.f32.mrb[0].mxu0
        %v1546 = vpop.f32.mrb[0].mxu0
        %v1547 = vadd.f32 0.0, %v1546
        %v1548 = vpop.f32.mrb[0].mxu0
        %1549 = vmatprep.mubr.bf16.mxu0 0
        %1550 = vmatmul.mubr.bf16.gmra.mrb[0].mxu0 %v1422
        %v1551 = vpop.f32.mrb[0].mxu0
        %v1552 = vadd.f32 0.0, %v1551
        %v1553 = vpop.f32.mrb[0].mxu0
        %v1554 = vpop.f32.mrb[0].mxu0
        %v1555 = vadd.f32 0.0, %v1554
        %v1556 = vpop.f32.mrb[0].mxu0
        %1557 = vmatprep.mubr.bf16.mxu0 0
        %1558 = vmatmul.mubr.bf16.gmra.mrb[0].mxu0 %v1425
        %v1559 = vpop.f32.mrb[0].mxu0
        %v1560 = vadd.f32 0.0, %v1559
        %v1561 = vpop.f32.mrb[0].mxu0
        %v1562 = vpop.f32.mrb[0].mxu0
        %v1563 = vadd.f32 0.0, %v1562
        %v1564 = vpop.f32.mrb[0].mxu0
        %1565 = vmatprep.mubr.bf16.mxu0 0
        %1566 = vmatmul.mubr.bf16.gmra.mrb[0].mxu0 %v1428
        %v1567 = vpop.f32.mrb[0].mxu0
        %v1568 = vadd.f32 0.0, %v1567
        %v1569 = vpop.f32.mrb[0].mxu0
        %v1570 = vpop.f32.mrb[0].mxu0
        %v1571 = vadd.f32 0.0, %v1570
        %v1572 = vpop.f32.mrb[0].mxu0
        %1573 = vmatprep.mubr.bf16.mxu0 0
        %1574 = vmatmul.mubr.bf16.gmra.mrb[0].mxu0 %v1431
        %v1575 = vpop.f32.mrb[0].mxu0
        %v1576 = vadd.f32 0.0, %v1575
        %v1577 = vpop.f32.mrb[0].mxu0
        %v1578 = vpop.f32.mrb[0].mxu0
        %v1579 = vadd.f32 0.0, %v1578
        %v1580 = vpop.f32.mrb[0].mxu0
        %1581 = vmatprep.mubr.bf16.mxu0 0
        %1582 = vmatmul.mubr.bf16.gmra.mrb[0].mxu0 %v1434
        %v1583 = vpop.f32.mrb[0].mxu0
        %v1584 = vadd.f32 0.0, %v1583
        %v1585 = vpop.f32.mrb[0].mxu0
        %v1586 = vpop.f32.mrb[0].mxu0
        %v1587 = vadd.f32 0.0, %v1586
        %v1588 = vpop.f32.mrb[0].mxu0
        %1589 = vmatprep.mubr.bf16.mxu0 0
        %1590 = vmatmul.mubr.bf16.gmra.mrb[0].mxu0 %v1437
        %v1591 = vpop.f32.mrb[0].mxu0
        %v1592 = vadd.f32 0.0, %v1591
        %v1593 = vpop.f32.mrb[0].mxu0
        %v1594 = vpop.f32.mrb[0].mxu0
        %v1595 = vadd.f32 0.0, %v1594
        %v1596 = vpop.f32.mrb[0].mxu0
        %1597 = vmatprep.mubr.bf16.mxu0 0
        %1598 = vmatmul.mubr.bf16.gmra.mrb[0].mxu0 %v1440
        %v1599 = vpop.f32.mrb[0].mxu0
        %v1600 = vadd.f32 0.0, %v1599
        %v1601 = vpop.f32.mrb[0].mxu0
        %v1602 = vpop.f32.mrb[0].mxu0
        %v1603 = vadd.f32 0.0, %v1602
        %v1604 = vpop.f32.mrb[0].mxu0
        %1605 = vdwg.mxu0
        %v1606 = vadd.f32 %v1310, %v1480
        %v1607 = vadd.f32 %v1311, %v1483
        %v1608 = vadd.f32 %v1312, %v1488
        %v1609 = vadd.f32 %v1313, %v1491
        %v1610 = vadd.f32 %v1314, %v1496
        %v1611 = vadd.f32 %v1315, %v1499
        %v1612 = vadd.f32 %v1316, %v1504
        %v1613 = vadd.f32 %v1317, %v1507
        %v1614 = vadd.f32 %v1318, %v1512
        %v1615 = vadd.f32 %v1319, %v1515
        %v1616 = vadd.f32 %v1320, %v1520
        %v1617 = vadd.f32 %v1321, %v1523
        %v1618 = vadd.f32 %v1322, %v1528
        %v1619 = vadd.f32 %v1323, %v1531
        %v1620 = vadd.f32 %v1324, %v1536
        %v1621 = vadd.f32 %v1325, %v1539
        %v1622 = vadd.f32 %v1326, %v1544
        %v1623 = vadd.f32 %v1327, %v1547
        %v1624 = vadd.f32 %v1328, %v1552
        %v1625 = vadd.f32 %v1329, %v1555
        %v1626 = vadd.f32 %v1330, %v1560
        %v1627 = vadd.f32 %v1331, %v1563
        %v1628 = vadd.f32 %v1332, %v1568
        %v1629 = vadd.f32 %v1333, %v1571
        %v1630 = vadd.f32 %v1334, %v1576
        %v1631 = vadd.f32 %v1335, %v1579
        %v1632 = vadd.f32 %v1336, %v1584
        %v1633 = vadd.f32 %v1337, %v1587
        %v1634 = vadd.f32 %v1338, %v1592
        %v1635 = vadd.f32 %v1339, %v1595
        %v1636 = vadd.f32 %v1340, %v1600
        %v1637 = vadd.f32 %v1341, %v1603
        %s1638 = sadd.s32 %s221, 20
        %s1639 = scalar_lea.vmem [#allocation2], %s1638
        %v1640 = vld [vmem:[%s1639] sm:$0xff]
        %v1641 = vld [vmem:[%s1639 + $0x8] sm:$0xff]
        %v1642 = vld [vmem:[%s1639 + $0x10] sm:$0xff]
        %v1643 = vld [vmem:[%s1639 + $0x18] sm:$0xff]
        %v1644 = vld [vmem:[%s1639 + $0x20] sm:$0xff]
        %v1645 = vld [vmem:[%s1639 + $0x28] sm:$0xff]
        %v1646 = vld [vmem:[%s1639 + $0x30] sm:$0xff]
        %v1647 = vld [vmem:[%s1639 + $0x38] sm:$0xff]
        %v1648 = vld [vmem:[%s1639 + $0x40] sm:$0xff]
        %v1649 = vld [vmem:[%s1639 + $0x48] sm:$0xff]
        %v1650 = vld [vmem:[%s1639 + $0x50] sm:$0xff]
        %v1651 = vld [vmem:[%s1639 + $0x58] sm:$0xff]
        %v1652 = vld [vmem:[%s1639 + $0x60] sm:$0xff]
        %v1653 = vld [vmem:[%s1639 + $0x68] sm:$0xff]
        %v1654 = vld [vmem:[%s1639 + $0x70] sm:$0xff]
        %v1655 = vld [vmem:[%s1639 + $0x78] sm:$0xff]
        %v1656 = vld [vmem:[%s1639 + $0x80] sm:$0xff]
        %v1657 = vld [vmem:[%s1639 + $0x88] sm:$0xff]
        %v1658 = vld [vmem:[%s1639 + $0x90] sm:$0xff]
        %v1659 = vld [vmem:[%s1639 + $0x98] sm:$0xff]
        %v1660 = vld [vmem:[%s1639 + $0xa0] sm:$0xff]
        %v1661 = vld [vmem:[%s1639 + $0xa8] sm:$0xff]
        %v1662 = vld [vmem:[%s1639 + $0xb0] sm:$0xff]
        %v1663 = vld [vmem:[%s1639 + $0xb8] sm:$0xff]
        %v1664 = vld [vmem:[%s1639 + $0xc0] sm:$0xff]
        %v1665 = vld [vmem:[%s1639 + $0xc8] sm:$0xff]
        %v1666 = vld [vmem:[%s1639 + $0xd0] sm:$0xff]
        %v1667 = vld [vmem:[%s1639 + $0xd8] sm:$0xff]
        %v1668 = vld [vmem:[%s1639 + $0xe0] sm:$0xff]
        %v1669 = vld [vmem:[%s1639 + $0xe8] sm:$0xff]
        %v1670 = vld [vmem:[%s1639 + $0xf0] sm:$0xff]
        %v1671 = vld [vmem:[%s1639 + $0xf8] sm:$0xff]
        %v1672 = vpack.c.bf16 %v1641, %v1640
        %v1673 = vpack.c.bf16 %v1643, %v1642
        %v1674 = vpack.c.bf16 %v1645, %v1644
        %v1675 = vpack.c.bf16 %v1647, %v1646
        %v1676 = vpack.c.bf16 %v1649, %v1648
        %v1677 = vpack.c.bf16 %v1651, %v1650
        %v1678 = vpack.c.bf16 %v1653, %v1652
        %v1679 = vpack.c.bf16 %v1655, %v1654
        %v1680 = vpack.c.bf16 %v1657, %v1656
        %v1681 = vpack.c.bf16 %v1659, %v1658
        %v1682 = vpack.c.bf16 %v1661, %v1660
        %v1683 = vpack.c.bf16 %v1663, %v1662
        %v1684 = vpack.c.bf16 %v1665, %v1664
        %v1685 = vpack.c.bf16 %v1667, %v1666
        %v1686 = vpack.c.bf16 %v1669, %v1668
        %v1687 = vpack.c.bf16 %v1671, %v1670
        %s1688 = scalar_lea.vmem [#allocation5], 20
        %v1689 = vld [vmem:[%s1688] sm:$0xf]
        %v1691 = vsel %vm324, %v1672, 0
        %v1694 = vsel %vm324, %v1673, 0
        %v1697 = vsel %vm324, %v1674, 0
        %v1700 = vsel %vm324, %v1675, 0
        %v1703 = vsel %vm324, %v1676, 0
        %v1706 = vsel %vm324, %v1677, 0
        %v1709 = vsel %vm324, %v1678, 0
        %v1712 = vsel %vm324, %v1679, 0
        %v1715 = vsel %vm324, %v1680, 0
        %v1718 = vsel %vm324, %v1681, 0
        %v1721 = vsel %vm324, %v1682, 0
        %v1724 = vsel %vm324, %v1683, 0
        %v1727 = vsel %vm324, %v1684, 0
        %v1730 = vsel %vm324, %v1685, 0
        %v1733 = vsel %vm324, %v1686, 0
        %v1736 = vsel %vm324, %v1687, 0
        %v1739 = vsel %vm373, %v1689, 0
        %1741 = vmatprep.subr.bf16.mxu0 0
        %1742 = vmatpush1.bf16.msra.mxu0 %v1739
        %1743 = vmatprep.subr.bf16.mxu0 0
        %1744 = vmatpush1.bf16.msra.mxu0 0
        %1745 = vmatprep.subr.bf16.mxu0 0
        %1746 = vmatpush1.bf16.msra.mxu0 0
        %1747 = vmatprep.subr.bf16.mxu0 0
        %1748 = vmatpush1.bf16.msra.mxu0 0
        %1749 = vmatprep.subr.bf16.mxu0 0
        %1750 = vmatpush1.bf16.msra.mxu0 0
        %1751 = vmatprep.subr.bf16.mxu0 0
        %1752 = vmatpush1.bf16.msra.mxu0 0
        %1753 = vmatprep.subr.bf16.mxu0 0
        %1754 = vmatpush1.bf16.msra.mxu0 0
        %1755 = vmatprep.subr.bf16.mxu0 0
        %1756 = vmatpush1.bf16.msra.mxu0 0
        %1757 = vmatprep.subr.bf16.mxu0 0
        %1758 = vmatpush1.bf16.msra.mxu0 0
        %1759 = vmatprep.subr.bf16.mxu0 0
        %1760 = vmatpush1.bf16.msra.mxu0 0
        %1761 = vmatprep.subr.bf16.mxu0 0
        %1762 = vmatpush1.bf16.msra.mxu0 0
        %1763 = vmatprep.subr.bf16.mxu0 0
        %1764 = vmatpush1.bf16.msra.mxu0 0
        %1765 = vmatprep.subr.bf16.mxu0 0
        %1766 = vmatpush1.bf16.msra.mxu0 0
        %1767 = vmatprep.subr.bf16.mxu0 0
        %1768 = vmatpush1.bf16.msra.mxu0 0
        %1769 = vmatprep.subr.bf16.mxu0 0
        %1770 = vmatpush1.bf16.msra.mxu0 0
        %1771 = vmatprep.subr.bf16.mxu0 0
        %1772 = vmatpush1.bf16.msra.mxu0 0
        %1773 = vmatprep.mubr.bf16.mxu0 0
        %1774 = vmatmul.mubr.bf16.gmra.mrb[0].mxu0 %v1691
        %v1775 = vpop.f32.mrb[0].mxu0
        %v1776 = vadd.f32 0.0, %v1775
        %v1777 = vpop.f32.mrb[0].mxu0
        %v1778 = vpop.f32.mrb[0].mxu0
        %v1779 = vadd.f32 0.0, %v1778
        %v1780 = vpop.f32.mrb[0].mxu0
        %1781 = vmatprep.mubr.bf16.mxu0 0
        %1782 = vmatmul.mubr.bf16.gmra.mrb[0].mxu0 %v1694
        %v1783 = vpop.f32.mrb[0].mxu0
        %v1784 = vadd.f32 0.0, %v1783
        %v1785 = vpop.f32.mrb[0].mxu0
        %v1786 = vpop.f32.mrb[0].mxu0
        %v1787 = vadd.f32 0.0, %v1786
        %v1788 = vpop.f32.mrb[0].mxu0
        %1789 = vmatprep.mubr.bf16.mxu0 0
        %1790 = vmatmul.mubr.bf16.gmra.mrb[0].mxu0 %v1697
        %v1791 = vpop.f32.mrb[0].mxu0
        %v1792 = vadd.f32 0.0, %v1791
        %v1793 = vpop.f32.mrb[0].mxu0
        %v1794 = vpop.f32.mrb[0].mxu0
        %v1795 = vadd.f32 0.0, %v1794
        %v1796 = vpop.f32.mrb[0].mxu0
        %1797 = vmatprep.mubr.bf16.mxu0 0
        %1798 = vmatmul.mubr.bf16.gmra.mrb[0].mxu0 %v1700
        %v1799 = vpop.f32.mrb[0].mxu0
        %v1800 = vadd.f32 0.0, %v1799
        %v1801 = vpop.f32.mrb[0].mxu0
        %v1802 = vpop.f32.mrb[0].mxu0
        %v1803 = vadd.f32 0.0, %v1802
        %v1804 = vpop.f32.mrb[0].mxu0
        %1805 = vmatprep.mubr.bf16.mxu0 0
        %1806 = vmatmul.mubr.bf16.gmra.mrb[0].mxu0 %v1703
        %v1807 = vpop.f32.mrb[0].mxu0
        %v1808 = vadd.f32 0.0, %v1807
        %v1809 = vpop.f32.mrb[0].mxu0
        %v1810 = vpop.f32.mrb[0].mxu0
        %v1811 = vadd.f32 0.0, %v1810
        %v1812 = vpop.f32.mrb[0].mxu0
        %1813 = vmatprep.mubr.bf16.mxu0 0
        %1814 = vmatmul.mubr.bf16.gmra.mrb[0].mxu0 %v1706
        %v1815 = vpop.f32.mrb[0].mxu0
        %v1816 = vadd.f32 0.0, %v1815
        %v1817 = vpop.f32.mrb[0].mxu0
        %v1818 = vpop.f32.mrb[0].mxu0
        %v1819 = vadd.f32 0.0, %v1818
        %v1820 = vpop.f32.mrb[0].mxu0
        %1821 = vmatprep.mubr.bf16.mxu0 0
        %1822 = vmatmul.mubr.bf16.gmra.mrb[0].mxu0 %v1709
        %v1823 = vpop.f32.mrb[0].mxu0
        %v1824 = vadd.f32 0.0, %v1823
        %v1825 = vpop.f32.mrb[0].mxu0
        %v1826 = vpop.f32.mrb[0].mxu0
        %v1827 = vadd.f32 0.0, %v1826
        %v1828 = vpop.f32.mrb[0].mxu0
        %1829 = vmatprep.mubr.bf16.mxu0 0
        %1830 = vmatmul.mubr.bf16.gmra.mrb[0].mxu0 %v1712
        %v1831 = vpop.f32.mrb[0].mxu0
        %v1832 = vadd.f32 0.0, %v1831
        %v1833 = vpop.f32.mrb[0].mxu0
        %v1834 = vpop.f32.mrb[0].mxu0
        %v1835 = vadd.f32 0.0, %v1834
        %v1836 = vpop.f32.mrb[0].mxu0
        %1837 = vmatprep.mubr.bf16.mxu0 0
        %1838 = vmatmul.mubr.bf16.gmra.mrb[0].mxu0 %v1715
        %v1839 = vpop.f32.mrb[0].mxu0
        %v1840 = vadd.f32 0.0, %v1839
        %v1841 = vpop.f32.mrb[0].mxu0
        %v1842 = vpop.f32.mrb[0].mxu0
        %v1843 = vadd.f32 0.0, %v1842
        %v1844 = vpop.f32.mrb[0].mxu0
        %1845 = vmatprep.mubr.bf16.mxu0 0
        %1846 = vmatmul.mubr.bf16.gmra.mrb[0].mxu0 %v1718
        %v1847 = vpop.f32.mrb[0].mxu0
        %v1848 = vadd.f32 0.0, %v1847
        %v1849 = vpop.f32.mrb[0].mxu0
        %v1850 = vpop.f32.mrb[0].mxu0
        %v1851 = vadd.f32 0.0, %v1850
        %v1852 = vpop.f32.mrb[0].mxu0
        %1853 = vmatprep.mubr.bf16.mxu0 0
        %1854 = vmatmul.mubr.bf16.gmra.mrb[0].mxu0 %v1721
        %v1855 = vpop.f32.mrb[0].mxu0
        %v1856 = vadd.f32 0.0, %v1855
        %v1857 = vpop.f32.mrb[0].mxu0
        %v1858 = vpop.f32.mrb[0].mxu0
        %v1859 = vadd.f32 0.0, %v1858
        %v1860 = vpop.f32.mrb[0].mxu0
        %1861 = vmatprep.mubr.bf16.mxu0 0
        %1862 = vmatmul.mubr.bf16.gmra.mrb[0].mxu0 %v1724
        %v1863 = vpop.f32.mrb[0].mxu0
        %v1864 = vadd.f32 0.0, %v1863
        %v1865 = vpop.f32.mrb[0].mxu0
        %v1866 = vpop.f32.mrb[0].mxu0
        %v1867 = vadd.f32 0.0, %v1866
        %v1868 = vpop.f32.mrb[0].mxu0
        %1869 = vmatprep.mubr.bf16.mxu0 0
        %1870 = vmatmul.mubr.bf16.gmra.mrb[0].mxu0 %v1727
        %v1871 = vpop.f32.mrb[0].mxu0
        %v1872 = vadd.f32 0.0, %v1871
        %v1873 = vpop.f32.mrb[0].mxu0
        %v1874 = vpop.f32.mrb[0].mxu0
        %v1875 = vadd.f32 0.0, %v1874
        %v1876 = vpop.f32.mrb[0].mxu0
        %1877 = vmatprep.mubr.bf16.mxu0 0
        %1878 = vmatmul.mubr.bf16.gmra.mrb[0].mxu0 %v1730
        %v1879 = vpop.f32.mrb[0].mxu0
        %v1880 = vadd.f32 0.0, %v1879
        %v1881 = vpop.f32.mrb[0].mxu0
        %v1882 = vpop.f32.mrb[0].mxu0
        %v1883 = vadd.f32 0.0, %v1882
        %v1884 = vpop.f32.mrb[0].mxu0
        %1885 = vmatprep.mubr.bf16.mxu0 0
        %1886 = vmatmul.mubr.bf16.gmra.mrb[0].mxu0 %v1733
        %v1887 = vpop.f32.mrb[0].mxu0
        %v1888 = vadd.f32 0.0, %v1887
        %v1889 = vpop.f32.mrb[0].mxu0
        %v1890 = vpop.f32.mrb[0].mxu0
        %v1891 = vadd.f32 0.0, %v1890
        %v1892 = vpop.f32.mrb[0].mxu0
        %1893 = vmatprep.mubr.bf16.mxu0 0
        %1894 = vmatmul.mubr.bf16.gmra.mrb[0].mxu0 %v1736
        %v1895 = vpop.f32.mrb[0].mxu0
        %v1896 = vadd.f32 0.0, %v1895
        %v1897 = vpop.f32.mrb[0].mxu0
        %v1898 = vpop.f32.mrb[0].mxu0
        %v1899 = vadd.f32 0.0, %v1898
        %v1900 = vpop.f32.mrb[0].mxu0
        %1901 = vdwg.mxu0
        %v1902 = vadd.f32 %v1606, %v1776
        %v1903 = vadd.f32 %v1607, %v1779
        %v1904 = vadd.f32 %v1608, %v1784
        %v1905 = vadd.f32 %v1609, %v1787
        %v1906 = vadd.f32 %v1610, %v1792
        %v1907 = vadd.f32 %v1611, %v1795
        %v1908 = vadd.f32 %v1612, %v1800
        %v1909 = vadd.f32 %v1613, %v1803
        %v1910 = vadd.f32 %v1614, %v1808
        %v1911 = vadd.f32 %v1615, %v1811
        %v1912 = vadd.f32 %v1616, %v1816
        %v1913 = vadd.f32 %v1617, %v1819
        %v1914 = vadd.f32 %v1618, %v1824
        %v1915 = vadd.f32 %v1619, %v1827
        %v1916 = vadd.f32 %v1620, %v1832
        %v1917 = vadd.f32 %v1621, %v1835
        %v1918 = vadd.f32 %v1622, %v1840
        %v1919 = vadd.f32 %v1623, %v1843
        %v1920 = vadd.f32 %v1624, %v1848
        %v1921 = vadd.f32 %v1625, %v1851
        %v1922 = vadd.f32 %v1626, %v1856
        %v1923 = vadd.f32 %v1627, %v1859
        %v1924 = vadd.f32 %v1628, %v1864
        %v1925 = vadd.f32 %v1629, %v1867
        %v1926 = vadd.f32 %v1630, %v1872
        %v1927 = vadd.f32 %v1631, %v1875
        %v1928 = vadd.f32 %v1632, %v1880
        %v1929 = vadd.f32 %v1633, %v1883
        %v1930 = vadd.f32 %v1634, %v1888
        %v1931 = vadd.f32 %v1635, %v1891
        %v1932 = vadd.f32 %v1636, %v1896
        %v1933 = vadd.f32 %v1637, %v1899
        %s1934 = sadd.s32 %s221, 36
        %s1935 = scalar_lea.vmem [#allocation2], %s1934
        %v1936 = vld [vmem:[%s1935] sm:$0xff]
        %v1937 = vld [vmem:[%s1935 + $0x8] sm:$0xff]
        %v1938 = vld [vmem:[%s1935 + $0x10] sm:$0xff]
        %v1939 = vld [vmem:[%s1935 + $0x18] sm:$0xff]
        %v1940 = vld [vmem:[%s1935 + $0x20] sm:$0xff]
        %v1941 = vld [vmem:[%s1935 + $0x28] sm:$0xff]
        %v1942 = vld [vmem:[%s1935 + $0x30] sm:$0xff]
        %v1943 = vld [vmem:[%s1935 + $0x38] sm:$0xff]
        %v1944 = vld [vmem:[%s1935 + $0x40] sm:$0xff]
        %v1945 = vld [vmem:[%s1935 + $0x48] sm:$0xff]
        %v1946 = vld [vmem:[%s1935 + $0x50] sm:$0xff]
        %v1947 = vld [vmem:[%s1935 + $0x58] sm:$0xff]
        %v1948 = vld [vmem:[%s1935 + $0x60] sm:$0xff]
        %v1949 = vld [vmem:[%s1935 + $0x68] sm:$0xff]
        %v1950 = vld [vmem:[%s1935 + $0x70] sm:$0xff]
        %v1951 = vld [vmem:[%s1935 + $0x78] sm:$0xff]
        %v1952 = vld [vmem:[%s1935 + $0x80] sm:$0xff]
        %v1953 = vld [vmem:[%s1935 + $0x88] sm:$0xff]
        %v1954 = vld [vmem:[%s1935 + $0x90] sm:$0xff]
        %v1955 = vld [vmem:[%s1935 + $0x98] sm:$0xff]
        %v1956 = vld [vmem:[%s1935 + $0xa0] sm:$0xff]
        %v1957 = vld [vmem:[%s1935 + $0xa8] sm:$0xff]
        %v1958 = vld [vmem:[%s1935 + $0xb0] sm:$0xff]
        %v1959 = vld [vmem:[%s1935 + $0xb8] sm:$0xff]
        %v1960 = vld [vmem:[%s1935 + $0xc0] sm:$0xff]
        %v1961 = vld [vmem:[%s1935 + $0xc8] sm:$0xff]
        %v1962 = vld [vmem:[%s1935 + $0xd0] sm:$0xff]
        %v1963 = vld [vmem:[%s1935 + $0xd8] sm:$0xff]
        %v1964 = vld [vmem:[%s1935 + $0xe0] sm:$0xff]
        %v1965 = vld [vmem:[%s1935 + $0xe8] sm:$0xff]
        %v1966 = vld [vmem:[%s1935 + $0xf0] sm:$0xff]
        %v1967 = vld [vmem:[%s1935 + $0xf8] sm:$0xff]
        %v1968 = vpack.c.bf16 %v1937, %v1936
        %v1969 = vpack.c.bf16 %v1939, %v1938
        %v1970 = vpack.c.bf16 %v1941, %v1940
        %v1971 = vpack.c.bf16 %v1943, %v1942
        %v1972 = vpack.c.bf16 %v1945, %v1944
        %v1973 = vpack.c.bf16 %v1947, %v1946
        %v1974 = vpack.c.bf16 %v1949, %v1948
        %v1975 = vpack.c.bf16 %v1951, %v1950
        %v1976 = vpack.c.bf16 %v1953, %v1952
        %v1977 = vpack.c.bf16 %v1955, %v1954
        %v1978 = vpack.c.bf16 %v1957, %v1956
        %v1979 = vpack.c.bf16 %v1959, %v1958
        %v1980 = vpack.c.bf16 %v1961, %v1960
        %v1981 = vpack.c.bf16 %v1963, %v1962
        %v1982 = vpack.c.bf16 %v1965, %v1964
        %v1983 = vpack.c.bf16 %v1967, %v1966
        %s1984 = scalar_lea.vmem [#allocation5], 24
        %v1985 = vld [vmem:[%s1984] sm:$0xf]
        %v1987 = vsel %vm324, %v1968, 0
        %v1990 = vsel %vm324, %v1969, 0
        %v1993 = vsel %vm324, %v1970, 0
        %v1996 = vsel %vm324, %v1971, 0
        %v1999 = vsel %vm324, %v1972, 0
        %v2002 = vsel %vm324, %v1973, 0
        %v2005 = vsel %vm324, %v1974, 0
        %v2008 = vsel %vm324, %v1975, 0
        %v2011 = vsel %vm324, %v1976, 0
        %v2014 = vsel %vm324, %v1977, 0
        %v2017 = vsel %vm324, %v1978, 0
        %v2020 = vsel %vm324, %v1979, 0
        %v2023 = vsel %vm324, %v1980, 0
        %v2026 = vsel %vm324, %v1981, 0
        %v2029 = vsel %vm324, %v1982, 0
        %v2032 = vsel %vm324, %v1983, 0
        %v2035 = vsel %vm373, %v1985, 0
        %2037 = vmatprep.subr.bf16.mxu0 0
        %2038 = vmatpush1.bf16.msra.mxu0 %v2035
        %2039 = vmatprep.subr.bf16.mxu0 0
        %2040 = vmatpush1.bf16.msra.mxu0 0
        %2041 = vmatprep.subr.bf16.mxu0 0
        %2042 = vmatpush1.bf16.msra.mxu0 0
        %2043 = vmatprep.subr.bf16.mxu0 0
        %2044 = vmatpush1.bf16.msra.mxu0 0
        %2045 = vmatprep.subr.bf16.mxu0 0
        %2046 = vmatpush1.bf16.msra.mxu0 0
        %2047 = vmatprep.subr.bf16.mxu0 0
        %2048 = vmatpush1.bf16.msra.mxu0 0
        %2049 = vmatprep.subr.bf16.mxu0 0
        %2050 = vmatpush1.bf16.msra.mxu0 0
        %2051 = vmatprep.subr.bf16.mxu0 0
        %2052 = vmatpush1.bf16.msra.mxu0 0
        %2053 = vmatprep.subr.bf16.mxu0 0
        %2054 = vmatpush1.bf16.msra.mxu0 0
        %2055 = vmatprep.subr.bf16.mxu0 0
        %2056 = vmatpush1.bf16.msra.mxu0 0
        %2057 = vmatprep.subr.bf16.mxu0 0
        %2058 = vmatpush1.bf16.msra.mxu0 0
        %2059 = vmatprep.subr.bf16.mxu0 0
        %2060 = vmatpush1.bf16.msra.mxu0 0
        %2061 = vmatprep.subr.bf16.mxu0 0
        %2062 = vmatpush1.bf16.msra.mxu0 0
        %2063 = vmatprep.subr.bf16.mxu0 0
        %2064 = vmatpush1.bf16.msra.mxu0 0
        %2065 = vmatprep.subr.bf16.mxu0 0
        %2066 = vmatpush1.bf16.msra.mxu0 0
        %2067 = vmatprep.subr.bf16.mxu0 0
        %2068 = vmatpush1.bf16.msra.mxu0 0
        %2069 = vmatprep.mubr.bf16.mxu0 0
        %2070 = vmatmul.mubr.bf16.gmra.mrb[0].mxu0 %v1987
        %v2071 = vpop.f32.mrb[0].mxu0
        %v2072 = vadd.f32 0.0, %v2071
        %v2073 = vpop.f32.mrb[0].mxu0
        %v2074 = vpop.f32.mrb[0].mxu0
        %v2075 = vadd.f32 0.0, %v2074
        %v2076 = vpop.f32.mrb[0].mxu0
        %2077 = vmatprep.mubr.bf16.mxu0 0
        %2078 = vmatmul.mubr.bf16.gmra.mrb[0].mxu0 %v1990
        %v2079 = vpop.f32.mrb[0].mxu0
        %v2080 = vadd.f32 0.0, %v2079
        %v2081 = vpop.f32.mrb[0].mxu0
        %v2082 = vpop.f32.mrb[0].mxu0
        %v2083 = vadd.f32 0.0, %v2082
        %v2084 = vpop.f32.mrb[0].mxu0
        %2085 = vmatprep.mubr.bf16.mxu0 0
        %2086 = vmatmul.mubr.bf16.gmra.mrb[0].mxu0 %v1993
        %v2087 = vpop.f32.mrb[0].mxu0
        %v2088 = vadd.f32 0.0, %v2087
        %v2089 = vpop.f32.mrb[0].mxu0
        %v2090 = vpop.f32.mrb[0].mxu0
        %v2091 = vadd.f32 0.0, %v2090
        %v2092 = vpop.f32.mrb[0].mxu0
        %2093 = vmatprep.mubr.bf16.mxu0 0
        %2094 = vmatmul.mubr.bf16.gmra.mrb[0].mxu0 %v1996
        %v2095 = vpop.f32.mrb[0].mxu0
        %v2096 = vadd.f32 0.0, %v2095
        %v2097 = vpop.f32.mrb[0].mxu0
        %v2098 = vpop.f32.mrb[0].mxu0
        %v2099 = vadd.f32 0.0, %v2098
        %v2100 = vpop.f32.mrb[0].mxu0
        %2101 = vmatprep.mubr.bf16.mxu0 0
        %2102 = vmatmul.mubr.bf16.gmra.mrb[0].mxu0 %v1999
        %v2103 = vpop.f32.mrb[0].mxu0
        %v2104 = vadd.f32 0.0, %v2103
        %v2105 = vpop.f32.mrb[0].mxu0
        %v2106 = vpop.f32.mrb[0].mxu0
        %v2107 = vadd.f32 0.0, %v2106
        %v2108 = vpop.f32.mrb[0].mxu0
        %2109 = vmatprep.mubr.bf16.mxu0 0
        %2110 = vmatmul.mubr.bf16.gmra.mrb[0].mxu0 %v2002
        %v2111 = vpop.f32.mrb[0].mxu0
        %v2112 = vadd.f32 0.0, %v2111
        %v2113 = vpop.f32.mrb[0].mxu0
        %v2114 = vpop.f32.mrb[0].mxu0
        %v2115 = vadd.f32 0.0, %v2114
        %v2116 = vpop.f32.mrb[0].mxu0
        %2117 = vmatprep.mubr.bf16.mxu0 0
        %2118 = vmatmul.mubr.bf16.gmra.mrb[0].mxu0 %v2005
        %v2119 = vpop.f32.mrb[0].mxu0
        %v2120 = vadd.f32 0.0, %v2119
        %v2121 = vpop.f32.mrb[0].mxu0
        %v2122 = vpop.f32.mrb[0].mxu0
        %v2123 = vadd.f32 0.0, %v2122
        %v2124 = vpop.f32.mrb[0].mxu0
        %2125 = vmatprep.mubr.bf16.mxu0 0
        %2126 = vmatmul.mubr.bf16.gmra.mrb[0].mxu0 %v2008
        %v2127 = vpop.f32.mrb[0].mxu0
        %v2128 = vadd.f32 0.0, %v2127
        %v2129 = vpop.f32.mrb[0].mxu0
        %v2130 = vpop.f32.mrb[0].mxu0
        %v2131 = vadd.f32 0.0, %v2130
        %v2132 = vpop.f32.mrb[0].mxu0
        %2133 = vmatprep.mubr.bf16.mxu0 0
        %2134 = vmatmul.mubr.bf16.gmra.mrb[0].mxu0 %v2011
        %v2135 = vpop.f32.mrb[0].mxu0
        %v2136 = vadd.f32 0.0, %v2135
        %v2137 = vpop.f32.mrb[0].mxu0
        %v2138 = vpop.f32.mrb[0].mxu0
        %v2139 = vadd.f32 0.0, %v2138
        %v2140 = vpop.f32.mrb[0].mxu0
        %2141 = vmatprep.mubr.bf16.mxu0 0
        %2142 = vmatmul.mubr.bf16.gmra.mrb[0].mxu0 %v2014
        %v2143 = vpop.f32.mrb[0].mxu0
        %v2144 = vadd.f32 0.0, %v2143
        %v2145 = vpop.f32.mrb[0].mxu0
        %v2146 = vpop.f32.mrb[0].mxu0
        %v2147 = vadd.f32 0.0, %v2146
        %v2148 = vpop.f32.mrb[0].mxu0
        %2149 = vmatprep.mubr.bf16.mxu0 0
        %2150 = vmatmul.mubr.bf16.gmra.mrb[0].mxu0 %v2017
        %v2151 = vpop.f32.mrb[0].mxu0
        %v2152 = vadd.f32 0.0, %v2151
        %v2153 = vpop.f32.mrb[0].mxu0
        %v2154 = vpop.f32.mrb[0].mxu0
        %v2155 = vadd.f32 0.0, %v2154
        %v2156 = vpop.f32.mrb[0].mxu0
        %2157 = vmatprep.mubr.bf16.mxu0 0
        %2158 = vmatmul.mubr.bf16.gmra.mrb[0].mxu0 %v2020
        %v2159 = vpop.f32.mrb[0].mxu0
        %v2160 = vadd.f32 0.0, %v2159
        %v2161 = vpop.f32.mrb[0].mxu0
        %v2162 = vpop.f32.mrb[0].mxu0
        %v2163 = vadd.f32 0.0, %v2162
        %v2164 = vpop.f32.mrb[0].mxu0
        %2165 = vmatprep.mubr.bf16.mxu0 0
        %2166 = vmatmul.mubr.bf16.gmra.mrb[0].mxu0 %v2023
        %v2167 = vpop.f32.mrb[0].mxu0
        %v2168 = vadd.f32 0.0, %v2167
        %v2169 = vpop.f32.mrb[0].mxu0
        %v2170 = vpop.f32.mrb[0].mxu0
        %v2171 = vadd.f32 0.0, %v2170
        %v2172 = vpop.f32.mrb[0].mxu0
        %2173 = vmatprep.mubr.bf16.mxu0 0
        %2174 = vmatmul.mubr.bf16.gmra.mrb[0].mxu0 %v2026
        %v2175 = vpop.f32.mrb[0].mxu0
        %v2176 = vadd.f32 0.0, %v2175
        %v2177 = vpop.f32.mrb[0].mxu0
        %v2178 = vpop.f32.mrb[0].mxu0
        %v2179 = vadd.f32 0.0, %v2178
        %v2180 = vpop.f32.mrb[0].mxu0
        %2181 = vmatprep.mubr.bf16.mxu0 0
        %2182 = vmatmul.mubr.bf16.gmra.mrb[0].mxu0 %v2029
        %v2183 = vpop.f32.mrb[0].mxu0
        %v2184 = vadd.f32 0.0, %v2183
        %v2185 = vpop.f32.mrb[0].mxu0
        %v2186 = vpop.f32.mrb[0].mxu0
        %v2187 = vadd.f32 0.0, %v2186
        %v2188 = vpop.f32.mrb[0].mxu0
        %2189 = vmatprep.mubr.bf16.mxu0 0
        %2190 = vmatmul.mubr.bf16.gmra.mrb[0].mxu0 %v2032
        %v2191 = vpop.f32.mrb[0].mxu0
        %v2192 = vadd.f32 0.0, %v2191
        %v2193 = vpop.f32.mrb[0].mxu0
        %v2194 = vpop.f32.mrb[0].mxu0
        %v2195 = vadd.f32 0.0, %v2194
        %v2196 = vpop.f32.mrb[0].mxu0
        %2197 = vdwg.mxu0
        %v2198 = vadd.f32 %v1902, %v2072
        %v2199 = vadd.f32 %v1903, %v2075
        %v2200 = vadd.f32 %v1904, %v2080
        %v2201 = vadd.f32 %v1905, %v2083
        %v2202 = vadd.f32 %v1906, %v2088
        %v2203 = vadd.f32 %v1907, %v2091
        %v2204 = vadd.f32 %v1908, %v2096
        %v2205 = vadd.f32 %v1909, %v2099
        %v2206 = vadd.f32 %v1910, %v2104
        %v2207 = vadd.f32 %v1911, %v2107
        %v2208 = vadd.f32 %v1912, %v2112
        %v2209 = vadd.f32 %v1913, %v2115
        %v2210 = vadd.f32 %v1914, %v2120
        %v2211 = vadd.f32 %v1915, %v2123
        %v2212 = vadd.f32 %v1916, %v2128
        %v2213 = vadd.f32 %v1917, %v2131
        %v2214 = vadd.f32 %v1918, %v2136
        %v2215 = vadd.f32 %v1919, %v2139
        %v2216 = vadd.f32 %v1920, %v2144
        %v2217 = vadd.f32 %v1921, %v2147
        %v2218 = vadd.f32 %v1922, %v2152
        %v2219 = vadd.f32 %v1923, %v2155
        %v2220 = vadd.f32 %v1924, %v2160
        %v2221 = vadd.f32 %v1925, %v2163
        %v2222 = vadd.f32 %v1926, %v2168
        %v2223 = vadd.f32 %v1927, %v2171
        %v2224 = vadd.f32 %v1928, %v2176
        %v2225 = vadd.f32 %v1929, %v2179
        %v2226 = vadd.f32 %v1930, %v2184
        %v2227 = vadd.f32 %v1931, %v2187
        %v2228 = vadd.f32 %v1932, %v2192
        %v2229 = vadd.f32 %v1933, %v2195
        %s2230 = sadd.s32 %s221, 37
        %s2231 = scalar_lea.vmem [#allocation2], %s2230
        %v2232 = vld [vmem:[%s2231] sm:$0xff]
        %v2233 = vld [vmem:[%s2231 + $0x8] sm:$0xff]
        %v2234 = vld [vmem:[%s2231 + $0x10] sm:$0xff]
        %v2235 = vld [vmem:[%s2231 + $0x18] sm:$0xff]
        %v2236 = vld [vmem:[%s2231 + $0x20] sm:$0xff]
        %v2237 = vld [vmem:[%s2231 + $0x28] sm:$0xff]
        %v2238 = vld [vmem:[%s2231 + $0x30] sm:$0xff]
        %v2239 = vld [vmem:[%s2231 + $0x38] sm:$0xff]
        %v2240 = vld [vmem:[%s2231 + $0x40] sm:$0xff]
        %v2241 = vld [vmem:[%s2231 + $0x48] sm:$0xff]
        %v2242 = vld [vmem:[%s2231 + $0x50] sm:$0xff]
        %v2243 = vld [vmem:[%s2231 + $0x58] sm:$0xff]
        %v2244 = vld [vmem:[%s2231 + $0x60] sm:$0xff]
        %v2245 = vld [vmem:[%s2231 + $0x68] sm:$0xff]
        %v2246 = vld [vmem:[%s2231 + $0x70] sm:$0xff]
        %v2247 = vld [vmem:[%s2231 + $0x78] sm:$0xff]
        %v2248 = vld [vmem:[%s2231 + $0x80] sm:$0xff]
        %v2249 = vld [vmem:[%s2231 + $0x88] sm:$0xff]
        %v2250 = vld [vmem:[%s2231 + $0x90] sm:$0xff]
        %v2251 = vld [vmem:[%s2231 + $0x98] sm:$0xff]
        %v2252 = vld [vmem:[%s2231 + $0xa0] sm:$0xff]
        %v2253 = vld [vmem:[%s2231 + $0xa8] sm:$0xff]
        %v2254 = vld [vmem:[%s2231 + $0xb0] sm:$0xff]
        %v2255 = vld [vmem:[%s2231 + $0xb8] sm:$0xff]
        %v2256 = vld [vmem:[%s2231 + $0xc0] sm:$0xff]
        %v2257 = vld [vmem:[%s2231 + $0xc8] sm:$0xff]
        %v2258 = vld [vmem:[%s2231 + $0xd0] sm:$0xff]
        %v2259 = vld [vmem:[%s2231 + $0xd8] sm:$0xff]
        %v2260 = vld [vmem:[%s2231 + $0xe0] sm:$0xff]
        %v2261 = vld [vmem:[%s2231 + $0xe8] sm:$0xff]
        %v2262 = vld [vmem:[%s2231 + $0xf0] sm:$0xff]
        %v2263 = vld [vmem:[%s2231 + $0xf8] sm:$0xff]
        %v2264 = vpack.c.bf16 %v2233, %v2232
        %v2265 = vpack.c.bf16 %v2235, %v2234
        %v2266 = vpack.c.bf16 %v2237, %v2236
        %v2267 = vpack.c.bf16 %v2239, %v2238
        %v2268 = vpack.c.bf16 %v2241, %v2240
        %v2269 = vpack.c.bf16 %v2243, %v2242
        %v2270 = vpack.c.bf16 %v2245, %v2244
        %v2271 = vpack.c.bf16 %v2247, %v2246
        %v2272 = vpack.c.bf16 %v2249, %v2248
        %v2273 = vpack.c.bf16 %v2251, %v2250
        %v2274 = vpack.c.bf16 %v2253, %v2252
        %v2275 = vpack.c.bf16 %v2255, %v2254
        %v2276 = vpack.c.bf16 %v2257, %v2256
        %v2277 = vpack.c.bf16 %v2259, %v2258
        %v2278 = vpack.c.bf16 %v2261, %v2260
        %v2279 = vpack.c.bf16 %v2263, %v2262
        %s2280 = scalar_lea.vmem [#allocation5], 28
        %v2281 = vld [vmem:[%s2280] sm:$0xf]
        %v2283 = vsel %vm324, %v2264, 0
        %v2286 = vsel %vm324, %v2265, 0
        %v2289 = vsel %vm324, %v2266, 0
        %v2292 = vsel %vm324, %v2267, 0
        %v2295 = vsel %vm324, %v2268, 0
        %v2298 = vsel %vm324, %v2269, 0
        %v2301 = vsel %vm324, %v2270, 0
        %v2304 = vsel %vm324, %v2271, 0
        %v2307 = vsel %vm324, %v2272, 0
        %v2310 = vsel %vm324, %v2273, 0
        %v2313 = vsel %vm324, %v2274, 0
        %v2316 = vsel %vm324, %v2275, 0
        %v2319 = vsel %vm324, %v2276, 0
        %v2322 = vsel %vm324, %v2277, 0
        %v2325 = vsel %vm324, %v2278, 0
        %v2328 = vsel %vm324, %v2279, 0
        %v2331 = vsel %vm373, %v2281, 0
        %2333 = vmatprep.subr.bf16.mxu0 0
        %2334 = vmatpush1.bf16.msra.mxu0 %v2331
        %2335 = vmatprep.subr.bf16.mxu0 0
        %2336 = vmatpush1.bf16.msra.mxu0 0
        %2337 = vmatprep.subr.bf16.mxu0 0
        %2338 = vmatpush1.bf16.msra.mxu0 0
        %2339 = vmatprep.subr.bf16.mxu0 0
        %2340 = vmatpush1.bf16.msra.mxu0 0
        %2341 = vmatprep.subr.bf16.mxu0 0
        %2342 = vmatpush1.bf16.msra.mxu0 0
        %2343 = vmatprep.subr.bf16.mxu0 0
        %2344 = vmatpush1.bf16.msra.mxu0 0
        %2345 = vmatprep.subr.bf16.mxu0 0
        %2346 = vmatpush1.bf16.msra.mxu0 0
        %2347 = vmatprep.subr.bf16.mxu0 0
        %2348 = vmatpush1.bf16.msra.mxu0 0
        %2349 = vmatprep.subr.bf16.mxu0 0
        %2350 = vmatpush1.bf16.msra.mxu0 0
        %2351 = vmatprep.subr.bf16.mxu0 0
        %2352 = vmatpush1.bf16.msra.mxu0 0
        %2353 = vmatprep.subr.bf16.mxu0 0
        %2354 = vmatpush1.bf16.msra.mxu0 0
        %2355 = vmatprep.subr.bf16.mxu0 0
        %2356 = vmatpush1.bf16.msra.mxu0 0
        %2357 = vmatprep.subr.bf16.mxu0 0
        %2358 = vmatpush1.bf16.msra.mxu0 0
        %2359 = vmatprep.subr.bf16.mxu0 0
        %2360 = vmatpush1.bf16.msra.mxu0 0
        %2361 = vmatprep.subr.bf16.mxu0 0
        %2362 = vmatpush1.bf16.msra.mxu0 0
        %2363 = vmatprep.subr.bf16.mxu0 0
        %2364 = vmatpush1.bf16.msra.mxu0 0
        %2365 = vmatprep.mubr.bf16.mxu0 0
        %2366 = vmatmul.mubr.bf16.gmra.mrb[0].mxu0 %v2283
        %v2367 = vpop.f32.mrb[0].mxu0
        %v2368 = vadd.f32 0.0, %v2367
        %v2369 = vpop.f32.mrb[0].mxu0
        %v2370 = vpop.f32.mrb[0].mxu0
        %v2371 = vadd.f32 0.0, %v2370
        %v2372 = vpop.f32.mrb[0].mxu0
        %2373 = vmatprep.mubr.bf16.mxu0 0
        %2374 = vmatmul.mubr.bf16.gmra.mrb[0].mxu0 %v2286
        %v2375 = vpop.f32.mrb[0].mxu0
        %v2376 = vadd.f32 0.0, %v2375
        %v2377 = vpop.f32.mrb[0].mxu0
        %v2378 = vpop.f32.mrb[0].mxu0
        %v2379 = vadd.f32 0.0, %v2378
        %v2380 = vpop.f32.mrb[0].mxu0
        %2381 = vmatprep.mubr.bf16.mxu0 0
        %2382 = vmatmul.mubr.bf16.gmra.mrb[0].mxu0 %v2289
        %v2383 = vpop.f32.mrb[0].mxu0
        %v2384 = vadd.f32 0.0, %v2383
        %v2385 = vpop.f32.mrb[0].mxu0
        %v2386 = vpop.f32.mrb[0].mxu0
        %v2387 = vadd.f32 0.0, %v2386
        %v2388 = vpop.f32.mrb[0].mxu0
        %2389 = vmatprep.mubr.bf16.mxu0 0
        %2390 = vmatmul.mubr.bf16.gmra.mrb[0].mxu0 %v2292
        %v2391 = vpop.f32.mrb[0].mxu0
        %v2392 = vadd.f32 0.0, %v2391
        %v2393 = vpop.f32.mrb[0].mxu0
        %v2394 = vpop.f32.mrb[0].mxu0
        %v2395 = vadd.f32 0.0, %v2394
        %v2396 = vpop.f32.mrb[0].mxu0
        %2397 = vmatprep.mubr.bf16.mxu0 0
        %2398 = vmatmul.mubr.bf16.gmra.mrb[0].mxu0 %v2295
        %v2399 = vpop.f32.mrb[0].mxu0
        %v2400 = vadd.f32 0.0, %v2399
        %v2401 = vpop.f32.mrb[0].mxu0
        %v2402 = vpop.f32.mrb[0].mxu0
        %v2403 = vadd.f32 0.0, %v2402
        %v2404 = vpop.f32.mrb[0].mxu0
        %2405 = vmatprep.mubr.bf16.mxu0 0
        %2406 = vmatmul.mubr.bf16.gmra.mrb[0].mxu0 %v2298
        %v2407 = vpop.f32.mrb[0].mxu0
        %v2408 = vadd.f32 0.0, %v2407
        %v2409 = vpop.f32.mrb[0].mxu0
        %v2410 = vpop.f32.mrb[0].mxu0
        %v2411 = vadd.f32 0.0, %v2410
        %v2412 = vpop.f32.mrb[0].mxu0
        %2413 = vmatprep.mubr.bf16.mxu0 0
        %2414 = vmatmul.mubr.bf16.gmra.mrb[0].mxu0 %v2301
        %v2415 = vpop.f32.mrb[0].mxu0
        %v2416 = vadd.f32 0.0, %v2415
        %v2417 = vpop.f32.mrb[0].mxu0
        %v2418 = vpop.f32.mrb[0].mxu0
        %v2419 = vadd.f32 0.0, %v2418
        %v2420 = vpop.f32.mrb[0].mxu0
        %2421 = vmatprep.mubr.bf16.mxu0 0
        %2422 = vmatmul.mubr.bf16.gmra.mrb[0].mxu0 %v2304
        %v2423 = vpop.f32.mrb[0].mxu0
        %v2424 = vadd.f32 0.0, %v2423
        %v2425 = vpop.f32.mrb[0].mxu0
        %v2426 = vpop.f32.mrb[0].mxu0
        %v2427 = vadd.f32 0.0, %v2426
        %v2428 = vpop.f32.mrb[0].mxu0
        %2429 = vmatprep.mubr.bf16.mxu0 0
        %2430 = vmatmul.mubr.bf16.gmra.mrb[0].mxu0 %v2307
        %v2431 = vpop.f32.mrb[0].mxu0
        %v2432 = vadd.f32 0.0, %v2431
        %v2433 = vpop.f32.mrb[0].mxu0
        %v2434 = vpop.f32.mrb[0].mxu0
        %v2435 = vadd.f32 0.0, %v2434
        %v2436 = vpop.f32.mrb[0].mxu0
        %2437 = vmatprep.mubr.bf16.mxu0 0
        %2438 = vmatmul.mubr.bf16.gmra.mrb[0].mxu0 %v2310
        %v2439 = vpop.f32.mrb[0].mxu0
        %v2440 = vadd.f32 0.0, %v2439
        %v2441 = vpop.f32.mrb[0].mxu0
        %v2442 = vpop.f32.mrb[0].mxu0
        %v2443 = vadd.f32 0.0, %v2442
        %v2444 = vpop.f32.mrb[0].mxu0
        %2445 = vmatprep.mubr.bf16.mxu0 0
        %2446 = vmatmul.mubr.bf16.gmra.mrb[0].mxu0 %v2313
        %v2447 = vpop.f32.mrb[0].mxu0
        %v2448 = vadd.f32 0.0, %v2447
        %v2449 = vpop.f32.mrb[0].mxu0
        %v2450 = vpop.f32.mrb[0].mxu0
        %v2451 = vadd.f32 0.0, %v2450
        %v2452 = vpop.f32.mrb[0].mxu0
        %2453 = vmatprep.mubr.bf16.mxu0 0
        %2454 = vmatmul.mubr.bf16.gmra.mrb[0].mxu0 %v2316
        %v2455 = vpop.f32.mrb[0].mxu0
        %v2456 = vadd.f32 0.0, %v2455
        %v2457 = vpop.f32.mrb[0].mxu0
        %v2458 = vpop.f32.mrb[0].mxu0
        %v2459 = vadd.f32 0.0, %v2458
        %v2460 = vpop.f32.mrb[0].mxu0
        %2461 = vmatprep.mubr.bf16.mxu0 0
        %2462 = vmatmul.mubr.bf16.gmra.mrb[0].mxu0 %v2319
        %v2463 = vpop.f32.mrb[0].mxu0
        %v2464 = vadd.f32 0.0, %v2463
        %v2465 = vpop.f32.mrb[0].mxu0
        %v2466 = vpop.f32.mrb[0].mxu0
        %v2467 = vadd.f32 0.0, %v2466
        %v2468 = vpop.f32.mrb[0].mxu0
        %2469 = vmatprep.mubr.bf16.mxu0 0
        %2470 = vmatmul.mubr.bf16.gmra.mrb[0].mxu0 %v2322
        %v2471 = vpop.f32.mrb[0].mxu0
        %v2472 = vadd.f32 0.0, %v2471
        %v2473 = vpop.f32.mrb[0].mxu0
        %v2474 = vpop.f32.mrb[0].mxu0
        %v2475 = vadd.f32 0.0, %v2474
        %v2476 = vpop.f32.mrb[0].mxu0
        %2477 = vmatprep.mubr.bf16.mxu0 0
        %2478 = vmatmul.mubr.bf16.gmra.mrb[0].mxu0 %v2325
        %v2479 = vpop.f32.mrb[0].mxu0
        %v2480 = vadd.f32 0.0, %v2479
        %v2481 = vpop.f32.mrb[0].mxu0
        %v2482 = vpop.f32.mrb[0].mxu0
        %v2483 = vadd.f32 0.0, %v2482
        %v2484 = vpop.f32.mrb[0].mxu0
        %2485 = vmatprep.mubr.bf16.mxu0 0
        %2486 = vmatmul.mubr.bf16.gmra.mrb[0].mxu0 %v2328
        %v2487 = vpop.f32.mrb[0].mxu0
        %v2488 = vadd.f32 0.0, %v2487
        %v2489 = vpop.f32.mrb[0].mxu0
        %v2490 = vpop.f32.mrb[0].mxu0
        %v2491 = vadd.f32 0.0, %v2490
        %v2492 = vpop.f32.mrb[0].mxu0
        %2493 = vdwg.mxu0
        %v2494 = vadd.f32 %v2198, %v2368
        %v2495 = vadd.f32 %v2199, %v2371
        %v2496 = vadd.f32 %v2200, %v2376
        %v2497 = vadd.f32 %v2201, %v2379
        %v2498 = vadd.f32 %v2202, %v2384
        %v2499 = vadd.f32 %v2203, %v2387
        %v2500 = vadd.f32 %v2204, %v2392
        %v2501 = vadd.f32 %v2205, %v2395
        %v2502 = vadd.f32 %v2206, %v2400
        %v2503 = vadd.f32 %v2207, %v2403
        %v2504 = vadd.f32 %v2208, %v2408
        %v2505 = vadd.f32 %v2209, %v2411
        %v2506 = vadd.f32 %v2210, %v2416
        %v2507 = vadd.f32 %v2211, %v2419
        %v2508 = vadd.f32 %v2212, %v2424
        %v2509 = vadd.f32 %v2213, %v2427
        %v2510 = vadd.f32 %v2214, %v2432
        %v2511 = vadd.f32 %v2215, %v2435
        %v2512 = vadd.f32 %v2216, %v2440
        %v2513 = vadd.f32 %v2217, %v2443
        %v2514 = vadd.f32 %v2218, %v2448
        %v2515 = vadd.f32 %v2219, %v2451
        %v2516 = vadd.f32 %v2220, %v2456
        %v2517 = vadd.f32 %v2221, %v2459
        %v2518 = vadd.f32 %v2222, %v2464
        %v2519 = vadd.f32 %v2223, %v2467
        %v2520 = vadd.f32 %v2224, %v2472
        %v2521 = vadd.f32 %v2225, %v2475
        %v2522 = vadd.f32 %v2226, %v2480
        %v2523 = vadd.f32 %v2227, %v2483
        %v2524 = vadd.f32 %v2228, %v2488
        %v2525 = vadd.f32 %v2229, %v2491
        %s2526 = sadd.s32 %s221, 38
        %s2527 = scalar_lea.vmem [#allocation2], %s2526
        %v2528 = vld [vmem:[%s2527] sm:$0xff]
        %v2529 = vld [vmem:[%s2527 + $0x8] sm:$0xff]
        %v2530 = vld [vmem:[%s2527 + $0x10] sm:$0xff]
        %v2531 = vld [vmem:[%s2527 + $0x18] sm:$0xff]
        %v2532 = vld [vmem:[%s2527 + $0x20] sm:$0xff]
        %v2533 = vld [vmem:[%s2527 + $0x28] sm:$0xff]
        %v2534 = vld [vmem:[%s2527 + $0x30] sm:$0xff]
        %v2535 = vld [vmem:[%s2527 + $0x38] sm:$0xff]
        %v2536 = vld [vmem:[%s2527 + $0x40] sm:$0xff]
        %v2537 = vld [vmem:[%s2527 + $0x48] sm:$0xff]
        %v2538 = vld [vmem:[%s2527 + $0x50] sm:$0xff]
        %v2539 = vld [vmem:[%s2527 + $0x58] sm:$0xff]
        %v2540 = vld [vmem:[%s2527 + $0x60] sm:$0xff]
        %v2541 = vld [vmem:[%s2527 + $0x68] sm:$0xff]
        %v2542 = vld [vmem:[%s2527 + $0x70] sm:$0xff]
        %v2543 = vld [vmem:[%s2527 + $0x78] sm:$0xff]
        %v2544 = vld [vmem:[%s2527 + $0x80] sm:$0xff]
        %v2545 = vld [vmem:[%s2527 + $0x88] sm:$0xff]
        %v2546 = vld [vmem:[%s2527 + $0x90] sm:$0xff]
        %v2547 = vld [vmem:[%s2527 + $0x98] sm:$0xff]
        %v2548 = vld [vmem:[%s2527 + $0xa0] sm:$0xff]
        %v2549 = vld [vmem:[%s2527 + $0xa8] sm:$0xff]
        %v2550 = vld [vmem:[%s2527 + $0xb0] sm:$0xff]
        %v2551 = vld [vmem:[%s2527 + $0xb8] sm:$0xff]
        %v2552 = vld [vmem:[%s2527 + $0xc0] sm:$0xff]
        %v2553 = vld [vmem:[%s2527 + $0xc8] sm:$0xff]
        %v2554 = vld [vmem:[%s2527 + $0xd0] sm:$0xff]
        %v2555 = vld [vmem:[%s2527 + $0xd8] sm:$0xff]
        %v2556 = vld [vmem:[%s2527 + $0xe0] sm:$0xff]
        %v2557 = vld [vmem:[%s2527 + $0xe8] sm:$0xff]
        %v2558 = vld [vmem:[%s2527 + $0xf0] sm:$0xff]
        %v2559 = vld [vmem:[%s2527 + $0xf8] sm:$0xff]
        %v2560 = vpack.c.bf16 %v2529, %v2528
        %v2561 = vpack.c.bf16 %v2531, %v2530
        %v2562 = vpack.c.bf16 %v2533, %v2532
        %v2563 = vpack.c.bf16 %v2535, %v2534
        %v2564 = vpack.c.bf16 %v2537, %v2536
        %v2565 = vpack.c.bf16 %v2539, %v2538
        %v2566 = vpack.c.bf16 %v2541, %v2540
        %v2567 = vpack.c.bf16 %v2543, %v2542
        %v2568 = vpack.c.bf16 %v2545, %v2544
        %v2569 = vpack.c.bf16 %v2547, %v2546
        %v2570 = vpack.c.bf16 %v2549, %v2548
        %v2571 = vpack.c.bf16 %v2551, %v2550
        %v2572 = vpack.c.bf16 %v2553, %v2552
        %v2573 = vpack.c.bf16 %v2555, %v2554
        %v2574 = vpack.c.bf16 %v2557, %v2556
        %v2575 = vpack.c.bf16 %v2559, %v2558
        %s2576 = scalar_lea.vmem [#allocation5], 32
        %v2577 = vld [vmem:[%s2576] sm:$0xf]
        %v2579 = vsel %vm324, %v2560, 0
        %v2582 = vsel %vm324, %v2561, 0
        %v2585 = vsel %vm324, %v2562, 0
        %v2588 = vsel %vm324, %v2563, 0
        %v2591 = vsel %vm324, %v2564, 0
        %v2594 = vsel %vm324, %v2565, 0
        %v2597 = vsel %vm324, %v2566, 0
        %v2600 = vsel %vm324, %v2567, 0
        %v2603 = vsel %vm324, %v2568, 0
        %v2606 = vsel %vm324, %v2569, 0
        %v2609 = vsel %vm324, %v2570, 0
        %v2612 = vsel %vm324, %v2571, 0
        %v2615 = vsel %vm324, %v2572, 0
        %v2618 = vsel %vm324, %v2573, 0
        %v2621 = vsel %vm324, %v2574, 0
        %v2624 = vsel %vm324, %v2575, 0
        %v2627 = vsel %vm373, %v2577, 0
        %2629 = vmatprep.subr.bf16.mxu0 0
        %2630 = vmatpush1.bf16.msra.mxu0 %v2627
        %2631 = vmatprep.subr.bf16.mxu0 0
        %2632 = vmatpush1.bf16.msra.mxu0 0
        %2633 = vmatprep.subr.bf16.mxu0 0
        %2634 = vmatpush1.bf16.msra.mxu0 0
        %2635 = vmatprep.subr.bf16.mxu0 0
        %2636 = vmatpush1.bf16.msra.mxu0 0
        %2637 = vmatprep.subr.bf16.mxu0 0
        %2638 = vmatpush1.bf16.msra.mxu0 0
        %2639 = vmatprep.subr.bf16.mxu0 0
        %2640 = vmatpush1.bf16.msra.mxu0 0
        %2641 = vmatprep.subr.bf16.mxu0 0
        %2642 = vmatpush1.bf16.msra.mxu0 0
        %2643 = vmatprep.subr.bf16.mxu0 0
        %2644 = vmatpush1.bf16.msra.mxu0 0
        %2645 = vmatprep.subr.bf16.mxu0 0
        %2646 = vmatpush1.bf16.msra.mxu0 0
        %2647 = vmatprep.subr.bf16.mxu0 0
        %2648 = vmatpush1.bf16.msra.mxu0 0
        %2649 = vmatprep.subr.bf16.mxu0 0
        %2650 = vmatpush1.bf16.msra.mxu0 0
        %2651 = vmatprep.subr.bf16.mxu0 0
        %2652 = vmatpush1.bf16.msra.mxu0 0
        %2653 = vmatprep.subr.bf16.mxu0 0
        %2654 = vmatpush1.bf16.msra.mxu0 0
        %2655 = vmatprep.subr.bf16.mxu0 0
        %2656 = vmatpush1.bf16.msra.mxu0 0
        %2657 = vmatprep.subr.bf16.mxu0 0
        %2658 = vmatpush1.bf16.msra.mxu0 0
        %2659 = vmatprep.subr.bf16.mxu0 0
        %2660 = vmatpush1.bf16.msra.mxu0 0
        %2661 = vmatprep.mubr.bf16.mxu0 0
        %2662 = vmatmul.mubr.bf16.gmra.mrb[0].mxu0 %v2579
        %v2663 = vpop.f32.mrb[0].mxu0
        %v2664 = vadd.f32 0.0, %v2663
        %v2665 = vpop.f32.mrb[0].mxu0
        %v2666 = vpop.f32.mrb[0].mxu0
        %v2667 = vadd.f32 0.0, %v2666
        %v2668 = vpop.f32.mrb[0].mxu0
        %2669 = vmatprep.mubr.bf16.mxu0 0
        %2670 = vmatmul.mubr.bf16.gmra.mrb[0].mxu0 %v2582
        %v2671 = vpop.f32.mrb[0].mxu0
        %v2672 = vadd.f32 0.0, %v2671
        %v2673 = vpop.f32.mrb[0].mxu0
        %v2674 = vpop.f32.mrb[0].mxu0
        %v2675 = vadd.f32 0.0, %v2674
        %v2676 = vpop.f32.mrb[0].mxu0
        %2677 = vmatprep.mubr.bf16.mxu0 0
        %2678 = vmatmul.mubr.bf16.gmra.mrb[0].mxu0 %v2585
        %v2679 = vpop.f32.mrb[0].mxu0
        %v2680 = vadd.f32 0.0, %v2679
        %v2681 = vpop.f32.mrb[0].mxu0
        %v2682 = vpop.f32.mrb[0].mxu0
        %v2683 = vadd.f32 0.0, %v2682
        %v2684 = vpop.f32.mrb[0].mxu0
        %2685 = vmatprep.mubr.bf16.mxu0 0
        %2686 = vmatmul.mubr.bf16.gmra.mrb[0].mxu0 %v2588
        %v2687 = vpop.f32.mrb[0].mxu0
        %v2688 = vadd.f32 0.0, %v2687
        %v2689 = vpop.f32.mrb[0].mxu0
        %v2690 = vpop.f32.mrb[0].mxu0
        %v2691 = vadd.f32 0.0, %v2690
        %v2692 = vpop.f32.mrb[0].mxu0
        %2693 = vmatprep.mubr.bf16.mxu0 0
        %2694 = vmatmul.mubr.bf16.gmra.mrb[0].mxu0 %v2591
        %v2695 = vpop.f32.mrb[0].mxu0
        %v2696 = vadd.f32 0.0, %v2695
        %v2697 = vpop.f32.mrb[0].mxu0
        %v2698 = vpop.f32.mrb[0].mxu0
        %v2699 = vadd.f32 0.0, %v2698
        %v2700 = vpop.f32.mrb[0].mxu0
        %2701 = vmatprep.mubr.bf16.mxu0 0
        %2702 = vmatmul.mubr.bf16.gmra.mrb[0].mxu0 %v2594
        %v2703 = vpop.f32.mrb[0].mxu0
        %v2704 = vadd.f32 0.0, %v2703
        %v2705 = vpop.f32.mrb[0].mxu0
        %v2706 = vpop.f32.mrb[0].mxu0
        %v2707 = vadd.f32 0.0, %v2706
        %v2708 = vpop.f32.mrb[0].mxu0
        %2709 = vmatprep.mubr.bf16.mxu0 0
        %2710 = vmatmul.mubr.bf16.gmra.mrb[0].mxu0 %v2597
        %v2711 = vpop.f32.mrb[0].mxu0
        %v2712 = vadd.f32 0.0, %v2711
        %v2713 = vpop.f32.mrb[0].mxu0
        %v2714 = vpop.f32.mrb[0].mxu0
        %v2715 = vadd.f32 0.0, %v2714
        %v2716 = vpop.f32.mrb[0].mxu0
        %2717 = vmatprep.mubr.bf16.mxu0 0
        %2718 = vmatmul.mubr.bf16.gmra.mrb[0].mxu0 %v2600
        %v2719 = vpop.f32.mrb[0].mxu0
        %v2720 = vadd.f32 0.0, %v2719
        %v2721 = vpop.f32.mrb[0].mxu0
        %v2722 = vpop.f32.mrb[0].mxu0
        %v2723 = vadd.f32 0.0, %v2722
        %v2724 = vpop.f32.mrb[0].mxu0
        %2725 = vmatprep.mubr.bf16.mxu0 0
        %2726 = vmatmul.mubr.bf16.gmra.mrb[0].mxu0 %v2603
        %v2727 = vpop.f32.mrb[0].mxu0
        %v2728 = vadd.f32 0.0, %v2727
        %v2729 = vpop.f32.mrb[0].mxu0
        %v2730 = vpop.f32.mrb[0].mxu0
        %v2731 = vadd.f32 0.0, %v2730
        %v2732 = vpop.f32.mrb[0].mxu0
        %2733 = vmatprep.mubr.bf16.mxu0 0
        %2734 = vmatmul.mubr.bf16.gmra.mrb[0].mxu0 %v2606
        %v2735 = vpop.f32.mrb[0].mxu0
        %v2736 = vadd.f32 0.0, %v2735
        %v2737 = vpop.f32.mrb[0].mxu0
        %v2738 = vpop.f32.mrb[0].mxu0
        %v2739 = vadd.f32 0.0, %v2738
        %v2740 = vpop.f32.mrb[0].mxu0
        %2741 = vmatprep.mubr.bf16.mxu0 0
        %2742 = vmatmul.mubr.bf16.gmra.mrb[0].mxu0 %v2609
        %v2743 = vpop.f32.mrb[0].mxu0
        %v2744 = vadd.f32 0.0, %v2743
        %v2745 = vpop.f32.mrb[0].mxu0
        %v2746 = vpop.f32.mrb[0].mxu0
        %v2747 = vadd.f32 0.0, %v2746
        %v2748 = vpop.f32.mrb[0].mxu0
        %2749 = vmatprep.mubr.bf16.mxu0 0
        %2750 = vmatmul.mubr.bf16.gmra.mrb[0].mxu0 %v2612
        %v2751 = vpop.f32.mrb[0].mxu0
        %v2752 = vadd.f32 0.0, %v2751
        %v2753 = vpop.f32.mrb[0].mxu0
        %v2754 = vpop.f32.mrb[0].mxu0
        %v2755 = vadd.f32 0.0, %v2754
        %v2756 = vpop.f32.mrb[0].mxu0
        %2757 = vmatprep.mubr.bf16.mxu0 0
        %2758 = vmatmul.mubr.bf16.gmra.mrb[0].mxu0 %v2615
        %v2759 = vpop.f32.mrb[0].mxu0
        %v2760 = vadd.f32 0.0, %v2759
        %v2761 = vpop.f32.mrb[0].mxu0
        %v2762 = vpop.f32.mrb[0].mxu0
        %v2763 = vadd.f32 0.0, %v2762
        %v2764 = vpop.f32.mrb[0].mxu0
        %2765 = vmatprep.mubr.bf16.mxu0 0
        %2766 = vmatmul.mubr.bf16.gmra.mrb[0].mxu0 %v2618
        %v2767 = vpop.f32.mrb[0].mxu0
        %v2768 = vadd.f32 0.0, %v2767
        %v2769 = vpop.f32.mrb[0].mxu0
        %v2770 = vpop.f32.mrb[0].mxu0
        %v2771 = vadd.f32 0.0, %v2770
        %v2772 = vpop.f32.mrb[0].mxu0
        %2773 = vmatprep.mubr.bf16.mxu0 0
        %2774 = vmatmul.mubr.bf16.gmra.mrb[0].mxu0 %v2621
        %v2775 = vpop.f32.mrb[0].mxu0
        %v2776 = vadd.f32 0.0, %v2775
        %v2777 = vpop.f32.mrb[0].mxu0
        %v2778 = vpop.f32.mrb[0].mxu0
        %v2779 = vadd.f32 0.0, %v2778
        %v2780 = vpop.f32.mrb[0].mxu0
        %2781 = vmatprep.mubr.bf16.mxu0 0
        %2782 = vmatmul.mubr.bf16.gmra.mrb[0].mxu0 %v2624
        %v2783 = vpop.f32.mrb[0].mxu0
        %v2784 = vadd.f32 0.0, %v2783
        %v2785 = vpop.f32.mrb[0].mxu0
        %v2786 = vpop.f32.mrb[0].mxu0
        %v2787 = vadd.f32 0.0, %v2786
        %v2788 = vpop.f32.mrb[0].mxu0
        %2789 = vdwg.mxu0
        %v2790 = vadd.f32 %v2494, %v2664
        %v2791 = vadd.f32 %v2495, %v2667
        %v2792 = vadd.f32 %v2496, %v2672
        %v2793 = vadd.f32 %v2497, %v2675
        %v2794 = vadd.f32 %v2498, %v2680
        %v2795 = vadd.f32 %v2499, %v2683
        %v2796 = vadd.f32 %v2500, %v2688
        %v2797 = vadd.f32 %v2501, %v2691
        %v2798 = vadd.f32 %v2502, %v2696
        %v2799 = vadd.f32 %v2503, %v2699
        %v2800 = vadd.f32 %v2504, %v2704
        %v2801 = vadd.f32 %v2505, %v2707
        %v2802 = vadd.f32 %v2506, %v2712
        %v2803 = vadd.f32 %v2507, %v2715
        %v2804 = vadd.f32 %v2508, %v2720
        %v2805 = vadd.f32 %v2509, %v2723
        %v2806 = vadd.f32 %v2510, %v2728
        %v2807 = vadd.f32 %v2511, %v2731
        %v2808 = vadd.f32 %v2512, %v2736
        %v2809 = vadd.f32 %v2513, %v2739
        %v2810 = vadd.f32 %v2514, %v2744
        %v2811 = vadd.f32 %v2515, %v2747
        %v2812 = vadd.f32 %v2516, %v2752
        %v2813 = vadd.f32 %v2517, %v2755
        %v2814 = vadd.f32 %v2518, %v2760
        %v2815 = vadd.f32 %v2519, %v2763
        %v2816 = vadd.f32 %v2520, %v2768
        %v2817 = vadd.f32 %v2521, %v2771
        %v2818 = vadd.f32 %v2522, %v2776
        %v2819 = vadd.f32 %v2523, %v2779
        %v2820 = vadd.f32 %v2524, %v2784
        %v2821 = vadd.f32 %v2525, %v2787
        %v2822 = vld [vmem:[#allocation7] sm:$0x1]
        %v2824 = vlaneseq
        %v2825 = vshrl.u32 %v2824, 7
        %v2826 = vsub.s32 0, %v2825
        %v2827 = vrot.slane %v2822, %v2826
        %v2829 = vadd.f32 %v2790, %v2827
        %v2830 = vadd.f32 %v2791, %v2827
        %v2831 = vadd.f32 %v2792, %v2827
        %v2832 = vadd.f32 %v2793, %v2827
        %v2833 = vadd.f32 %v2794, %v2827
        %v2834 = vadd.f32 %v2795, %v2827
        %v2835 = vadd.f32 %v2796, %v2827
        %v2836 = vadd.f32 %v2797, %v2827
        %v2837 = vadd.f32 %v2798, %v2827
        %v2838 = vadd.f32 %v2799, %v2827
        %v2839 = vadd.f32 %v2800, %v2827
        %v2840 = vadd.f32 %v2801, %v2827
        %v2841 = vadd.f32 %v2802, %v2827
        %v2842 = vadd.f32 %v2803, %v2827
        %v2843 = vadd.f32 %v2804, %v2827
        %v2844 = vadd.f32 %v2805, %v2827
        %v2845 = vadd.f32 %v2806, %v2827
        %v2846 = vadd.f32 %v2807, %v2827
        %v2847 = vadd.f32 %v2808, %v2827
        %v2848 = vadd.f32 %v2809, %v2827
        %v2849 = vadd.f32 %v2810, %v2827
        %v2850 = vadd.f32 %v2811, %v2827
        %v2851 = vadd.f32 %v2812, %v2827
        %v2852 = vadd.f32 %v2813, %v2827
        %v2853 = vadd.f32 %v2814, %v2827
        %v2854 = vadd.f32 %v2815, %v2827
        %v2855 = vadd.f32 %v2816, %v2827
        %v2856 = vadd.f32 %v2817, %v2827
        %v2857 = vadd.f32 %v2818, %v2827
        %v2858 = vadd.f32 %v2819, %v2827
        %v2859 = vadd.f32 %v2820, %v2827
        %v2860 = vadd.f32 %v2821, %v2827
        %2861 = vst [vmem:[%s218] sm:$0xff] %v2829
        %2862 = vst [vmem:[%s218 + $0x8] sm:$0xff] %v2830
        %2863 = vst [vmem:[%s218 + $0x10] sm:$0xff] %v2831
        %2864 = vst [vmem:[%s218 + $0x18] sm:$0xff] %v2832
        %2865 = vst [vmem:[%s218 + $0x20] sm:$0xff] %v2833
        %2866 = vst [vmem:[%s218 + $0x28] sm:$0xff] %v2834
        %2867 = vst [vmem:[%s218 + $0x30] sm:$0xff] %v2835
        %2868 = vst [vmem:[%s218 + $0x38] sm:$0xff] %v2836
        %2869 = vst [vmem:[%s218 + $0x40] sm:$0xff] %v2837
        %2870 = vst [vmem:[%s218 + $0x48] sm:$0xff] %v2838
        %2871 = vst [vmem:[%s218 + $0x50] sm:$0xff] %v2839
        %2872 = vst [vmem:[%s218 + $0x58] sm:$0xff] %v2840
        %2873 = vst [vmem:[%s218 + $0x60] sm:$0xff] %v2841
        %2874 = vst [vmem:[%s218 + $0x68] sm:$0xff] %v2842
        %2875 = vst [vmem:[%s218 + $0x70] sm:$0xff] %v2843
        %2876 = vst [vmem:[%s218 + $0x78] sm:$0xff] %v2844
        %2877 = vst [vmem:[%s218 + $0x80] sm:$0xff] %v2845
        %2878 = vst [vmem:[%s218 + $0x88] sm:$0xff] %v2846
        %2879 = vst [vmem:[%s218 + $0x90] sm:$0xff] %v2847
        %2880 = vst [vmem:[%s218 + $0x98] sm:$0xff] %v2848
        %2881 = vst [vmem:[%s218 + $0xa0] sm:$0xff] %v2849
        %2882 = vst [vmem:[%s218 + $0xa8] sm:$0xff] %v2850
        %2883 = vst [vmem:[%s218 + $0xb0] sm:$0xff] %v2851
        %2884 = vst [vmem:[%s218 + $0xb8] sm:$0xff] %v2852
        %2885 = vst [vmem:[%s218 + $0xc0] sm:$0xff] %v2853
        %2886 = vst [vmem:[%s218 + $0xc8] sm:$0xff] %v2854
        %2887 = vst [vmem:[%s218 + $0xd0] sm:$0xff] %v2855
        %2888 = vst [vmem:[%s218 + $0xd8] sm:$0xff] %v2856
        %2889 = vst [vmem:[%s218 + $0xe0] sm:$0xff] %v2857
        %2890 = vst [vmem:[%s218 + $0xe8] sm:$0xff] %v2858
        %2891 = vst [vmem:[%s218 + $0xf0] sm:$0xff] %v2859
        %2892 = vst [vmem:[%s218 + $0xf8] sm:$0xff] %v2860
        %s2893 = sand.u32 %s114, 1
        %s2894 = scalar_lea.sflag [#allocation4], %s2893
        %s2895 = sand.u32 %s114, 1
        %s2896 = smul.addr %s2895, 256
        %s2897 = scalar_lea.vmem [#allocation8], %s2896
        // Predicated region
        $region45: #{tpu_custom_call.1} parent=31 // pred_check
          %p2898 = pneg %p124
        $region46: #{tpu_custom_call.1} parent=31 // pred_check_branch
          %2900 = sbr.rel (%p2898) target = $region48
        $region47: #{tpu_custom_call.1} parent=31 // pred_region
          %s2901 = smul.u32 32, %s23
          %s2903 = ssub.s32 4096, 4096
          %2904 = vsyncadd %s2894, %s2903
          %s2905 = sadd.s32 %s24, %s2901
          %s2906 = smul.addr %s2905, 128
          %s2907 = scalar_lea.hbm %s3, %s2906
          %s2908 = sshll.u32 %s2897, 4
          %s2909 = int_to_ptr.vmem [resolvable:$true] %s2908
          %2914 = dma.vmem_to_hbm [thread:$0]  %s2909, 4096, %s2907, %s2894, 128, 128, 8
        $region48: #{tpu_custom_call.1} parent=31 // pred_fallthru
          _
      $region32: #{tpu_custom_call.1} parent=5 // pred_fallthru
        _
      %p2915 = scmp.le.s32.totalorder 2, %s14
      // Predicated region
      $region49: #{tpu_custom_call.1} parent=5 // pred_check
        %p2916 = pneg %p2915
      $region50: #{tpu_custom_call.1} parent=5 // pred_check_branch
        %2918 = sbr.rel (%p2916) target = $region52
      $region51: #{tpu_custom_call.1} parent=5 // pred_region
        %s2919 = ssub.s32 %s14, 2
        // Predicated region
        $region53: #{tpu_custom_call.1} parent=51 // pred_check
          %p2920 = pneg %p130
        $region54: #{tpu_custom_call.1} parent=51 // pred_check_branch
          %2922 = sbr.rel (%p2920) target = $region56
        $region55: #{tpu_custom_call.1} parent=51 // pred_region
          %s2923 = sand.u32 %s115, 1
          %s2924 = scalar_lea.sflag [#allocation4], %s2923
          %s2925 = sand.u32 %s115, 1
          %s2926 = smul.addr %s2925, 256
          %s2927 = scalar_lea.vmem [#allocation8], %s2926
          %2928 = dma.done %s2924, 4096
        $region56: #{tpu_custom_call.1} parent=51 // pred_fallthru
          _
      $region52: #{tpu_custom_call.1} parent=5 // pred_fallthru
        _
    $region6: #{tpu_custom_call.1} parent=1 // loop_footer
      %s18 = sadd.s32 1, %s14
    $region7: #{tpu_custom_call.1} parent=1 // loop_footer_branch
      %13 = sbr.rel target = $region3
    $region8: #{tpu_custom_call.1} parent=1 // loop_exit
      _
    %2929 = vsyncpa [#allocation3], 1
    %s2930 = scalar_lea.sflag [#allocation3], 1
    %2931 = vsyncpa %s2930, 1
    %2932 = vsyncpa [#allocation6], 1
    %2933 = vsyncpa [#allocation4], 1
    %s2934 = scalar_lea.sflag [#allocation4], 1
    %2935 = vsyncpa %s2934, 1

</llo_original>
